<compile_context>
chip_gen: v5e
topology: v5e:2x2
jax: 0.10.0
libtpu: 0.0.40
codegen_flags: <defaults>
</compile_context>

<pallas_src>
import math

import jax
import jax.numpy as jnp
import numpy as np
from jax import lax
from jax.experimental import pallas as pl
from jax.experimental.pallas import tpu as pltpu

# ------------------------- configuration constants -------------------------
NZ = 32
PAST_NFRAME = 4
CUR_NFRAME = 8
FUT_NFRAME = 2
CTX_LEN = PAST_NFRAME + CUR_NFRAME + FUT_NFRAME   # context sequence length = 14
MODEL_DIM = 32
NHEAD = 4
HEAD_DIM = MODEL_DIM // NHEAD
FF_DIM = 64
NLAYER = 2
POSE_DIM = 69
BATCH = 2

LANE = 128          # TPU lane width
S_PAD = 16          # context length padded to a sublane multiple (extra keys masked)
OUT_PAD = LANE      # out_fc output padded to lane-dense width
NEG_INF = -1e9


# --------------------------- parameter blob layout ---------------------------
def _blob_layouts():
  D, F = MODEL_DIM, FF_DIM
  # fused cross-attn K/V for all layers first (layer-invariant memory projection)
  w_entries = [("ca_kv_all", D, 4 * D)]
  v_entries = [("ca_kv_all_b", 4 * D)]
  for l in range(NLAYER):
    p = f"l{l}_"
    w_entries += [(p + "sa_in", D, 3 * D), (p + "sa_out", D, D),
                  (p + "ca_q", D, D), (p + "ca_out", D, D),
                  (p + "lin1", D, F), (p + "lin2", F, D)]
    v_entries += [(p + "sa_in_b", 3 * D), (p + "sa_out_b", D),
                  (p + "ca_q_b", D), (p + "ca_out_b", D),
                  (p + "lin1_b", F), (p + "lin2_b", D),
                  (p + "n1g", D), (p + "n1b", D), (p + "n2g", D), (p + "n2b", D),
                  (p + "n3g", D), (p + "n3b", D)]
  w_entries += [("out_fc", D, OUT_PAD)]
  v_entries += [("out_fc_b", OUT_PAD)]
  v_entries += [(f"hmask{h}", D) for h in range(NHEAD)]   # 0/1 per-head lane masks

  w_layout, off = {}, 0
  for name, r, c in w_entries:
    w_layout[name] = (off, r, c)
    off += r
  w_rows = ((off + 7) // 8) * 8

  v_layout = {name: (i, c) for i, (name, c) in enumerate(v_entries)}
  pe_row = ((len(v_entries) + 7) // 8) * 8        # PE tile starts 8-aligned
  v_rows = ((pe_row + BATCH * CUR_NFRAME + 7) // 8) * 8
  return w_layout, w_rows, v_layout, v_rows, pe_row


W_LAYOUT, W_ROWS, V_LAYOUT, V_ROWS, PE_ROW = _blob_layouts()

# activation slab row layout (width 32 lanes)
SLAB_MEM_ROW = 0                                  # (B*S_PAD, 32)
SLAB_Z_ROW = BATCH * S_PAD                        # (B*T, 32)      z broadcast per frame
SLAB_BIAS_ROW = SLAB_Z_ROW + BATCH * CUR_NFRAME   # (B*T, 16)      key-padding bias, pre-broadcast
SLAB_ROWS = SLAB_BIAS_ROW + BATCH * CUR_NFRAME    # 64 rows total


# ------------------------------ fused Pallas kernel ------------------------------
def _fused_decoder_kernel(act_ref, w_ref, v_ref, out_ref):
  """PE add + 2x nn.TransformerDecoderLayer (post-norm, relu, dropout=0) + out_fc."""
  B, T, S, D = BATCH, CUR_NFRAME, S_PAD, MODEL_DIM
  scale = 1.0 / math.sqrt(HEAD_DIM)

  def W(name):                       # static, 8-aligned ref slice (bf16)
    off, r, c = W_LAYOUT[name]
    return w_ref[off:off + r, :c]

  vv = v_ref[...]                    # whole (V_ROWS, 128) f32 vector blob
  def V(name):
    row, c = V_LAYOUT[name]
    return vv[row:row + 1, :c]

  def matmul(a, b):                  # a: f32 activation, b: bf16 weight -> f32
    return jnp.dot(a.astype(jnp.bfloat16), b, preferred_element_type=jnp.float32)

  def layer_norm(x, g, b):
    mu = jnp.mean(x, axis=-1, keepdims=True)
    xc = x - mu
    var = jnp.mean(xc * xc, axis=-1, keepdims=True)
    return xc * lax.rsqrt(var + 1e-5) * g + b

  def softmax(s):
    m = jnp.max(s, axis=-1, keepdims=True)
    e = jnp.exp(s - m)
    return e * pl.reciprocal(jnp.sum(e, axis=-1, keepdims=True), approx=True)

  hmask = [V(f"hmask{h}") for h in range(NHEAD)]   # (1, D) 0/1 masks

  def mha(q, k, v, bias_rows, Tq, Sk):
    """q:(B*Tq,D) f32, k/v:(B*Sk,D) f32, bias_rows: list of (Tq,Sk) or None.

    Per-head lane masks replace 8-lane slices / concatenates: scores use
    (q*mask_h) against full-width K (only head-h lanes contribute), and the PV
    result is masked back to head-h lanes and accumulated on the VPU.
    """
    outs = []
    for b in range(B):
      qb = q[b * Tq:(b + 1) * Tq]
      kb = k[b * Sk:(b + 1) * Sk].astype(jnp.bfloat16)
      vb = v[b * Sk:(b + 1) * Sk].astype(jnp.bfloat16)
      acc = None
      for h in range(NHEAD):
        qh = (qb * hmask[h]).astype(jnp.bfloat16)
        s = lax.dot_general(qh, kb, (((1,), (1,)), ((), ())),
                            preferred_element_type=jnp.float32) * scale
        if bias_rows is not None:
          s = s + bias_rows[b]
        pv = jnp.dot(softmax(s).astype(jnp.bfloat16), vb,
                     preferred_element_type=jnp.float32)          # (Tq, D)
        contrib = pv * hmask[h]
        acc = contrib if acc is None else acc + contrib
      outs.append(acc)
    return jnp.concatenate(outs, axis=0)

  # ---- unpack the single activation slab ----
  mem = act_ref[SLAB_MEM_ROW:SLAB_MEM_ROW + B * S, :]              # (B*S, D)
  x = act_ref[SLAB_Z_ROW:SLAB_Z_ROW + B * T, :] \
      + vv[PE_ROW:PE_ROW + B * T, :D]                              # z + PE, (B*T, D)
  bias_rows = [act_ref[SLAB_BIAS_ROW + b * T:SLAB_BIAS_ROW + (b + 1) * T, :S]
               for b in range(B)]                                  # (T, S) each

  # ---- cross-attn K/V for all layers (memory is layer-invariant): one N=128 matmul
  kv_all = matmul(mem, W("ca_kv_all")) + V("ca_kv_all_b")          # (B*S, 4D)
  ca_k = [kv_all[:, 2 * l * D:(2 * l + 1) * D] for l in range(NLAYER)]
  ca_v = [kv_all[:, (2 * l + 1) * D:(2 * l + 2) * D] for l in range(NLAYER)]

  for l in range(NLAYER):
    p = f"l{l}_"
    # --- self attention (no tgt mask) ---
    qkv = matmul(x, W(p + "sa_in")) + V(p + "sa_in_b")             # (B*T, 3D)
    a = mha(qkv[:, :D], qkv[:, D:2 * D], qkv[:, 2 * D:3 * D], None, T, T)
    a = matmul(a, W(p + "sa_out")) + V(p + "sa_out_b")
    x = layer_norm(x + a, V(p + "n1g"), V(p + "n1b"))
    # --- cross attention with memory_key_padding_mask (K/V precomputed) ---
    q = matmul(x, W(p + "ca_q")) + V(p + "ca_q_b")
    a = mha(q, ca_k[l], ca_v[l], bias_rows, T, S)
    a = matmul(a, W(p + "ca_out")) + V(p + "ca_out_b")
    x = layer_norm(x + a, V(p + "n2g"), V(p + "n2b"))
    # --- feed forward (relu) ---
    h1 = jax.nn.relu(matmul(x, W(p + "lin1")) + V(p + "lin1_b"))
    ff = matmul(h1, W(p + "lin2")) + V(p + "lin2_b")
    x = layer_norm(x + ff, V(p + "n3g"), V(p + "n3b"))

  # final out_fc, lane-dense (padded to 128 columns) unmasked store
  out_ref[...] = (matmul(x, W("out_fc")) + V("out_fc_b")).astype(out_ref.dtype)


def fused_decoder_pallas(slab, wblob, vblob):
  return pl.pallas_call(
      _fused_decoder_kernel,
      out_shape=jax.ShapeDtypeStruct((BATCH * CUR_NFRAME, OUT_PAD), jnp.float32),
      in_specs=[pl.BlockSpec(memory_space=pltpu.MemorySpace.VMEM)] * 3,
      out_specs=pl.BlockSpec(memory_space=pltpu.MemorySpace.VMEM),
  )(slab, wblob, vblob)


# ------------------------- positional encoding (additive) -------------------------
def sinusoidal_pe(length, dim, offset, max_freq=10.0, freq_scale=0.1):
  # TODO(synk): the original PositionalEncoding class is not provided in the
  # source; this is a standard sinusoidal encoding (concat=False / additive)
  # using the (max_freq, freq_scale) hyper-parameters.
  pos = (jnp.arange(length, dtype=jnp.float32) + offset)[:, None]
  i = jnp.arange(dim // 2, dtype=jnp.float32)[None, :]
  inv_freq = freq_scale / (max_freq ** (2.0 * i / dim))
  ang = pos * inv_freq
  return jnp.stack([jnp.sin(ang), jnp.cos(ang)], axis=-1).reshape(length, dim)


# ------------------------------ parameters ------------------------------
def init_params(key):
  keys = iter(jax.random.split(key, 64))

  def w(shape, scale=0.05):
    return scale * jax.random.normal(next(keys), shape, jnp.float32)

  D, F = MODEL_DIM, FF_DIM
  layers = []
  for _ in range(NLAYER):
    layers.append(dict(
        sa_in_w=w((3 * D, D)), sa_in_b=jnp.zeros((3 * D,), jnp.float32),
        sa_out_w=w((D, D)), sa_out_b=jnp.zeros((D,), jnp.float32),
        ca_in_w=w((3 * D, D)), ca_in_b=jnp.zeros((3 * D,), jnp.float32),
        ca_out_w=w((D, D)), ca_out_b=jnp.zeros((D,), jnp.float32),
        lin1_w=w((F, D)), lin1_b=jnp.zeros((F,), jnp.float32),
        lin2_w=w((D, F)), lin2_b=jnp.zeros((D,), jnp.float32),
        norm1_g=jnp.ones((D,), jnp.float32), norm1_b=jnp.zeros((D,), jnp.float32),
        norm2_g=jnp.ones((D,), jnp.float32), norm2_b=jnp.zeros((D,), jnp.float32),
        norm3_g=jnp.ones((D,), jnp.float32), norm3_b=jnp.zeros((D,), jnp.float32),
    ))
  return dict(layers=layers,
              out_fc_w=w((POSE_DIM, D)),
              out_fc_b=jnp.zeros((POSE_DIM,), jnp.float32))


def pack_params(params):
  """One-time packing: weights pre-transposed into a bf16 blob, biases/LN/PE/masks
  into an f32 vector blob. Not in the hot path."""
  D = MODEL_DIM
  wblob = np.zeros((W_ROWS, LANE), np.float32)
  vblob = np.zeros((V_ROWS, LANE), np.float32)

  def put_w(name, mat):
    off, _, _ = W_LAYOUT[name]
    m = np.asarray(mat, np.float32)
    wblob[off:off + m.shape[0], :m.shape[1]] = m

  def put_v(name, vec):
    row, _ = V_LAYOUT[name]
    v = np.asarray(vec, np.float32)
    vblob[row, :v.shape[0]] = v

  # fused cross-attn K/V projection of memory for all layers: [K0 | V0 | K1 | V1]
  kv_cols, kv_bias = [], []
  for lp in params['layers']:
    ca_w = np.asarray(lp['ca_in_w'])
    ca_b = np.asarray(lp['ca_in_b'])
    kv_cols += [ca_w[D:2 * D].T, ca_w[2 * D:].T]
    kv_bias += [ca_b[D:2 * D], ca_b[2 * D:]]
  put_w("ca_kv_all", np.concatenate(kv_cols, axis=1))
  put_v("ca_kv_all_b", np.concatenate(kv_bias))

  for l, lp in enumerate(params['layers']):
    p = f"l{l}_"
    put_w(p + "sa_in", np.asarray(lp['sa_in_w']).T)
    put_w(p + "sa_out", np.asarray(lp['sa_out_w']).T)
    put_w(p + "ca_q", np.asarray(lp['ca_in_w'])[:D].T)
    put_w(p + "ca_out", np.asarray(lp['ca_out_w']).T)
    put_w(p + "lin1", np.asarray(lp['lin1_w']).T)
    put_w(p + "lin2", np.asarray(lp['lin2_w']).T)
    put_v(p + "sa_in_b", lp['sa_in_b'])
    put_v(p + "sa_out_b", lp['sa_out_b'])
    put_v(p + "ca_q_b", np.asarray(lp['ca_in_b'])[:D])
    put_v(p + "ca_out_b", lp['ca_out_b'])
    put_v(p + "lin1_b", lp['lin1_b'])
    put_v(p + "lin2_b", lp['lin2_b'])
    put_v(p + "n1g", lp['norm1_g']); put_v(p + "n1b", lp['norm1_b'])
    put_v(p + "n2g", lp['norm2_g']); put_v(p + "n2b", lp['norm2_b'])
    put_v(p + "n3g", lp['norm3_g']); put_v(p + "n3b", lp['norm3_b'])

  put_w("out_fc", np.asarray(params['out_fc_w']).T)   # (32, 69), zero-padded to 128
  put_v("out_fc_b", params['out_fc_b'])

  for h in range(NHEAD):                               # per-head 0/1 lane masks
    m = np.zeros((MODEL_DIM,), np.float32)
    m[h * HEAD_DIM:(h + 1) * HEAD_DIM] = 1.0
    put_v(f"hmask{h}", m)

  # constant positional encoding, tiled over the batch (b-major rows)
  pe = np.asarray(sinusoidal_pe(CUR_NFRAME, MODEL_DIM, offset=PAST_NFRAME), np.float32)
  vblob[PE_ROW:PE_ROW + BATCH * CUR_NFRAME, :MODEL_DIM] = np.tile(pe, (BATCH, 1))

  return jnp.asarray(wblob).astype(jnp.bfloat16), jnp.asarray(vblob)


# ------------------------------ forward passes ------------------------------
def _postprocess(y_tbd, data, p_z_params):
  """Shared tail of DataDecoder.forward (mode='train', pose_rep='body')."""
  B = BATCH
  x_full = jnp.concatenate([data['x_in'][:PAST_NFRAME], y_tbd], axis=0)   # (12,B,69)
  x_all = x_full.reshape(-1, B, 1, x_full.shape[-1])                      # sample_num=1
  x_body = jnp.squeeze(x_all[..., :69], axis=2)
  # 'pose_tp' not in data -> zero root rotation
  root_rot = jnp.zeros_like(data['in_body_pose_tp'][:-FUT_NFRAME, :, :3])
  out_pose = jnp.concatenate([root_rot, x_body], axis=-1)
  return {'p_z_dist_params': p_z_params,
          'train_out_body_pose_tp': x_body,
          'train_out_pose_tp': out_pose}


def _assemble_slab(context, mask, z):
  """Pack z / memory / key-padding bias into one (64,32) slab -> single input DMA."""
  mem_b = jnp.transpose(context, (1, 0, 2)).astype(jnp.float32)           # (B,S,D)
  mem_pad = jnp.concatenate(
      [mem_b, jnp.zeros((BATCH, S_PAD - CTX_LEN, MODEL_DIM), jnp.float32)],
      axis=1).reshape(BATCH * S_PAD, MODEL_DIM)
  z16 = jnp.broadcast_to(z.astype(jnp.float32)[:, None, :],
                         (BATCH, CUR_NFRAME, NZ)).reshape(BATCH * CUR_NFRAME, NZ)
  bias = jnp.where(mask, NEG_INF, 0.0).astype(jnp.float32)                # (B,14)
  bias_pad = jnp.concatenate(
      [bias, jnp.full((BATCH, S_PAD - CTX_LEN), NEG_INF, jnp.float32)], axis=1)
  bias_b = jnp.broadcast_to(bias_pad[:, None, :],
                            (BATCH, CUR_NFRAME, S_PAD)).reshape(
                                BATCH * CUR_NFRAME, S_PAD)
  bias_rows = jnp.pad(bias_b, ((0, 0), (0, MODEL_DIM - S_PAD)))
  return jnp.concatenate([mem_pad, z16, bias_rows], axis=0)               # (64,32)


@jax.jit
def _forward_core(wblob, vblob, context, mask, z):
  slab = _assemble_slab(context, mask, z)
  y_pad = fused_decoder_pallas(slab, wblob, vblob)
  return y_pad[:, :POSE_DIM].reshape(BATCH, CUR_NFRAME, POSE_DIM).transpose(1, 0, 2)


def data_decoder_forward_pallas(packed, data):
  """mode='train', sample_num=1 path of DataDecoder.forward (fused Pallas kernel)."""
  wblob, vblob = packed
  context = data['context']          # (S, B, D) time-first
  mask = data['vis_frame_mask']      # (B, S) bool, True => key ignored
  # learn_prior = False  ->  p_z_dist = Normal(params=zeros(B, 2*nz))
  p_z_params = jnp.zeros((BATCH, 2 * NZ), context.dtype)
  z = data['q_z_samp'][0]            # (B, nz)
  y = _forward_core(wblob, vblob, context, mask, z)   # (T, B, 69)
  return _postprocess(y, data, p_z_params)


# ------------------------- pure-JAX reference path -------------------------
def decoder_layer_ref(tgt, mem, bias, lp):
  D = tgt.shape[-1]
  hd = D // NHEAD

  def ln(x, g, b):
    mu = jnp.mean(x, axis=-1, keepdims=True)
    var = jnp.mean(jnp.square(x - mu), axis=-1, keepdims=True)
    return (x - mu) * lax.rsqrt(var + 1e-5) * g + b

  def mha(q, k, v, bias_bs):
    B, T, _ = q.shape
    S = k.shape[1]
    qh = q.reshape(B, T, NHEAD, hd).transpose(0, 2, 1, 3)
    kh = k.reshape(B, S, NHEAD, hd).transpose(0, 2, 1, 3)
    vh = v.reshape(B, S, NHEAD, hd).transpose(0, 2, 1, 3)
    s = jnp.einsum('bhtd,bhsd->bhts', qh, kh) / math.sqrt(hd)
    if bias_bs is not None:
      s = s + bias_bs[:, None, None, :]
    p = jax.nn.softmax(s, axis=-1)
    o = jnp.einsum('bhts,bhsd->bhtd', p, vh)
    return o.transpose(0, 2, 1, 3).reshape(B, T, D)

  qkv = tgt @ lp['sa_in_w'].T + lp['sa_in_b']
  a = mha(qkv[..., :D], qkv[..., D:2 * D], qkv[..., 2 * D:], None)
  a = a @ lp['sa_out_w'].T + lp['sa_out_b']
  x = ln(tgt + a, lp['norm1_g'], lp['norm1_b'])

  q = x @ lp['ca_in_w'][:D].T + lp['ca_in_b'][:D]
  k = mem @ lp['ca_in_w'][D:2 * D].T + lp['ca_in_b'][D:2 * D]
  v = mem @ lp['ca_in_w'][2 * D:].T + lp['ca_in_b'][2 * D:]
  a = mha(q, k, v, bias)
  a = a @ lp['ca_out_w'].T + lp['ca_out_b']
  x = ln(x + a, lp['norm2_g'], lp['norm2_b'])

  h1 = jax.nn.relu(x @ lp['lin1_w'].T + lp['lin1_b'])
  ff = h1 @ lp['lin2_w'].T + lp['lin2_b']
  return ln(x + ff, lp['norm3_g'], lp['norm3_b'])


def data_decoder_forward_ref(params, data):
  context = data['context']
  mask = data['vis_frame_mask']
  p_z_params = jnp.zeros((BATCH, 2 * NZ), context.dtype)

  z = data['q_z_samp']
  z_in = jnp.tile(z, (CUR_NFRAME, 1, 1))
  pe = z_in + sinusoidal_pe(CUR_NFRAME, MODEL_DIM, offset=PAST_NFRAME)[:, None, :]

  tgt = jnp.transpose(pe, (1, 0, 2))
  mem = jnp.transpose(context, (1, 0, 2))
  bias = jnp.where(mask, NEG_INF, 0.0).astype(jnp.float32)

  for lp in params['layers']:
    tgt = decoder_layer_ref(tgt, mem, bias, lp)

  x = jnp.transpose(tgt, (1, 0, 2))
  x_flat = x.reshape(CUR_NFRAME * BATCH, MODEL_DIM)
  y_flat = x_flat @ params['out_fc_w'].T + params['out_fc_b']
  y = y_flat.reshape(CUR_NFRAME, BATCH, POSE_DIM)
  return _postprocess(y, data, p_z_params)


# ------------------------------------ main ------------------------------------
if __name__ == "__main__":
  key = jax.random.PRNGKey(0)
  kp, kc, kz, kx, kb = jax.random.split(key, 5)
  params = init_params(kp)
  packed = pack_params(params)      # one-time weight packing (not in the hot path)

  data = {
      'context': jax.random.normal(kc, (CTX_LEN, BATCH, MODEL_DIM), jnp.float32),
      'vis_frame_mask': jnp.zeros((BATCH, CTX_LEN), dtype=bool).at[0, -2:].set(True),
      'q_z_samp': jax.random.normal(kz, (1, BATCH, NZ), jnp.float32),
      'x_in': jax.random.normal(kx, (CTX_LEN, BATCH, POSE_DIM), jnp.float32),
      'in_body_pose_tp': jax.random.normal(kb, (CTX_LEN, BATCH, POSE_DIM), jnp.float32),
  }

  out = data_decoder_forward_pallas(packed, data)
  jax.block_until_ready(out)
  ref = data_decoder_forward_ref(params, data)
  jax.block_until_ready(ref)

  assert out['train_out_body_pose_tp'].shape == (PAST_NFRAME + CUR_NFRAME, BATCH, 69)
  assert out['train_out_pose_tp'].shape == (PAST_NFRAME + CUR_NFRAME, BATCH, 72)
  np.testing.assert_allclose(np.asarray(out['train_out_pose_tp']),
                             np.asarray(ref['train_out_pose_tp']),
                             rtol=5e-2, atol=5e-2)
  print("KERNEL_OK")
</pallas_src>

<mosaic_0001>
module attributes {stable_mosaic.version = 11 : i64} {
  func.func @_fused_decoder_kernel(%arg0: memref<64x32xf32, #tpu.memory_space<vmem>>, %arg1: memref<512x128xbf16, #tpu.memory_space<vmem>>, %arg2: memref<48x128xf32, #tpu.memory_space<vmem>>, %arg3: memref<16x128xf32, #tpu.memory_space<vmem>>) attributes {dimension_semantics = [], scalar_prefetch = 0 : i64, scratch_operands = 0 : i64, tpu.core_type = #tpu.core_type<tc>} {
    %c0 = arith.constant 0 : index
    %c0_0 = arith.constant 0 : index
    %0 = vector.load %arg2[%c0, %c0_0] : memref<48x128xf32, #tpu.memory_space<vmem>>, vector<48x128xf32>
    %1 = vector.extract_strided_slice %0 {offsets = [26, 0], sizes = [1, 32], strides = [1, 1]} : vector<48x128xf32> to vector<1x32xf32>
    %2 = vector.extract_strided_slice %0 {offsets = [27, 0], sizes = [1, 32], strides = [1, 1]} : vector<48x128xf32> to vector<1x32xf32>
    %3 = vector.extract_strided_slice %0 {offsets = [28, 0], sizes = [1, 32], strides = [1, 1]} : vector<48x128xf32> to vector<1x32xf32>
    %4 = vector.extract_strided_slice %0 {offsets = [29, 0], sizes = [1, 32], strides = [1, 1]} : vector<48x128xf32> to vector<1x32xf32>
    %c0_1 = arith.constant 0 : index
    %c0_2 = arith.constant 0 : index
    %5 = vector.load %arg0[%c0_1, %c0_2] : memref<64x32xf32, #tpu.memory_space<vmem>>, vector<32x32xf32>
    %c32 = arith.constant 32 : index
    %c0_3 = arith.constant 0 : index
    %6 = vector.load %arg0[%c32, %c0_3] : memref<64x32xf32, #tpu.memory_space<vmem>>, vector<16x32xf32>
    %7 = vector.extract_strided_slice %0 {offsets = [32, 0], sizes = [16, 32], strides = [1, 1]} : vector<48x128xf32> to vector<16x32xf32>
    %8 = arith.addf %6, %7 : vector<16x32xf32>
    %c48 = arith.constant 48 : index
    %c0_4 = arith.constant 0 : index
    %9 = vector.load %arg0[%c48, %c0_4] : memref<64x32xf32, #tpu.memory_space<vmem>>, vector<8x16xf32>
    %c56 = arith.constant 56 : index
    %c0_5 = arith.constant 0 : index
    %10 = vector.load %arg0[%c56, %c0_5] : memref<64x32xf32, #tpu.memory_space<vmem>>, vector<8x16xf32>
    %c0_6 = arith.constant 0 : index
    %c0_7 = arith.constant 0 : index
    %11 = vector.load %arg1[%c0_6, %c0_7] : memref<512x128xbf16, #tpu.memory_space<vmem>>, vector<32x128xbf16>
    %12 = arith.truncf %5 : vector<32x32xf32> to vector<32x32xbf16>
    %cst = arith.constant dense<0.000000e+00> : vector<32x128xf32>
    %13 = tpu.matmul %12, %11, %cst {dimension_numbers = #tpu.dot_dimension_numbers<[1], [0], [0], [1], [0, 0, 1, 1], [], []>} : vector<32x32xbf16>, vector<32x128xbf16>, vector<32x128xf32> -> vector<32x128xf32>
    %14 = vector.extract_strided_slice %0 {offsets = [0, 0], sizes = [1, 128], strides = [1, 1]} : vector<48x128xf32> to vector<1x128xf32>
    %15 = vector.broadcast %14 : vector<1x128xf32> to vector<32x128xf32>
    %16 = arith.addf %13, %15 : vector<32x128xf32>
    %17 = vector.extract_strided_slice %16 {offsets = [0, 0], sizes = [32, 32], strides = [1, 1]} : vector<32x128xf32> to vector<32x32xf32>
    %18 = vector.extract_strided_slice %16 {offsets = [0, 64], sizes = [32, 32], strides = [1, 1]} : vector<32x128xf32> to vector<32x32xf32>
    %19 = vector.extract_strided_slice %16 {offsets = [0, 32], sizes = [32, 32], strides = [1, 1]} : vector<32x128xf32> to vector<32x32xf32>
    %20 = vector.extract_strided_slice %16 {offsets = [0, 96], sizes = [32, 32], strides = [1, 1]} : vector<32x128xf32> to vector<32x32xf32>
    %c32_8 = arith.constant 32 : index
    %c0_9 = arith.constant 0 : index
    %21 = vector.load %arg1[%c32_8, %c0_9] : memref<512x128xbf16, #tpu.memory_space<vmem>>, vector<32x96xbf16>
    %22 = arith.truncf %8 : vector<16x32xf32> to vector<16x32xbf16>
    %cst_10 = arith.constant dense<0.000000e+00> : vector<16x96xf32>
    %23 = tpu.matmul %22, %21, %cst_10 {dimension_numbers = #tpu.dot_dimension_numbers<[1], [0], [0], [1], [0, 0, 1, 1], [], []>} : vector<16x32xbf16>, vector<32x96xbf16>, vector<16x96xf32> -> vector<16x96xf32>
    %24 = vector.extract_strided_slice %0 {offsets = [1, 0], sizes = [1, 96], strides = [1, 1]} : vector<48x128xf32> to vector<1x96xf32>
    %25 = vector.broadcast %24 : vector<1x96xf32> to vector<16x96xf32>
    %26 = arith.addf %23, %25 : vector<16x96xf32>
    %27 = vector.extract_strided_slice %26 {offsets = [0, 0], sizes = [16, 32], strides = [1, 1]} : vector<16x96xf32> to vector<16x32xf32>
    %28 = vector.extract_strided_slice %26 {offsets = [0, 32], sizes = [16, 32], strides = [1, 1]} : vector<16x96xf32> to vector<16x32xf32>
    %29 = vector.extract_strided_slice %26 {offsets = [0, 64], sizes = [16, 32], strides = [1, 1]} : vector<16x96xf32> to vector<16x32xf32>
    %30 = vector.extract_strided_slice %27 {offsets = [0, 0], sizes = [8, 32], strides = [1, 1]} : vector<16x32xf32> to vector<8x32xf32>
    %31 = vector.extract_strided_slice %28 {offsets = [0, 0], sizes = [8, 32], strides = [1, 1]} : vector<16x32xf32> to vector<8x32xf32>
    %32 = arith.truncf %31 : vector<8x32xf32> to vector<8x32xbf16>
    %33 = vector.extract_strided_slice %29 {offsets = [0, 0], sizes = [8, 32], strides = [1, 1]} : vector<16x32xf32> to vector<8x32xf32>
    %34 = arith.truncf %33 : vector<8x32xf32> to vector<8x32xbf16>
    %35 = vector.broadcast %1 : vector<1x32xf32> to vector<8x32xf32>
    %36 = arith.mulf %30, %35 : vector<8x32xf32>
    %37 = arith.truncf %36 : vector<8x32xf32> to vector<8x32xbf16>
    %cst_11 = arith.constant dense<0.000000e+00> : vector<8x8xf32>
    %38 = tpu.matmul %37, %32, %cst_11 {dimension_numbers = #tpu.dot_dimension_numbers<[1], [1], [0], [0], [0, 0, 1, 0], [], []>} : vector<8x32xbf16>, vector<8x32xbf16>, vector<8x8xf32> -> vector<8x8xf32>
    %cst_12 = arith.constant 0.353553385 : f32
    %39 = vector.broadcast %cst_12 : f32 to vector<8x8xf32>
    %40 = arith.mulf %38, %39 : vector<8x8xf32>
    %cst_13 = arith.constant dense<0xFF800000> : vector<8xf32>
    %41 = vector.multi_reduction <maximumf>, %40, %cst_13 [1] : vector<8x8xf32> to vector<8xf32>
    %42 = vector.shape_cast %41 : vector<8xf32> to vector<8x1xf32>
    %43 = vector.broadcast %42 : vector<8x1xf32> to vector<8x8xf32>
    %44 = arith.subf %40, %43 : vector<8x8xf32>
    %45 = math.exp %44 : vector<8x8xf32>
    %cst_14 = arith.constant dense<0.000000e+00> : vector<8xf32>
    %46 = vector.multi_reduction <add>, %45, %cst_14 [1] : vector<8x8xf32> to vector<8xf32>
    %47 = vector.shape_cast %46 : vector<8xf32> to vector<8x1xf32>
    %48 = tpu.reciprocal %47 {approx = true} : vector<8x1xf32> -> vector<8x1xf32>
    %49 = vector.broadcast %48 : vector<8x1xf32> to vector<8x8xf32>
    %50 = arith.mulf %45, %49 : vector<8x8xf32>
    %51 = arith.truncf %50 : vector<8x8xf32> to vector<8x8xbf16>
    %cst_15 = arith.constant dense<0.000000e+00> : vector<8x32xf32>
    %52 = tpu.matmul %51, %34, %cst_15 {dimension_numbers = #tpu.dot_dimension_numbers<[1], [0], [0], [1], [0, 0, 1, 1], [], []>} : vector<8x8xbf16>, vector<8x32xbf16>, vector<8x32xf32> -> vector<8x32xf32>
    %53 = vector.broadcast %1 : vector<1x32xf32> to vector<8x32xf32>
    %54 = arith.mulf %52, %53 : vector<8x32xf32>
    %55 = vector.broadcast %2 : vector<1x32xf32> to vector<8x32xf32>
    %56 = arith.mulf %30, %55 : vector<8x32xf32>
    %57 = arith.truncf %56 : vector<8x32xf32> to vector<8x32xbf16>
    %cst_16 = arith.constant dense<0.000000e+00> : vector<8x8xf32>
    %58 = tpu.matmul %57, %32, %cst_16 {dimension_numbers = #tpu.dot_dimension_numbers<[1], [1], [0], [0], [0, 0, 1, 0], [], []>} : vector<8x32xbf16>, vector<8x32xbf16>, vector<8x8xf32> -> vector<8x8xf32>
    %cst_17 = arith.constant 0.353553385 : f32
    %59 = vector.broadcast %cst_17 : f32 to vector<8x8xf32>
    %60 = arith.mulf %58, %59 : vector<8x8xf32>
    %cst_18 = arith.constant dense<0xFF800000> : vector<8xf32>
    %61 = vector.multi_reduction <maximumf>, %60, %cst_18 [1] : vector<8x8xf32> to vector<8xf32>
    %62 = vector.shape_cast %61 : vector<8xf32> to vector<8x1xf32>
    %63 = vector.broadcast %62 : vector<8x1xf32> to vector<8x8xf32>
    %64 = arith.subf %60, %63 : vector<8x8xf32>
    %65 = math.exp %64 : vector<8x8xf32>
    %cst_19 = arith.constant dense<0.000000e+00> : vector<8xf32>
    %66 = vector.multi_reduction <add>, %65, %cst_19 [1] : vector<8x8xf32> to vector<8xf32>
    %67 = vector.shape_cast %66 : vector<8xf32> to vector<8x1xf32>
    %68 = tpu.reciprocal %67 {approx = true} : vector<8x1xf32> -> vector<8x1xf32>
    %69 = vector.broadcast %68 : vector<8x1xf32> to vector<8x8xf32>
    %70 = arith.mulf %65, %69 : vector<8x8xf32>
    %71 = arith.truncf %70 : vector<8x8xf32> to vector<8x8xbf16>
    %cst_20 = arith.constant dense<0.000000e+00> : vector<8x32xf32>
    %72 = tpu.matmul %71, %34, %cst_20 {dimension_numbers = #tpu.dot_dimension_numbers<[1], [0], [0], [1], [0, 0, 1, 1], [], []>} : vector<8x8xbf16>, vector<8x32xbf16>, vector<8x32xf32> -> vector<8x32xf32>
    %73 = vector.broadcast %2 : vector<1x32xf32> to vector<8x32xf32>
    %74 = arith.mulf %72, %73 : vector<8x32xf32>
    %75 = arith.addf %54, %74 : vector<8x32xf32>
    %76 = vector.broadcast %3 : vector<1x32xf32> to vector<8x32xf32>
    %77 = arith.mulf %30, %76 : vector<8x32xf32>
    %78 = arith.truncf %77 : vector<8x32xf32> to vector<8x32xbf16>
    %cst_21 = arith.constant dense<0.000000e+00> : vector<8x8xf32>
    %79 = tpu.matmul %78, %32, %cst_21 {dimension_numbers = #tpu.dot_dimension_numbers<[1], [1], [0], [0], [0, 0, 1, 0], [], []>} : vector<8x32xbf16>, vector<8x32xbf16>, vector<8x8xf32> -> vector<8x8xf32>
    %cst_22 = arith.constant 0.353553385 : f32
    %80 = vector.broadcast %cst_22 : f32 to vector<8x8xf32>
    %81 = arith.mulf %79, %80 : vector<8x8xf32>
    %cst_23 = arith.constant dense<0xFF800000> : vector<8xf32>
    %82 = vector.multi_reduction <maximumf>, %81, %cst_23 [1] : vector<8x8xf32> to vector<8xf32>
    %83 = vector.shape_cast %82 : vector<8xf32> to vector<8x1xf32>
    %84 = vector.broadcast %83 : vector<8x1xf32> to vector<8x8xf32>
    %85 = arith.subf %81, %84 : vector<8x8xf32>
    %86 = math.exp %85 : vector<8x8xf32>
    %cst_24 = arith.constant dense<0.000000e+00> : vector<8xf32>
    %87 = vector.multi_reduction <add>, %86, %cst_24 [1] : vector<8x8xf32> to vector<8xf32>
    %88 = vector.shape_cast %87 : vector<8xf32> to vector<8x1xf32>
    %89 = tpu.reciprocal %88 {approx = true} : vector<8x1xf32> -> vector<8x1xf32>
    %90 = vector.broadcast %89 : vector<8x1xf32> to vector<8x8xf32>
    %91 = arith.mulf %86, %90 : vector<8x8xf32>
    %92 = arith.truncf %91 : vector<8x8xf32> to vector<8x8xbf16>
    %cst_25 = arith.constant dense<0.000000e+00> : vector<8x32xf32>
    %93 = tpu.matmul %92, %34, %cst_25 {dimension_numbers = #tpu.dot_dimension_numbers<[1], [0], [0], [1], [0, 0, 1, 1], [], []>} : vector<8x8xbf16>, vector<8x32xbf16>, vector<8x32xf32> -> vector<8x32xf32>
    %94 = vector.broadcast %3 : vector<1x32xf32> to vector<8x32xf32>
    %95 = arith.mulf %93, %94 : vector<8x32xf32>
    %96 = arith.addf %75, %95 : vector<8x32xf32>
    %97 = vector.broadcast %4 : vector<1x32xf32> to vector<8x32xf32>
    %98 = arith.mulf %30, %97 : vector<8x32xf32>
    %99 = arith.truncf %98 : vector<8x32xf32> to vector<8x32xbf16>
    %cst_26 = arith.constant dense<0.000000e+00> : vector<8x8xf32>
    %100 = tpu.matmul %99, %32, %cst_26 {dimension_numbers = #tpu.dot_dimension_numbers<[1], [1], [0], [0], [0, 0, 1, 0], [], []>} : vector<8x32xbf16>, vector<8x32xbf16>, vector<8x8xf32> -> vector<8x8xf32>
    %cst_27 = arith.constant 0.353553385 : f32
    %101 = vector.broadcast %cst_27 : f32 to vector<8x8xf32>
    %102 = arith.mulf %100, %101 : vector<8x8xf32>
    %cst_28 = arith.constant dense<0xFF800000> : vector<8xf32>
    %103 = vector.multi_reduction <maximumf>, %102, %cst_28 [1] : vector<8x8xf32> to vector<8xf32>
    %104 = vector.shape_cast %103 : vector<8xf32> to vector<8x1xf32>
    %105 = vector.broadcast %104 : vector<8x1xf32> to vector<8x8xf32>
    %106 = arith.subf %102, %105 : vector<8x8xf32>
    %107 = math.exp %106 : vector<8x8xf32>
    %cst_29 = arith.constant dense<0.000000e+00> : vector<8xf32>
    %108 = vector.multi_reduction <add>, %107, %cst_29 [1] : vector<8x8xf32> to vector<8xf32>
    %109 = vector.shape_cast %108 : vector<8xf32> to vector<8x1xf32>
    %110 = tpu.reciprocal %109 {approx = true} : vector<8x1xf32> -> vector<8x1xf32>
    %111 = vector.broadcast %110 : vector<8x1xf32> to vector<8x8xf32>
    %112 = arith.mulf %107, %111 : vector<8x8xf32>
    %113 = arith.truncf %112 : vector<8x8xf32> to vector<8x8xbf16>
    %cst_30 = arith.constant dense<0.000000e+00> : vector<8x32xf32>
    %114 = tpu.matmul %113, %34, %cst_30 {dimension_numbers = #tpu.dot_dimension_numbers<[1], [0], [0], [1], [0, 0, 1, 1], [], []>} : vector<8x8xbf16>, vector<8x32xbf16>, vector<8x32xf32> -> vector<8x32xf32>
    %115 = vector.broadcast %4 : vector<1x32xf32> to vector<8x32xf32>
    %116 = arith.mulf %114, %115 : vector<8x32xf32>
    %117 = arith.addf %96, %116 : vector<8x32xf32>
    %118 = vector.extract_strided_slice %27 {offsets = [8, 0], sizes = [8, 32], strides = [1, 1]} : vector<16x32xf32> to vector<8x32xf32>
    %119 = vector.extract_strided_slice %28 {offsets = [8, 0], sizes = [8, 32], strides = [1, 1]} : vector<16x32xf32> to vector<8x32xf32>
    %120 = arith.truncf %119 : vector<8x32xf32> to vector<8x32xbf16>
    %121 = vector.extract_strided_slice %29 {offsets = [8, 0], sizes = [8, 32], strides = [1, 1]} : vector<16x32xf32> to vector<8x32xf32>
    %122 = arith.truncf %121 : vector<8x32xf32> to vector<8x32xbf16>
    %123 = vector.broadcast %1 : vector<1x32xf32> to vector<8x32xf32>
    %124 = arith.mulf %118, %123 : vector<8x32xf32>
    %125 = arith.truncf %124 : vector<8x32xf32> to vector<8x32xbf16>
    %cst_31 = arith.constant dense<0.000000e+00> : vector<8x8xf32>
    %126 = tpu.matmul %125, %120, %cst_31 {dimension_numbers = #tpu.dot_dimension_numbers<[1], [1], [0], [0], [0, 0, 1, 0], [], []>} : vector<8x32xbf16>, vector<8x32xbf16>, vector<8x8xf32> -> vector<8x8xf32>
    %cst_32 = arith.constant 0.353553385 : f32
    %127 = vector.broadcast %cst_32 : f32 to vector<8x8xf32>
    %128 = arith.mulf %126, %127 : vector<8x8xf32>
    %cst_33 = arith.constant dense<0xFF800000> : vector<8xf32>
    %129 = vector.multi_reduction <maximumf>, %128, %cst_33 [1] : vector<8x8xf32> to vector<8xf32>
    %130 = vector.shape_cast %129 : vector<8xf32> to vector<8x1xf32>
    %131 = vector.broadcast %130 : vector<8x1xf32> to vector<8x8xf32>
    %132 = arith.subf %128, %131 : vector<8x8xf32>
    %133 = math.exp %132 : vector<8x8xf32>
    %cst_34 = arith.constant dense<0.000000e+00> : vector<8xf32>
    %134 = vector.multi_reduction <add>, %133, %cst_34 [1] : vector<8x8xf32> to vector<8xf32>
    %135 = vector.shape_cast %134 : vector<8xf32> to vector<8x1xf32>
    %136 = tpu.reciprocal %135 {approx = true} : vector<8x1xf32> -> vector<8x1xf32>
    %137 = vector.broadcast %136 : vector<8x1xf32> to vector<8x8xf32>
    %138 = arith.mulf %133, %137 : vector<8x8xf32>
    %139 = arith.truncf %138 : vector<8x8xf32> to vector<8x8xbf16>
    %cst_35 = arith.constant dense<0.000000e+00> : vector<8x32xf32>
    %140 = tpu.matmul %139, %122, %cst_35 {dimension_numbers = #tpu.dot_dimension_numbers<[1], [0], [0], [1], [0, 0, 1, 1], [], []>} : vector<8x8xbf16>, vector<8x32xbf16>, vector<8x32xf32> -> vector<8x32xf32>
    %141 = vector.broadcast %1 : vector<1x32xf32> to vector<8x32xf32>
    %142 = arith.mulf %140, %141 : vector<8x32xf32>
    %143 = vector.broadcast %2 : vector<1x32xf32> to vector<8x32xf32>
    %144 = arith.mulf %118, %143 : vector<8x32xf32>
    %145 = arith.truncf %144 : vector<8x32xf32> to vector<8x32xbf16>
    %cst_36 = arith.constant dense<0.000000e+00> : vector<8x8xf32>
    %146 = tpu.matmul %145, %120, %cst_36 {dimension_numbers = #tpu.dot_dimension_numbers<[1], [1], [0], [0], [0, 0, 1, 0], [], []>} : vector<8x32xbf16>, vector<8x32xbf16>, vector<8x8xf32> -> vector<8x8xf32>
    %cst_37 = arith.constant 0.353553385 : f32
    %147 = vector.broadcast %cst_37 : f32 to vector<8x8xf32>
    %148 = arith.mulf %146, %147 : vector<8x8xf32>
    %cst_38 = arith.constant dense<0xFF800000> : vector<8xf32>
    %149 = vector.multi_reduction <maximumf>, %148, %cst_38 [1] : vector<8x8xf32> to vector<8xf32>
    %150 = vector.shape_cast %149 : vector<8xf32> to vector<8x1xf32>
    %151 = vector.broadcast %150 : vector<8x1xf32> to vector<8x8xf32>
    %152 = arith.subf %148, %151 : vector<8x8xf32>
    %153 = math.exp %152 : vector<8x8xf32>
    %cst_39 = arith.constant dense<0.000000e+00> : vector<8xf32>
    %154 = vector.multi_reduction <add>, %153, %cst_39 [1] : vector<8x8xf32> to vector<8xf32>
    %155 = vector.shape_cast %154 : vector<8xf32> to vector<8x1xf32>
    %156 = tpu.reciprocal %155 {approx = true} : vector<8x1xf32> -> vector<8x1xf32>
    %157 = vector.broadcast %156 : vector<8x1xf32> to vector<8x8xf32>
    %158 = arith.mulf %153, %157 : vector<8x8xf32>
    %159 = arith.truncf %158 : vector<8x8xf32> to vector<8x8xbf16>
    %cst_40 = arith.constant dense<0.000000e+00> : vector<8x32xf32>
    %160 = tpu.matmul %159, %122, %cst_40 {dimension_numbers = #tpu.dot_dimension_numbers<[1], [0], [0], [1], [0, 0, 1, 1], [], []>} : vector<8x8xbf16>, vector<8x32xbf16>, vector<8x32xf32> -> vector<8x32xf32>
    %161 = vector.broadcast %2 : vector<1x32xf32> to vector<8x32xf32>
    %162 = arith.mulf %160, %161 : vector<8x32xf32>
    %163 = arith.addf %142, %162 : vector<8x32xf32>
    %164 = vector.broadcast %3 : vector<1x32xf32> to vector<8x32xf32>
    %165 = arith.mulf %118, %164 : vector<8x32xf32>
    %166 = arith.truncf %165 : vector<8x32xf32> to vector<8x32xbf16>
    %cst_41 = arith.constant dense<0.000000e+00> : vector<8x8xf32>
    %167 = tpu.matmul %166, %120, %cst_41 {dimension_numbers = #tpu.dot_dimension_numbers<[1], [1], [0], [0], [0, 0, 1, 0], [], []>} : vector<8x32xbf16>, vector<8x32xbf16>, vector<8x8xf32> -> vector<8x8xf32>
    %cst_42 = arith.constant 0.353553385 : f32
    %168 = vector.broadcast %cst_42 : f32 to vector<8x8xf32>
    %169 = arith.mulf %167, %168 : vector<8x8xf32>
    %cst_43 = arith.constant dense<0xFF800000> : vector<8xf32>
    %170 = vector.multi_reduction <maximumf>, %169, %cst_43 [1] : vector<8x8xf32> to vector<8xf32>
    %171 = vector.shape_cast %170 : vector<8xf32> to vector<8x1xf32>
    %172 = vector.broadcast %171 : vector<8x1xf32> to vector<8x8xf32>
    %173 = arith.subf %169, %172 : vector<8x8xf32>
    %174 = math.exp %173 : vector<8x8xf32>
    %cst_44 = arith.constant dense<0.000000e+00> : vector<8xf32>
    %175 = vector.multi_reduction <add>, %174, %cst_44 [1] : vector<8x8xf32> to vector<8xf32>
    %176 = vector.shape_cast %175 : vector<8xf32> to vector<8x1xf32>
    %177 = tpu.reciprocal %176 {approx = true} : vector<8x1xf32> -> vector<8x1xf32>
    %178 = vector.broadcast %177 : vector<8x1xf32> to vector<8x8xf32>
    %179 = arith.mulf %174, %178 : vector<8x8xf32>
    %180 = arith.truncf %179 : vector<8x8xf32> to vector<8x8xbf16>
    %cst_45 = arith.constant dense<0.000000e+00> : vector<8x32xf32>
    %181 = tpu.matmul %180, %122, %cst_45 {dimension_numbers = #tpu.dot_dimension_numbers<[1], [0], [0], [1], [0, 0, 1, 1], [], []>} : vector<8x8xbf16>, vector<8x32xbf16>, vector<8x32xf32> -> vector<8x32xf32>
    %182 = vector.broadcast %3 : vector<1x32xf32> to vector<8x32xf32>
    %183 = arith.mulf %181, %182 : vector<8x32xf32>
    %184 = arith.addf %163, %183 : vector<8x32xf32>
    %185 = vector.broadcast %4 : vector<1x32xf32> to vector<8x32xf32>
    %186 = arith.mulf %118, %185 : vector<8x32xf32>
    %187 = arith.truncf %186 : vector<8x32xf32> to vector<8x32xbf16>
    %cst_46 = arith.constant dense<0.000000e+00> : vector<8x8xf32>
    %188 = tpu.matmul %187, %120, %cst_46 {dimension_numbers = #tpu.dot_dimension_numbers<[1], [1], [0], [0], [0, 0, 1, 0], [], []>} : vector<8x32xbf16>, vector<8x32xbf16>, vector<8x8xf32> -> vector<8x8xf32>
    %cst_47 = arith.constant 0.353553385 : f32
    %189 = vector.broadcast %cst_47 : f32 to vector<8x8xf32>
    %190 = arith.mulf %188, %189 : vector<8x8xf32>
    %cst_48 = arith.constant dense<0xFF800000> : vector<8xf32>
    %191 = vector.multi_reduction <maximumf>, %190, %cst_48 [1] : vector<8x8xf32> to vector<8xf32>
    %192 = vector.shape_cast %191 : vector<8xf32> to vector<8x1xf32>
    %193 = vector.broadcast %192 : vector<8x1xf32> to vector<8x8xf32>
    %194 = arith.subf %190, %193 : vector<8x8xf32>
    %195 = math.exp %194 : vector<8x8xf32>
    %cst_49 = arith.constant dense<0.000000e+00> : vector<8xf32>
    %196 = vector.multi_reduction <add>, %195, %cst_49 [1] : vector<8x8xf32> to vector<8xf32>
    %197 = vector.shape_cast %196 : vector<8xf32> to vector<8x1xf32>
    %198 = tpu.reciprocal %197 {approx = true} : vector<8x1xf32> -> vector<8x1xf32>
    %199 = vector.broadcast %198 : vector<8x1xf32> to vector<8x8xf32>
    %200 = arith.mulf %195, %199 : vector<8x8xf32>
    %201 = arith.truncf %200 : vector<8x8xf32> to vector<8x8xbf16>
    %cst_50 = arith.constant dense<0.000000e+00> : vector<8x32xf32>
    %202 = tpu.matmul %201, %122, %cst_50 {dimension_numbers = #tpu.dot_dimension_numbers<[1], [0], [0], [1], [0, 0, 1, 1], [], []>} : vector<8x8xbf16>, vector<8x32xbf16>, vector<8x32xf32> -> vector<8x32xf32>
    %203 = vector.broadcast %4 : vector<1x32xf32> to vector<8x32xf32>
    %204 = arith.mulf %202, %203 : vector<8x32xf32>
    %205 = arith.addf %184, %204 : vector<8x32xf32>
    %206 = tpu.concatenate %117, %205 in 0 : vector<8x32xf32>, vector<8x32xf32> -> vector<16x32xf32>
    %c64 = arith.constant 64 : index
    %c0_51 = arith.constant 0 : index
    %207 = vector.load %arg1[%c64, %c0_51] : memref<512x128xbf16, #tpu.memory_space<vmem>>, vector<32x32xbf16>
    %208 = arith.truncf %206 : vector<16x32xf32> to vector<16x32xbf16>
    %cst_52 = arith.constant dense<0.000000e+00> : vector<16x32xf32>
    %209 = tpu.matmul %208, %207, %cst_52 {dimension_numbers = #tpu.dot_dimension_numbers<[1], [0], [0], [1], [0, 0, 1, 1], [], []>} : vector<16x32xbf16>, vector<32x32xbf16>, vector<16x32xf32> -> vector<16x32xf32>
    %210 = vector.extract_strided_slice %0 {offsets = [2, 0], sizes = [1, 32], strides = [1, 1]} : vector<48x128xf32> to vector<1x32xf32>
    %211 = vector.broadcast %210 : vector<1x32xf32> to vector<16x32xf32>
    %212 = arith.addf %209, %211 : vector<16x32xf32>
    %213 = arith.addf %8, %212 : vector<16x32xf32>
    %214 = vector.extract_strided_slice %0 {offsets = [7, 0], sizes = [1, 32], strides = [1, 1]} : vector<48x128xf32> to vector<1x32xf32>
    %215 = vector.extract_strided_slice %0 {offsets = [8, 0], sizes = [1, 32], strides = [1, 1]} : vector<48x128xf32> to vector<1x32xf32>
    %cst_53 = arith.constant dense<0.000000e+00> : vector<16xf32>
    %216 = vector.multi_reduction <add>, %213, %cst_53 [1] : vector<16x32xf32> to vector<16xf32>
    %217 = vector.shape_cast %216 : vector<16xf32> to vector<16x1xf32>
    %cst_54 = arith.constant 3.200000e+01 : f32
    %218 = vector.broadcast %cst_54 : f32 to vector<16x1xf32>
    %219 = arith.divf %217, %218 : vector<16x1xf32>
    %220 = vector.broadcast %219 : vector<16x1xf32> to vector<16x32xf32>
    %221 = arith.subf %213, %220 : vector<16x32xf32>
    %222 = arith.mulf %221, %221 : vector<16x32xf32>
    %cst_55 = arith.constant dense<0.000000e+00> : vector<16xf32>
    %223 = vector.multi_reduction <add>, %222, %cst_55 [1] : vector<16x32xf32> to vector<16xf32>
    %224 = vector.shape_cast %223 : vector<16xf32> to vector<16x1xf32>
    %cst_56 = arith.constant 3.200000e+01 : f32
    %225 = vector.broadcast %cst_56 : f32 to vector<16x1xf32>
    %226 = arith.divf %224, %225 : vector<16x1xf32>
    %cst_57 = arith.constant 9.99999974E-6 : f32
    %227 = vector.broadcast %cst_57 : f32 to vector<16x1xf32>
    %228 = arith.addf %226, %227 : vector<16x1xf32>
    %229 = math.rsqrt %228 : vector<16x1xf32>
    %230 = vector.broadcast %229 : vector<16x1xf32> to vector<16x32xf32>
    %231 = arith.mulf %221, %230 : vector<16x32xf32>
    %232 = vector.broadcast %214 : vector<1x32xf32> to vector<16x32xf32>
    %233 = arith.mulf %231, %232 : vector<16x32xf32>
    %234 = vector.broadcast %215 : vector<1x32xf32> to vector<16x32xf32>
    %235 = arith.addf %233, %234 : vector<16x32xf32>
    %c96 = arith.constant 96 : index
    %c0_58 = arith.constant 0 : index
    %236 = vector.load %arg1[%c96, %c0_58] : memref<512x128xbf16, #tpu.memory_space<vmem>>, vector<32x32xbf16>
    %237 = arith.truncf %235 : vector<16x32xf32> to vector<16x32xbf16>
    %cst_59 = arith.constant dense<0.000000e+00> : vector<16x32xf32>
    %238 = tpu.matmul %237, %236, %cst_59 {dimension_numbers = #tpu.dot_dimension_numbers<[1], [0], [0], [1], [0, 0, 1, 1], [], []>} : vector<16x32xbf16>, vector<32x32xbf16>, vector<16x32xf32> -> vector<16x32xf32>
    %239 = vector.extract_strided_slice %0 {offsets = [3, 0], sizes = [1, 32], strides = [1, 1]} : vector<48x128xf32> to vector<1x32xf32>
    %240 = vector.broadcast %239 : vector<1x32xf32> to vector<16x32xf32>
    %241 = arith.addf %238, %240 : vector<16x32xf32>
    %242 = vector.extract_strided_slice %241 {offsets = [0, 0], sizes = [8, 32], strides = [1, 1]} : vector<16x32xf32> to vector<8x32xf32>
    %243 = vector.extract_strided_slice %17 {offsets = [0, 0], sizes = [16, 32], strides = [1, 1]} : vector<32x32xf32> to vector<16x32xf32>
    %244 = arith.truncf %243 : vector<16x32xf32> to vector<16x32xbf16>
    %245 = vector.extract_strided_slice %19 {offsets = [0, 0], sizes = [16, 32], strides = [1, 1]} : vector<32x32xf32> to vector<16x32xf32>
    %246 = arith.truncf %245 : vector<16x32xf32> to vector<16x32xbf16>
    %247 = vector.broadcast %1 : vector<1x32xf32> to vector<8x32xf32>
    %248 = arith.mulf %242, %247 : vector<8x32xf32>
    %249 = arith.truncf %248 : vector<8x32xf32> to vector<8x32xbf16>
    %cst_60 = arith.constant dense<0.000000e+00> : vector<8x16xf32>
    %250 = tpu.matmul %249, %244, %cst_60 {dimension_numbers = #tpu.dot_dimension_numbers<[1], [1], [0], [0], [0, 0, 1, 0], [], []>} : vector<8x32xbf16>, vector<16x32xbf16>, vector<8x16xf32> -> vector<8x16xf32>
    %cst_61 = arith.constant 0.353553385 : f32
    %251 = vector.broadcast %cst_61 : f32 to vector<8x16xf32>
    %252 = arith.mulf %250, %251 : vector<8x16xf32>
    %253 = arith.addf %252, %9 : vector<8x16xf32>
    %cst_62 = arith.constant dense<0xFF800000> : vector<8xf32>
    %254 = vector.multi_reduction <maximumf>, %253, %cst_62 [1] : vector<8x16xf32> to vector<8xf32>
    %255 = vector.shape_cast %254 : vector<8xf32> to vector<8x1xf32>
    %256 = vector.broadcast %255 : vector<8x1xf32> to vector<8x16xf32>
    %257 = arith.subf %253, %256 : vector<8x16xf32>
    %258 = math.exp %257 : vector<8x16xf32>
    %cst_63 = arith.constant dense<0.000000e+00> : vector<8xf32>
    %259 = vector.multi_reduction <add>, %258, %cst_63 [1] : vector<8x16xf32> to vector<8xf32>
    %260 = vector.shape_cast %259 : vector<8xf32> to vector<8x1xf32>
    %261 = tpu.reciprocal %260 {approx = true} : vector<8x1xf32> -> vector<8x1xf32>
    %262 = vector.broadcast %261 : vector<8x1xf32> to vector<8x16xf32>
    %263 = arith.mulf %258, %262 : vector<8x16xf32>
    %264 = arith.truncf %263 : vector<8x16xf32> to vector<8x16xbf16>
    %cst_64 = arith.constant dense<0.000000e+00> : vector<8x32xf32>
    %265 = tpu.matmul %264, %246, %cst_64 {dimension_numbers = #tpu.dot_dimension_numbers<[1], [0], [0], [1], [0, 0, 1, 1], [], []>} : vector<8x16xbf16>, vector<16x32xbf16>, vector<8x32xf32> -> vector<8x32xf32>
    %266 = vector.broadcast %1 : vector<1x32xf32> to vector<8x32xf32>
    %267 = arith.mulf %265, %266 : vector<8x32xf32>
    %268 = vector.broadcast %2 : vector<1x32xf32> to vector<8x32xf32>
    %269 = arith.mulf %242, %268 : vector<8x32xf32>
    %270 = arith.truncf %269 : vector<8x32xf32> to vector<8x32xbf16>
    %cst_65 = arith.constant dense<0.000000e+00> : vector<8x16xf32>
    %271 = tpu.matmul %270, %244, %cst_65 {dimension_numbers = #tpu.dot_dimension_numbers<[1], [1], [0], [0], [0, 0, 1, 0], [], []>} : vector<8x32xbf16>, vector<16x32xbf16>, vector<8x16xf32> -> vector<8x16xf32>
    %cst_66 = arith.constant 0.353553385 : f32
    %272 = vector.broadcast %cst_66 : f32 to vector<8x16xf32>
    %273 = arith.mulf %271, %272 : vector<8x16xf32>
    %274 = arith.addf %273, %9 : vector<8x16xf32>
    %cst_67 = arith.constant dense<0xFF800000> : vector<8xf32>
    %275 = vector.multi_reduction <maximumf>, %274, %cst_67 [1] : vector<8x16xf32> to vector<8xf32>
    %276 = vector.shape_cast %275 : vector<8xf32> to vector<8x1xf32>
    %277 = vector.broadcast %276 : vector<8x1xf32> to vector<8x16xf32>
    %278 = arith.subf %274, %277 : vector<8x16xf32>
    %279 = math.exp %278 : vector<8x16xf32>
    %cst_68 = arith.constant dense<0.000000e+00> : vector<8xf32>
    %280 = vector.multi_reduction <add>, %279, %cst_68 [1] : vector<8x16xf32> to vector<8xf32>
    %281 = vector.shape_cast %280 : vector<8xf32> to vector<8x1xf32>
    %282 = tpu.reciprocal %281 {approx = true} : vector<8x1xf32> -> vector<8x1xf32>
    %283 = vector.broadcast %282 : vector<8x1xf32> to vector<8x16xf32>
    %284 = arith.mulf %279, %283 : vector<8x16xf32>
    %285 = arith.truncf %284 : vector<8x16xf32> to vector<8x16xbf16>
    %cst_69 = arith.constant dense<0.000000e+00> : vector<8x32xf32>
    %286 = tpu.matmul %285, %246, %cst_69 {dimension_numbers = #tpu.dot_dimension_numbers<[1], [0], [0], [1], [0, 0, 1, 1], [], []>} : vector<8x16xbf16>, vector<16x32xbf16>, vector<8x32xf32> -> vector<8x32xf32>
    %287 = vector.broadcast %2 : vector<1x32xf32> to vector<8x32xf32>
    %288 = arith.mulf %286, %287 : vector<8x32xf32>
    %289 = arith.addf %267, %288 : vector<8x32xf32>
    %290 = vector.broadcast %3 : vector<1x32xf32> to vector<8x32xf32>
    %291 = arith.mulf %242, %290 : vector<8x32xf32>
    %292 = arith.truncf %291 : vector<8x32xf32> to vector<8x32xbf16>
    %cst_70 = arith.constant dense<0.000000e+00> : vector<8x16xf32>
    %293 = tpu.matmul %292, %244, %cst_70 {dimension_numbers = #tpu.dot_dimension_numbers<[1], [1], [0], [0], [0, 0, 1, 0], [], []>} : vector<8x32xbf16>, vector<16x32xbf16>, vector<8x16xf32> -> vector<8x16xf32>
    %cst_71 = arith.constant 0.353553385 : f32
    %294 = vector.broadcast %cst_71 : f32 to vector<8x16xf32>
    %295 = arith.mulf %293, %294 : vector<8x16xf32>
    %296 = arith.addf %295, %9 : vector<8x16xf32>
    %cst_72 = arith.constant dense<0xFF800000> : vector<8xf32>
    %297 = vector.multi_reduction <maximumf>, %296, %cst_72 [1] : vector<8x16xf32> to vector<8xf32>
    %298 = vector.shape_cast %297 : vector<8xf32> to vector<8x1xf32>
    %299 = vector.broadcast %298 : vector<8x1xf32> to vector<8x16xf32>
    %300 = arith.subf %296, %299 : vector<8x16xf32>
    %301 = math.exp %300 : vector<8x16xf32>
    %cst_73 = arith.constant dense<0.000000e+00> : vector<8xf32>
    %302 = vector.multi_reduction <add>, %301, %cst_73 [1] : vector<8x16xf32> to vector<8xf32>
    %303 = vector.shape_cast %302 : vector<8xf32> to vector<8x1xf32>
    %304 = tpu.reciprocal %303 {approx = true} : vector<8x1xf32> -> vector<8x1xf32>
    %305 = vector.broadcast %304 : vector<8x1xf32> to vector<8x16xf32>
    %306 = arith.mulf %301, %305 : vector<8x16xf32>
    %307 = arith.truncf %306 : vector<8x16xf32> to vector<8x16xbf16>
    %cst_74 = arith.constant dense<0.000000e+00> : vector<8x32xf32>
    %308 = tpu.matmul %307, %246, %cst_74 {dimension_numbers = #tpu.dot_dimension_numbers<[1], [0], [0], [1], [0, 0, 1, 1], [], []>} : vector<8x16xbf16>, vector<16x32xbf16>, vector<8x32xf32> -> vector<8x32xf32>
    %309 = vector.broadcast %3 : vector<1x32xf32> to vector<8x32xf32>
    %310 = arith.mulf %308, %309 : vector<8x32xf32>
    %311 = arith.addf %289, %310 : vector<8x32xf32>
    %312 = vector.broadcast %4 : vector<1x32xf32> to vector<8x32xf32>
    %313 = arith.mulf %242, %312 : vector<8x32xf32>
    %314 = arith.truncf %313 : vector<8x32xf32> to vector<8x32xbf16>
    %cst_75 = arith.constant dense<0.000000e+00> : vector<8x16xf32>
    %315 = tpu.matmul %314, %244, %cst_75 {dimension_numbers = #tpu.dot_dimension_numbers<[1], [1], [0], [0], [0, 0, 1, 0], [], []>} : vector<8x32xbf16>, vector<16x32xbf16>, vector<8x16xf32> -> vector<8x16xf32>
    %cst_76 = arith.constant 0.353553385 : f32
    %316 = vector.broadcast %cst_76 : f32 to vector<8x16xf32>
    %317 = arith.mulf %315, %316 : vector<8x16xf32>
    %318 = arith.addf %317, %9 : vector<8x16xf32>
    %cst_77 = arith.constant dense<0xFF800000> : vector<8xf32>
    %319 = vector.multi_reduction <maximumf>, %318, %cst_77 [1] : vector<8x16xf32> to vector<8xf32>
    %320 = vector.shape_cast %319 : vector<8xf32> to vector<8x1xf32>
    %321 = vector.broadcast %320 : vector<8x1xf32> to vector<8x16xf32>
    %322 = arith.subf %318, %321 : vector<8x16xf32>
    %323 = math.exp %322 : vector<8x16xf32>
    %cst_78 = arith.constant dense<0.000000e+00> : vector<8xf32>
    %324 = vector.multi_reduction <add>, %323, %cst_78 [1] : vector<8x16xf32> to vector<8xf32>
    %325 = vector.shape_cast %324 : vector<8xf32> to vector<8x1xf32>
    %326 = tpu.reciprocal %325 {approx = true} : vector<8x1xf32> -> vector<8x1xf32>
    %327 = vector.broadcast %326 : vector<8x1xf32> to vector<8x16xf32>
    %328 = arith.mulf %323, %327 : vector<8x16xf32>
    %329 = arith.truncf %328 : vector<8x16xf32> to vector<8x16xbf16>
    %cst_79 = arith.constant dense<0.000000e+00> : vector<8x32xf32>
    %330 = tpu.matmul %329, %246, %cst_79 {dimension_numbers = #tpu.dot_dimension_numbers<[1], [0], [0], [1], [0, 0, 1, 1], [], []>} : vector<8x16xbf16>, vector<16x32xbf16>, vector<8x32xf32> -> vector<8x32xf32>
    %331 = vector.broadcast %4 : vector<1x32xf32> to vector<8x32xf32>
    %332 = arith.mulf %330, %331 : vector<8x32xf32>
    %333 = arith.addf %311, %332 : vector<8x32xf32>
    %334 = vector.extract_strided_slice %241 {offsets = [8, 0], sizes = [8, 32], strides = [1, 1]} : vector<16x32xf32> to vector<8x32xf32>
    %335 = vector.extract_strided_slice %17 {offsets = [16, 0], sizes = [16, 32], strides = [1, 1]} : vector<32x32xf32> to vector<16x32xf32>
    %336 = arith.truncf %335 : vector<16x32xf32> to vector<16x32xbf16>
    %337 = vector.extract_strided_slice %19 {offsets = [16, 0], sizes = [16, 32], strides = [1, 1]} : vector<32x32xf32> to vector<16x32xf32>
    %338 = arith.truncf %337 : vector<16x32xf32> to vector<16x32xbf16>
    %339 = vector.broadcast %1 : vector<1x32xf32> to vector<8x32xf32>
    %340 = arith.mulf %334, %339 : vector<8x32xf32>
    %341 = arith.truncf %340 : vector<8x32xf32> to vector<8x32xbf16>
    %cst_80 = arith.constant dense<0.000000e+00> : vector<8x16xf32>
    %342 = tpu.matmul %341, %336, %cst_80 {dimension_numbers = #tpu.dot_dimension_numbers<[1], [1], [0], [0], [0, 0, 1, 0], [], []>} : vector<8x32xbf16>, vector<16x32xbf16>, vector<8x16xf32> -> vector<8x16xf32>
    %cst_81 = arith.constant 0.353553385 : f32
    %343 = vector.broadcast %cst_81 : f32 to vector<8x16xf32>
    %344 = arith.mulf %342, %343 : vector<8x16xf32>
    %345 = arith.addf %344, %10 : vector<8x16xf32>
    %cst_82 = arith.constant dense<0xFF800000> : vector<8xf32>
    %346 = vector.multi_reduction <maximumf>, %345, %cst_82 [1] : vector<8x16xf32> to vector<8xf32>
    %347 = vector.shape_cast %346 : vector<8xf32> to vector<8x1xf32>
    %348 = vector.broadcast %347 : vector<8x1xf32> to vector<8x16xf32>
    %349 = arith.subf %345, %348 : vector<8x16xf32>
    %350 = math.exp %349 : vector<8x16xf32>
    %cst_83 = arith.constant dense<0.000000e+00> : vector<8xf32>
    %351 = vector.multi_reduction <add>, %350, %cst_83 [1] : vector<8x16xf32> to vector<8xf32>
    %352 = vector.shape_cast %351 : vector<8xf32> to vector<8x1xf32>
    %353 = tpu.reciprocal %352 {approx = true} : vector<8x1xf32> -> vector<8x1xf32>
    %354 = vector.broadcast %353 : vector<8x1xf32> to vector<8x16xf32>
    %355 = arith.mulf %350, %354 : vector<8x16xf32>
    %356 = arith.truncf %355 : vector<8x16xf32> to vector<8x16xbf16>
    %cst_84 = arith.constant dense<0.000000e+00> : vector<8x32xf32>
    %357 = tpu.matmul %356, %338, %cst_84 {dimension_numbers = #tpu.dot_dimension_numbers<[1], [0], [0], [1], [0, 0, 1, 1], [], []>} : vector<8x16xbf16>, vector<16x32xbf16>, vector<8x32xf32> -> vector<8x32xf32>
    %358 = vector.broadcast %1 : vector<1x32xf32> to vector<8x32xf32>
    %359 = arith.mulf %357, %358 : vector<8x32xf32>
    %360 = vector.broadcast %2 : vector<1x32xf32> to vector<8x32xf32>
    %361 = arith.mulf %334, %360 : vector<8x32xf32>
    %362 = arith.truncf %361 : vector<8x32xf32> to vector<8x32xbf16>
    %cst_85 = arith.constant dense<0.000000e+00> : vector<8x16xf32>
    %363 = tpu.matmul %362, %336, %cst_85 {dimension_numbers = #tpu.dot_dimension_numbers<[1], [1], [0], [0], [0, 0, 1, 0], [], []>} : vector<8x32xbf16>, vector<16x32xbf16>, vector<8x16xf32> -> vector<8x16xf32>
    %cst_86 = arith.constant 0.353553385 : f32
    %364 = vector.broadcast %cst_86 : f32 to vector<8x16xf32>
    %365 = arith.mulf %363, %364 : vector<8x16xf32>
    %366 = arith.addf %365, %10 : vector<8x16xf32>
    %cst_87 = arith.constant dense<0xFF800000> : vector<8xf32>
    %367 = vector.multi_reduction <maximumf>, %366, %cst_87 [1] : vector<8x16xf32> to vector<8xf32>
    %368 = vector.shape_cast %367 : vector<8xf32> to vector<8x1xf32>
    %369 = vector.broadcast %368 : vector<8x1xf32> to vector<8x16xf32>
    %370 = arith.subf %366, %369 : vector<8x16xf32>
    %371 = math.exp %370 : vector<8x16xf32>
    %cst_88 = arith.constant dense<0.000000e+00> : vector<8xf32>
    %372 = vector.multi_reduction <add>, %371, %cst_88 [1] : vector<8x16xf32> to vector<8xf32>
    %373 = vector.shape_cast %372 : vector<8xf32> to vector<8x1xf32>
    %374 = tpu.reciprocal %373 {approx = true} : vector<8x1xf32> -> vector<8x1xf32>
    %375 = vector.broadcast %374 : vector<8x1xf32> to vector<8x16xf32>
    %376 = arith.mulf %371, %375 : vector<8x16xf32>
    %377 = arith.truncf %376 : vector<8x16xf32> to vector<8x16xbf16>
    %cst_89 = arith.constant dense<0.000000e+00> : vector<8x32xf32>
    %378 = tpu.matmul %377, %338, %cst_89 {dimension_numbers = #tpu.dot_dimension_numbers<[1], [0], [0], [1], [0, 0, 1, 1], [], []>} : vector<8x16xbf16>, vector<16x32xbf16>, vector<8x32xf32> -> vector<8x32xf32>
    %379 = vector.broadcast %2 : vector<1x32xf32> to vector<8x32xf32>
    %380 = arith.mulf %378, %379 : vector<8x32xf32>
    %381 = arith.addf %359, %380 : vector<8x32xf32>
    %382 = vector.broadcast %3 : vector<1x32xf32> to vector<8x32xf32>
    %383 = arith.mulf %334, %382 : vector<8x32xf32>
    %384 = arith.truncf %383 : vector<8x32xf32> to vector<8x32xbf16>
    %cst_90 = arith.constant dense<0.000000e+00> : vector<8x16xf32>
    %385 = tpu.matmul %384, %336, %cst_90 {dimension_numbers = #tpu.dot_dimension_numbers<[1], [1], [0], [0], [0, 0, 1, 0], [], []>} : vector<8x32xbf16>, vector<16x32xbf16>, vector<8x16xf32> -> vector<8x16xf32>
    %cst_91 = arith.constant 0.353553385 : f32
    %386 = vector.broadcast %cst_91 : f32 to vector<8x16xf32>
    %387 = arith.mulf %385, %386 : vector<8x16xf32>
    %388 = arith.addf %387, %10 : vector<8x16xf32>
    %cst_92 = arith.constant dense<0xFF800000> : vector<8xf32>
    %389 = vector.multi_reduction <maximumf>, %388, %cst_92 [1] : vector<8x16xf32> to vector<8xf32>
    %390 = vector.shape_cast %389 : vector<8xf32> to vector<8x1xf32>
    %391 = vector.broadcast %390 : vector<8x1xf32> to vector<8x16xf32>
    %392 = arith.subf %388, %391 : vector<8x16xf32>
    %393 = math.exp %392 : vector<8x16xf32>
    %cst_93 = arith.constant dense<0.000000e+00> : vector<8xf32>
    %394 = vector.multi_reduction <add>, %393, %cst_93 [1] : vector<8x16xf32> to vector<8xf32>
    %395 = vector.shape_cast %394 : vector<8xf32> to vector<8x1xf32>
    %396 = tpu.reciprocal %395 {approx = true} : vector<8x1xf32> -> vector<8x1xf32>
    %397 = vector.broadcast %396 : vector<8x1xf32> to vector<8x16xf32>
    %398 = arith.mulf %393, %397 : vector<8x16xf32>
    %399 = arith.truncf %398 : vector<8x16xf32> to vector<8x16xbf16>
    %cst_94 = arith.constant dense<0.000000e+00> : vector<8x32xf32>
    %400 = tpu.matmul %399, %338, %cst_94 {dimension_numbers = #tpu.dot_dimension_numbers<[1], [0], [0], [1], [0, 0, 1, 1], [], []>} : vector<8x16xbf16>, vector<16x32xbf16>, vector<8x32xf32> -> vector<8x32xf32>
    %401 = vector.broadcast %3 : vector<1x32xf32> to vector<8x32xf32>
    %402 = arith.mulf %400, %401 : vector<8x32xf32>
    %403 = arith.addf %381, %402 : vector<8x32xf32>
    %404 = vector.broadcast %4 : vector<1x32xf32> to vector<8x32xf32>
    %405 = arith.mulf %334, %404 : vector<8x32xf32>
    %406 = arith.truncf %405 : vector<8x32xf32> to vector<8x32xbf16>
    %cst_95 = arith.constant dense<0.000000e+00> : vector<8x16xf32>
    %407 = tpu.matmul %406, %336, %cst_95 {dimension_numbers = #tpu.dot_dimension_numbers<[1], [1], [0], [0], [0, 0, 1, 0], [], []>} : vector<8x32xbf16>, vector<16x32xbf16>, vector<8x16xf32> -> vector<8x16xf32>
    %cst_96 = arith.constant 0.353553385 : f32
    %408 = vector.broadcast %cst_96 : f32 to vector<8x16xf32>
    %409 = arith.mulf %407, %408 : vector<8x16xf32>
    %410 = arith.addf %409, %10 : vector<8x16xf32>
    %cst_97 = arith.constant dense<0xFF800000> : vector<8xf32>
    %411 = vector.multi_reduction <maximumf>, %410, %cst_97 [1] : vector<8x16xf32> to vector<8xf32>
    %412 = vector.shape_cast %411 : vector<8xf32> to vector<8x1xf32>
    %413 = vector.broadcast %412 : vector<8x1xf32> to vector<8x16xf32>
    %414 = arith.subf %410, %413 : vector<8x16xf32>
    %415 = math.exp %414 : vector<8x16xf32>
    %cst_98 = arith.constant dense<0.000000e+00> : vector<8xf32>
    %416 = vector.multi_reduction <add>, %415, %cst_98 [1] : vector<8x16xf32> to vector<8xf32>
    %417 = vector.shape_cast %416 : vector<8xf32> to vector<8x1xf32>
    %418 = tpu.reciprocal %417 {approx = true} : vector<8x1xf32> -> vector<8x1xf32>
    %419 = vector.broadcast %418 : vector<8x1xf32> to vector<8x16xf32>
    %420 = arith.mulf %415, %419 : vector<8x16xf32>
    %421 = arith.truncf %420 : vector<8x16xf32> to vector<8x16xbf16>
    %cst_99 = arith.constant dense<0.000000e+00> : vector<8x32xf32>
    %422 = tpu.matmul %421, %338, %cst_99 {dimension_numbers = #tpu.dot_dimension_numbers<[1], [0], [0], [1], [0, 0, 1, 1], [], []>} : vector<8x16xbf16>, vector<16x32xbf16>, vector<8x32xf32> -> vector<8x32xf32>
    %423 = vector.broadcast %4 : vector<1x32xf32> to vector<8x32xf32>
    %424 = arith.mulf %422, %423 : vector<8x32xf32>
    %425 = arith.addf %403, %424 : vector<8x32xf32>
    %426 = tpu.concatenate %333, %425 in 0 : vector<8x32xf32>, vector<8x32xf32> -> vector<16x32xf32>
    %c128 = arith.constant 128 : index
    %c0_100 = arith.constant 0 : index
    %427 = vector.load %arg1[%c128, %c0_100] : memref<512x128xbf16, #tpu.memory_space<vmem>>, vector<32x32xbf16>
    %428 = arith.truncf %426 : vector<16x32xf32> to vector<16x32xbf16>
    %cst_101 = arith.constant dense<0.000000e+00> : vector<16x32xf32>
    %429 = tpu.matmul %428, %427, %cst_101 {dimension_numbers = #tpu.dot_dimension_numbers<[1], [0], [0], [1], [0, 0, 1, 1], [], []>} : vector<16x32xbf16>, vector<32x32xbf16>, vector<16x32xf32> -> vector<16x32xf32>
    %430 = vector.extract_strided_slice %0 {offsets = [4, 0], sizes = [1, 32], strides = [1, 1]} : vector<48x128xf32> to vector<1x32xf32>
    %431 = vector.broadcast %430 : vector<1x32xf32> to vector<16x32xf32>
    %432 = arith.addf %429, %431 : vector<16x32xf32>
    %433 = arith.addf %235, %432 : vector<16x32xf32>
    %434 = vector.extract_strided_slice %0 {offsets = [9, 0], sizes = [1, 32], strides = [1, 1]} : vector<48x128xf32> to vector<1x32xf32>
    %435 = vector.extract_strided_slice %0 {offsets = [10, 0], sizes = [1, 32], strides = [1, 1]} : vector<48x128xf32> to vector<1x32xf32>
    %cst_102 = arith.constant dense<0.000000e+00> : vector<16xf32>
    %436 = vector.multi_reduction <add>, %433, %cst_102 [1] : vector<16x32xf32> to vector<16xf32>
    %437 = vector.shape_cast %436 : vector<16xf32> to vector<16x1xf32>
    %cst_103 = arith.constant 3.200000e+01 : f32
    %438 = vector.broadcast %cst_103 : f32 to vector<16x1xf32>
    %439 = arith.divf %437, %438 : vector<16x1xf32>
    %440 = vector.broadcast %439 : vector<16x1xf32> to vector<16x32xf32>
    %441 = arith.subf %433, %440 : vector<16x32xf32>
    %442 = arith.mulf %441, %441 : vector<16x32xf32>
    %cst_104 = arith.constant dense<0.000000e+00> : vector<16xf32>
    %443 = vector.multi_reduction <add>, %442, %cst_104 [1] : vector<16x32xf32> to vector<16xf32>
    %444 = vector.shape_cast %443 : vector<16xf32> to vector<16x1xf32>
    %cst_105 = arith.constant 3.200000e+01 : f32
    %445 = vector.broadcast %cst_105 : f32 to vector<16x1xf32>
    %446 = arith.divf %444, %445 : vector<16x1xf32>
    %cst_106 = arith.constant 9.99999974E-6 : f32
    %447 = vector.broadcast %cst_106 : f32 to vector<16x1xf32>
    %448 = arith.addf %446, %447 : vector<16x1xf32>
    %449 = math.rsqrt %448 : vector<16x1xf32>
    %450 = vector.broadcast %449 : vector<16x1xf32> to vector<16x32xf32>
    %451 = arith.mulf %441, %450 : vector<16x32xf32>
    %452 = vector.broadcast %434 : vector<1x32xf32> to vector<16x32xf32>
    %453 = arith.mulf %451, %452 : vector<16x32xf32>
    %454 = vector.broadcast %435 : vector<1x32xf32> to vector<16x32xf32>
    %455 = arith.addf %453, %454 : vector<16x32xf32>
    %c160 = arith.constant 160 : index
    %c0_107 = arith.constant 0 : index
    %456 = vector.load %arg1[%c160, %c0_107] : memref<512x128xbf16, #tpu.memory_space<vmem>>, vector<32x64xbf16>
    %457 = arith.truncf %455 : vector<16x32xf32> to vector<16x32xbf16>
    %cst_108 = arith.constant dense<0.000000e+00> : vector<16x64xf32>
    %458 = tpu.matmul %457, %456, %cst_108 {dimension_numbers = #tpu.dot_dimension_numbers<[1], [0], [0], [1], [0, 0, 1, 1], [], []>} : vector<16x32xbf16>, vector<32x64xbf16>, vector<16x64xf32> -> vector<16x64xf32>
    %459 = vector.extract_strided_slice %0 {offsets = [5, 0], sizes = [1, 64], strides = [1, 1]} : vector<48x128xf32> to vector<1x64xf32>
    %460 = vector.broadcast %459 : vector<1x64xf32> to vector<16x64xf32>
    %461 = arith.addf %458, %460 : vector<16x64xf32>
    %cst_109 = arith.constant 0.000000e+00 : f32
    %462 = vector.broadcast %cst_109 : f32 to vector<16x64xf32>
    %463 = arith.maximumf %461, %462 : vector<16x64xf32>
    %c192 = arith.constant 192 : index
    %c0_110 = arith.constant 0 : index
    %464 = vector.load %arg1[%c192, %c0_110] : memref<512x128xbf16, #tpu.memory_space<vmem>>, vector<64x32xbf16>
    %465 = arith.truncf %463 : vector<16x64xf32> to vector<16x64xbf16>
    %cst_111 = arith.constant dense<0.000000e+00> : vector<16x32xf32>
    %466 = tpu.matmul %465, %464, %cst_111 {dimension_numbers = #tpu.dot_dimension_numbers<[1], [0], [0], [1], [0, 0, 1, 1], [], []>} : vector<16x64xbf16>, vector<64x32xbf16>, vector<16x32xf32> -> vector<16x32xf32>
    %467 = vector.extract_strided_slice %0 {offsets = [6, 0], sizes = [1, 32], strides = [1, 1]} : vector<48x128xf32> to vector<1x32xf32>
    %468 = vector.broadcast %467 : vector<1x32xf32> to vector<16x32xf32>
    %469 = arith.addf %466, %468 : vector<16x32xf32>
    %470 = arith.addf %455, %469 : vector<16x32xf32>
    %471 = vector.extract_strided_slice %0 {offsets = [11, 0], sizes = [1, 32], strides = [1, 1]} : vector<48x128xf32> to vector<1x32xf32>
    %472 = vector.extract_strided_slice %0 {offsets = [12, 0], sizes = [1, 32], strides = [1, 1]} : vector<48x128xf32> to vector<1x32xf32>
    %cst_112 = arith.constant dense<0.000000e+00> : vector<16xf32>
    %473 = vector.multi_reduction <add>, %470, %cst_112 [1] : vector<16x32xf32> to vector<16xf32>
    %474 = vector.shape_cast %473 : vector<16xf32> to vector<16x1xf32>
    %cst_113 = arith.constant 3.200000e+01 : f32
    %475 = vector.broadcast %cst_113 : f32 to vector<16x1xf32>
    %476 = arith.divf %474, %475 : vector<16x1xf32>
    %477 = vector.broadcast %476 : vector<16x1xf32> to vector<16x32xf32>
    %478 = arith.subf %470, %477 : vector<16x32xf32>
    %479 = arith.mulf %478, %478 : vector<16x32xf32>
    %cst_114 = arith.constant dense<0.000000e+00> : vector<16xf32>
    %480 = vector.multi_reduction <add>, %479, %cst_114 [1] : vector<16x32xf32> to vector<16xf32>
    %481 = vector.shape_cast %480 : vector<16xf32> to vector<16x1xf32>
    %cst_115 = arith.constant 3.200000e+01 : f32
    %482 = vector.broadcast %cst_115 : f32 to vector<16x1xf32>
    %483 = arith.divf %481, %482 : vector<16x1xf32>
    %cst_116 = arith.constant 9.99999974E-6 : f32
    %484 = vector.broadcast %cst_116 : f32 to vector<16x1xf32>
    %485 = arith.addf %483, %484 : vector<16x1xf32>
    %486 = math.rsqrt %485 : vector<16x1xf32>
    %487 = vector.broadcast %486 : vector<16x1xf32> to vector<16x32xf32>
    %488 = arith.mulf %478, %487 : vector<16x32xf32>
    %489 = vector.broadcast %471 : vector<1x32xf32> to vector<16x32xf32>
    %490 = arith.mulf %488, %489 : vector<16x32xf32>
    %491 = vector.broadcast %472 : vector<1x32xf32> to vector<16x32xf32>
    %492 = arith.addf %490, %491 : vector<16x32xf32>
    %c256 = arith.constant 256 : index
    %c0_117 = arith.constant 0 : index
    %493 = vector.load %arg1[%c256, %c0_117] : memref<512x128xbf16, #tpu.memory_space<vmem>>, vector<32x96xbf16>
    %494 = arith.truncf %492 : vector<16x32xf32> to vector<16x32xbf16>
    %cst_118 = arith.constant dense<0.000000e+00> : vector<16x96xf32>
    %495 = tpu.matmul %494, %493, %cst_118 {dimension_numbers = #tpu.dot_dimension_numbers<[1], [0], [0], [1], [0, 0, 1, 1], [], []>} : vector<16x32xbf16>, vector<32x96xbf16>, vector<16x96xf32> -> vector<16x96xf32>
    %496 = vector.extract_strided_slice %0 {offsets = [13, 0], sizes = [1, 96], strides = [1, 1]} : vector<48x128xf32> to vector<1x96xf32>
    %497 = vector.broadcast %496 : vector<1x96xf32> to vector<16x96xf32>
    %498 = arith.addf %495, %497 : vector<16x96xf32>
    %499 = vector.extract_strided_slice %498 {offsets = [0, 0], sizes = [16, 32], strides = [1, 1]} : vector<16x96xf32> to vector<16x32xf32>
    %500 = vector.extract_strided_slice %498 {offsets = [0, 32], sizes = [16, 32], strides = [1, 1]} : vector<16x96xf32> to vector<16x32xf32>
    %501 = vector.extract_strided_slice %498 {offsets = [0, 64], sizes = [16, 32], strides = [1, 1]} : vector<16x96xf32> to vector<16x32xf32>
    %502 = vector.extract_strided_slice %499 {offsets = [0, 0], sizes = [8, 32], strides = [1, 1]} : vector<16x32xf32> to vector<8x32xf32>
    %503 = vector.extract_strided_slice %500 {offsets = [0, 0], sizes = [8, 32], strides = [1, 1]} : vector<16x32xf32> to vector<8x32xf32>
    %504 = arith.truncf %503 : vector<8x32xf32> to vector<8x32xbf16>
    %505 = vector.extract_strided_slice %501 {offsets = [0, 0], sizes = [8, 32], strides = [1, 1]} : vector<16x32xf32> to vector<8x32xf32>
    %506 = arith.truncf %505 : vector<8x32xf32> to vector<8x32xbf16>
    %507 = vector.broadcast %1 : vector<1x32xf32> to vector<8x32xf32>
    %508 = arith.mulf %502, %507 : vector<8x32xf32>
    %509 = arith.truncf %508 : vector<8x32xf32> to vector<8x32xbf16>
    %cst_119 = arith.constant dense<0.000000e+00> : vector<8x8xf32>
    %510 = tpu.matmul %509, %504, %cst_119 {dimension_numbers = #tpu.dot_dimension_numbers<[1], [1], [0], [0], [0, 0, 1, 0], [], []>} : vector<8x32xbf16>, vector<8x32xbf16>, vector<8x8xf32> -> vector<8x8xf32>
    %cst_120 = arith.constant 0.353553385 : f32
    %511 = vector.broadcast %cst_120 : f32 to vector<8x8xf32>
    %512 = arith.mulf %510, %511 : vector<8x8xf32>
    %cst_121 = arith.constant dense<0xFF800000> : vector<8xf32>
    %513 = vector.multi_reduction <maximumf>, %512, %cst_121 [1] : vector<8x8xf32> to vector<8xf32>
    %514 = vector.shape_cast %513 : vector<8xf32> to vector<8x1xf32>
    %515 = vector.broadcast %514 : vector<8x1xf32> to vector<8x8xf32>
    %516 = arith.subf %512, %515 : vector<8x8xf32>
    %517 = math.exp %516 : vector<8x8xf32>
    %cst_122 = arith.constant dense<0.000000e+00> : vector<8xf32>
    %518 = vector.multi_reduction <add>, %517, %cst_122 [1] : vector<8x8xf32> to vector<8xf32>
    %519 = vector.shape_cast %518 : vector<8xf32> to vector<8x1xf32>
    %520 = tpu.reciprocal %519 {approx = true} : vector<8x1xf32> -> vector<8x1xf32>
    %521 = vector.broadcast %520 : vector<8x1xf32> to vector<8x8xf32>
    %522 = arith.mulf %517, %521 : vector<8x8xf32>
    %523 = arith.truncf %522 : vector<8x8xf32> to vector<8x8xbf16>
    %cst_123 = arith.constant dense<0.000000e+00> : vector<8x32xf32>
    %524 = tpu.matmul %523, %506, %cst_123 {dimension_numbers = #tpu.dot_dimension_numbers<[1], [0], [0], [1], [0, 0, 1, 1], [], []>} : vector<8x8xbf16>, vector<8x32xbf16>, vector<8x32xf32> -> vector<8x32xf32>
    %525 = vector.broadcast %1 : vector<1x32xf32> to vector<8x32xf32>
    %526 = arith.mulf %524, %525 : vector<8x32xf32>
    %527 = vector.broadcast %2 : vector<1x32xf32> to vector<8x32xf32>
    %528 = arith.mulf %502, %527 : vector<8x32xf32>
    %529 = arith.truncf %528 : vector<8x32xf32> to vector<8x32xbf16>
    %cst_124 = arith.constant dense<0.000000e+00> : vector<8x8xf32>
    %530 = tpu.matmul %529, %504, %cst_124 {dimension_numbers = #tpu.dot_dimension_numbers<[1], [1], [0], [0], [0, 0, 1, 0], [], []>} : vector<8x32xbf16>, vector<8x32xbf16>, vector<8x8xf32> -> vector<8x8xf32>
    %cst_125 = arith.constant 0.353553385 : f32
    %531 = vector.broadcast %cst_125 : f32 to vector<8x8xf32>
    %532 = arith.mulf %530, %531 : vector<8x8xf32>
    %cst_126 = arith.constant dense<0xFF800000> : vector<8xf32>
    %533 = vector.multi_reduction <maximumf>, %532, %cst_126 [1] : vector<8x8xf32> to vector<8xf32>
    %534 = vector.shape_cast %533 : vector<8xf32> to vector<8x1xf32>
    %535 = vector.broadcast %534 : vector<8x1xf32> to vector<8x8xf32>
    %536 = arith.subf %532, %535 : vector<8x8xf32>
    %537 = math.exp %536 : vector<8x8xf32>
    %cst_127 = arith.constant dense<0.000000e+00> : vector<8xf32>
    %538 = vector.multi_reduction <add>, %537, %cst_127 [1] : vector<8x8xf32> to vector<8xf32>
    %539 = vector.shape_cast %538 : vector<8xf32> to vector<8x1xf32>
    %540 = tpu.reciprocal %539 {approx = true} : vector<8x1xf32> -> vector<8x1xf32>
    %541 = vector.broadcast %540 : vector<8x1xf32> to vector<8x8xf32>
    %542 = arith.mulf %537, %541 : vector<8x8xf32>
    %543 = arith.truncf %542 : vector<8x8xf32> to vector<8x8xbf16>
    %cst_128 = arith.constant dense<0.000000e+00> : vector<8x32xf32>
    %544 = tpu.matmul %543, %506, %cst_128 {dimension_numbers = #tpu.dot_dimension_numbers<[1], [0], [0], [1], [0, 0, 1, 1], [], []>} : vector<8x8xbf16>, vector<8x32xbf16>, vector<8x32xf32> -> vector<8x32xf32>
    %545 = vector.broadcast %2 : vector<1x32xf32> to vector<8x32xf32>
    %546 = arith.mulf %544, %545 : vector<8x32xf32>
    %547 = arith.addf %526, %546 : vector<8x32xf32>
    %548 = vector.broadcast %3 : vector<1x32xf32> to vector<8x32xf32>
    %549 = arith.mulf %502, %548 : vector<8x32xf32>
    %550 = arith.truncf %549 : vector<8x32xf32> to vector<8x32xbf16>
    %cst_129 = arith.constant dense<0.000000e+00> : vector<8x8xf32>
    %551 = tpu.matmul %550, %504, %cst_129 {dimension_numbers = #tpu.dot_dimension_numbers<[1], [1], [0], [0], [0, 0, 1, 0], [], []>} : vector<8x32xbf16>, vector<8x32xbf16>, vector<8x8xf32> -> vector<8x8xf32>
    %cst_130 = arith.constant 0.353553385 : f32
    %552 = vector.broadcast %cst_130 : f32 to vector<8x8xf32>
    %553 = arith.mulf %551, %552 : vector<8x8xf32>
    %cst_131 = arith.constant dense<0xFF800000> : vector<8xf32>
    %554 = vector.multi_reduction <maximumf>, %553, %cst_131 [1] : vector<8x8xf32> to vector<8xf32>
    %555 = vector.shape_cast %554 : vector<8xf32> to vector<8x1xf32>
    %556 = vector.broadcast %555 : vector<8x1xf32> to vector<8x8xf32>
    %557 = arith.subf %553, %556 : vector<8x8xf32>
    %558 = math.exp %557 : vector<8x8xf32>
    %cst_132 = arith.constant dense<0.000000e+00> : vector<8xf32>
    %559 = vector.multi_reduction <add>, %558, %cst_132 [1] : vector<8x8xf32> to vector<8xf32>
    %560 = vector.shape_cast %559 : vector<8xf32> to vector<8x1xf32>
    %561 = tpu.reciprocal %560 {approx = true} : vector<8x1xf32> -> vector<8x1xf32>
    %562 = vector.broadcast %561 : vector<8x1xf32> to vector<8x8xf32>
    %563 = arith.mulf %558, %562 : vector<8x8xf32>
    %564 = arith.truncf %563 : vector<8x8xf32> to vector<8x8xbf16>
    %cst_133 = arith.constant dense<0.000000e+00> : vector<8x32xf32>
    %565 = tpu.matmul %564, %506, %cst_133 {dimension_numbers = #tpu.dot_dimension_numbers<[1], [0], [0], [1], [0, 0, 1, 1], [], []>} : vector<8x8xbf16>, vector<8x32xbf16>, vector<8x32xf32> -> vector<8x32xf32>
    %566 = vector.broadcast %3 : vector<1x32xf32> to vector<8x32xf32>
    %567 = arith.mulf %565, %566 : vector<8x32xf32>
    %568 = arith.addf %547, %567 : vector<8x32xf32>
    %569 = vector.broadcast %4 : vector<1x32xf32> to vector<8x32xf32>
    %570 = arith.mulf %502, %569 : vector<8x32xf32>
    %571 = arith.truncf %570 : vector<8x32xf32> to vector<8x32xbf16>
    %cst_134 = arith.constant dense<0.000000e+00> : vector<8x8xf32>
    %572 = tpu.matmul %571, %504, %cst_134 {dimension_numbers = #tpu.dot_dimension_numbers<[1], [1], [0], [0], [0, 0, 1, 0], [], []>} : vector<8x32xbf16>, vector<8x32xbf16>, vector<8x8xf32> -> vector<8x8xf32>
    %cst_135 = arith.constant 0.353553385 : f32
    %573 = vector.broadcast %cst_135 : f32 to vector<8x8xf32>
    %574 = arith.mulf %572, %573 : vector<8x8xf32>
    %cst_136 = arith.constant dense<0xFF800000> : vector<8xf32>
    %575 = vector.multi_reduction <maximumf>, %574, %cst_136 [1] : vector<8x8xf32> to vector<8xf32>
    %576 = vector.shape_cast %575 : vector<8xf32> to vector<8x1xf32>
    %577 = vector.broadcast %576 : vector<8x1xf32> to vector<8x8xf32>
    %578 = arith.subf %574, %577 : vector<8x8xf32>
    %579 = math.exp %578 : vector<8x8xf32>
    %cst_137 = arith.constant dense<0.000000e+00> : vector<8xf32>
    %580 = vector.multi_reduction <add>, %579, %cst_137 [1] : vector<8x8xf32> to vector<8xf32>
    %581 = vector.shape_cast %580 : vector<8xf32> to vector<8x1xf32>
    %582 = tpu.reciprocal %581 {approx = true} : vector<8x1xf32> -> vector<8x1xf32>
    %583 = vector.broadcast %582 : vector<8x1xf32> to vector<8x8xf32>
    %584 = arith.mulf %579, %583 : vector<8x8xf32>
    %585 = arith.truncf %584 : vector<8x8xf32> to vector<8x8xbf16>
    %cst_138 = arith.constant dense<0.000000e+00> : vector<8x32xf32>
    %586 = tpu.matmul %585, %506, %cst_138 {dimension_numbers = #tpu.dot_dimension_numbers<[1], [0], [0], [1], [0, 0, 1, 1], [], []>} : vector<8x8xbf16>, vector<8x32xbf16>, vector<8x32xf32> -> vector<8x32xf32>
    %587 = vector.broadcast %4 : vector<1x32xf32> to vector<8x32xf32>
    %588 = arith.mulf %586, %587 : vector<8x32xf32>
    %589 = arith.addf %568, %588 : vector<8x32xf32>
    %590 = vector.extract_strided_slice %499 {offsets = [8, 0], sizes = [8, 32], strides = [1, 1]} : vector<16x32xf32> to vector<8x32xf32>
    %591 = vector.extract_strided_slice %500 {offsets = [8, 0], sizes = [8, 32], strides = [1, 1]} : vector<16x32xf32> to vector<8x32xf32>
    %592 = arith.truncf %591 : vector<8x32xf32> to vector<8x32xbf16>
    %593 = vector.extract_strided_slice %501 {offsets = [8, 0], sizes = [8, 32], strides = [1, 1]} : vector<16x32xf32> to vector<8x32xf32>
    %594 = arith.truncf %593 : vector<8x32xf32> to vector<8x32xbf16>
    %595 = vector.broadcast %1 : vector<1x32xf32> to vector<8x32xf32>
    %596 = arith.mulf %590, %595 : vector<8x32xf32>
    %597 = arith.truncf %596 : vector<8x32xf32> to vector<8x32xbf16>
    %cst_139 = arith.constant dense<0.000000e+00> : vector<8x8xf32>
    %598 = tpu.matmul %597, %592, %cst_139 {dimension_numbers = #tpu.dot_dimension_numbers<[1], [1], [0], [0], [0, 0, 1, 0], [], []>} : vector<8x32xbf16>, vector<8x32xbf16>, vector<8x8xf32> -> vector<8x8xf32>
    %cst_140 = arith.constant 0.353553385 : f32
    %599 = vector.broadcast %cst_140 : f32 to vector<8x8xf32>
    %600 = arith.mulf %598, %599 : vector<8x8xf32>
    %cst_141 = arith.constant dense<0xFF800000> : vector<8xf32>
    %601 = vector.multi_reduction <maximumf>, %600, %cst_141 [1] : vector<8x8xf32> to vector<8xf32>
    %602 = vector.shape_cast %601 : vector<8xf32> to vector<8x1xf32>
    %603 = vector.broadcast %602 : vector<8x1xf32> to vector<8x8xf32>
    %604 = arith.subf %600, %603 : vector<8x8xf32>
    %605 = math.exp %604 : vector<8x8xf32>
    %cst_142 = arith.constant dense<0.000000e+00> : vector<8xf32>
    %606 = vector.multi_reduction <add>, %605, %cst_142 [1] : vector<8x8xf32> to vector<8xf32>
    %607 = vector.shape_cast %606 : vector<8xf32> to vector<8x1xf32>
    %608 = tpu.reciprocal %607 {approx = true} : vector<8x1xf32> -> vector<8x1xf32>
    %609 = vector.broadcast %608 : vector<8x1xf32> to vector<8x8xf32>
    %610 = arith.mulf %605, %609 : vector<8x8xf32>
    %611 = arith.truncf %610 : vector<8x8xf32> to vector<8x8xbf16>
    %cst_143 = arith.constant dense<0.000000e+00> : vector<8x32xf32>
    %612 = tpu.matmul %611, %594, %cst_143 {dimension_numbers = #tpu.dot_dimension_numbers<[1], [0], [0], [1], [0, 0, 1, 1], [], []>} : vector<8x8xbf16>, vector<8x32xbf16>, vector<8x32xf32> -> vector<8x32xf32>
    %613 = vector.broadcast %1 : vector<1x32xf32> to vector<8x32xf32>
    %614 = arith.mulf %612, %613 : vector<8x32xf32>
    %615 = vector.broadcast %2 : vector<1x32xf32> to vector<8x32xf32>
    %616 = arith.mulf %590, %615 : vector<8x32xf32>
    %617 = arith.truncf %616 : vector<8x32xf32> to vector<8x32xbf16>
    %cst_144 = arith.constant dense<0.000000e+00> : vector<8x8xf32>
    %618 = tpu.matmul %617, %592, %cst_144 {dimension_numbers = #tpu.dot_dimension_numbers<[1], [1], [0], [0], [0, 0, 1, 0], [], []>} : vector<8x32xbf16>, vector<8x32xbf16>, vector<8x8xf32> -> vector<8x8xf32>
    %cst_145 = arith.constant 0.353553385 : f32
    %619 = vector.broadcast %cst_145 : f32 to vector<8x8xf32>
    %620 = arith.mulf %618, %619 : vector<8x8xf32>
    %cst_146 = arith.constant dense<0xFF800000> : vector<8xf32>
    %621 = vector.multi_reduction <maximumf>, %620, %cst_146 [1] : vector<8x8xf32> to vector<8xf32>
    %622 = vector.shape_cast %621 : vector<8xf32> to vector<8x1xf32>
    %623 = vector.broadcast %622 : vector<8x1xf32> to vector<8x8xf32>
    %624 = arith.subf %620, %623 : vector<8x8xf32>
    %625 = math.exp %624 : vector<8x8xf32>
    %cst_147 = arith.constant dense<0.000000e+00> : vector<8xf32>
    %626 = vector.multi_reduction <add>, %625, %cst_147 [1] : vector<8x8xf32> to vector<8xf32>
    %627 = vector.shape_cast %626 : vector<8xf32> to vector<8x1xf32>
    %628 = tpu.reciprocal %627 {approx = true} : vector<8x1xf32> -> vector<8x1xf32>
    %629 = vector.broadcast %628 : vector<8x1xf32> to vector<8x8xf32>
    %630 = arith.mulf %625, %629 : vector<8x8xf32>
    %631 = arith.truncf %630 : vector<8x8xf32> to vector<8x8xbf16>
    %cst_148 = arith.constant dense<0.000000e+00> : vector<8x32xf32>
    %632 = tpu.matmul %631, %594, %cst_148 {dimension_numbers = #tpu.dot_dimension_numbers<[1], [0], [0], [1], [0, 0, 1, 1], [], []>} : vector<8x8xbf16>, vector<8x32xbf16>, vector<8x32xf32> -> vector<8x32xf32>
    %633 = vector.broadcast %2 : vector<1x32xf32> to vector<8x32xf32>
    %634 = arith.mulf %632, %633 : vector<8x32xf32>
    %635 = arith.addf %614, %634 : vector<8x32xf32>
    %636 = vector.broadcast %3 : vector<1x32xf32> to vector<8x32xf32>
    %637 = arith.mulf %590, %636 : vector<8x32xf32>
    %638 = arith.truncf %637 : vector<8x32xf32> to vector<8x32xbf16>
    %cst_149 = arith.constant dense<0.000000e+00> : vector<8x8xf32>
    %639 = tpu.matmul %638, %592, %cst_149 {dimension_numbers = #tpu.dot_dimension_numbers<[1], [1], [0], [0], [0, 0, 1, 0], [], []>} : vector<8x32xbf16>, vector<8x32xbf16>, vector<8x8xf32> -> vector<8x8xf32>
    %cst_150 = arith.constant 0.353553385 : f32
    %640 = vector.broadcast %cst_150 : f32 to vector<8x8xf32>
    %641 = arith.mulf %639, %640 : vector<8x8xf32>
    %cst_151 = arith.constant dense<0xFF800000> : vector<8xf32>
    %642 = vector.multi_reduction <maximumf>, %641, %cst_151 [1] : vector<8x8xf32> to vector<8xf32>
    %643 = vector.shape_cast %642 : vector<8xf32> to vector<8x1xf32>
    %644 = vector.broadcast %643 : vector<8x1xf32> to vector<8x8xf32>
    %645 = arith.subf %641, %644 : vector<8x8xf32>
    %646 = math.exp %645 : vector<8x8xf32>
    %cst_152 = arith.constant dense<0.000000e+00> : vector<8xf32>
    %647 = vector.multi_reduction <add>, %646, %cst_152 [1] : vector<8x8xf32> to vector<8xf32>
    %648 = vector.shape_cast %647 : vector<8xf32> to vector<8x1xf32>
    %649 = tpu.reciprocal %648 {approx = true} : vector<8x1xf32> -> vector<8x1xf32>
    %650 = vector.broadcast %649 : vector<8x1xf32> to vector<8x8xf32>
    %651 = arith.mulf %646, %650 : vector<8x8xf32>
    %652 = arith.truncf %651 : vector<8x8xf32> to vector<8x8xbf16>
    %cst_153 = arith.constant dense<0.000000e+00> : vector<8x32xf32>
    %653 = tpu.matmul %652, %594, %cst_153 {dimension_numbers = #tpu.dot_dimension_numbers<[1], [0], [0], [1], [0, 0, 1, 1], [], []>} : vector<8x8xbf16>, vector<8x32xbf16>, vector<8x32xf32> -> vector<8x32xf32>
    %654 = vector.broadcast %3 : vector<1x32xf32> to vector<8x32xf32>
    %655 = arith.mulf %653, %654 : vector<8x32xf32>
    %656 = arith.addf %635, %655 : vector<8x32xf32>
    %657 = vector.broadcast %4 : vector<1x32xf32> to vector<8x32xf32>
    %658 = arith.mulf %590, %657 : vector<8x32xf32>
    %659 = arith.truncf %658 : vector<8x32xf32> to vector<8x32xbf16>
    %cst_154 = arith.constant dense<0.000000e+00> : vector<8x8xf32>
    %660 = tpu.matmul %659, %592, %cst_154 {dimension_numbers = #tpu.dot_dimension_numbers<[1], [1], [0], [0], [0, 0, 1, 0], [], []>} : vector<8x32xbf16>, vector<8x32xbf16>, vector<8x8xf32> -> vector<8x8xf32>
    %cst_155 = arith.constant 0.353553385 : f32
    %661 = vector.broadcast %cst_155 : f32 to vector<8x8xf32>
    %662 = arith.mulf %660, %661 : vector<8x8xf32>
    %cst_156 = arith.constant dense<0xFF800000> : vector<8xf32>
    %663 = vector.multi_reduction <maximumf>, %662, %cst_156 [1] : vector<8x8xf32> to vector<8xf32>
    %664 = vector.shape_cast %663 : vector<8xf32> to vector<8x1xf32>
    %665 = vector.broadcast %664 : vector<8x1xf32> to vector<8x8xf32>
    %666 = arith.subf %662, %665 : vector<8x8xf32>
    %667 = math.exp %666 : vector<8x8xf32>
    %cst_157 = arith.constant dense<0.000000e+00> : vector<8xf32>
    %668 = vector.multi_reduction <add>, %667, %cst_157 [1] : vector<8x8xf32> to vector<8xf32>
    %669 = vector.shape_cast %668 : vector<8xf32> to vector<8x1xf32>
    %670 = tpu.reciprocal %669 {approx = true} : vector<8x1xf32> -> vector<8x1xf32>
    %671 = vector.broadcast %670 : vector<8x1xf32> to vector<8x8xf32>
    %672 = arith.mulf %667, %671 : vector<8x8xf32>
    %673 = arith.truncf %672 : vector<8x8xf32> to vector<8x8xbf16>
    %cst_158 = arith.constant dense<0.000000e+00> : vector<8x32xf32>
    %674 = tpu.matmul %673, %594, %cst_158 {dimension_numbers = #tpu.dot_dimension_numbers<[1], [0], [0], [1], [0, 0, 1, 1], [], []>} : vector<8x8xbf16>, vector<8x32xbf16>, vector<8x32xf32> -> vector<8x32xf32>
    %675 = vector.broadcast %4 : vector<1x32xf32> to vector<8x32xf32>
    %676 = arith.mulf %674, %675 : vector<8x32xf32>
    %677 = arith.addf %656, %676 : vector<8x32xf32>
    %678 = tpu.concatenate %589, %677 in 0 : vector<8x32xf32>, vector<8x32xf32> -> vector<16x32xf32>
    %c288 = arith.constant 288 : index
    %c0_159 = arith.constant 0 : index
    %679 = vector.load %arg1[%c288, %c0_159] : memref<512x128xbf16, #tpu.memory_space<vmem>>, vector<32x32xbf16>
    %680 = arith.truncf %678 : vector<16x32xf32> to vector<16x32xbf16>
    %cst_160 = arith.constant dense<0.000000e+00> : vector<16x32xf32>
    %681 = tpu.matmul %680, %679, %cst_160 {dimension_numbers = #tpu.dot_dimension_numbers<[1], [0], [0], [1], [0, 0, 1, 1], [], []>} : vector<16x32xbf16>, vector<32x32xbf16>, vector<16x32xf32> -> vector<16x32xf32>
    %682 = vector.extract_strided_slice %0 {offsets = [14, 0], sizes = [1, 32], strides = [1, 1]} : vector<48x128xf32> to vector<1x32xf32>
    %683 = vector.broadcast %682 : vector<1x32xf32> to vector<16x32xf32>
    %684 = arith.addf %681, %683 : vector<16x32xf32>
    %685 = arith.addf %492, %684 : vector<16x32xf32>
    %686 = vector.extract_strided_slice %0 {offsets = [19, 0], sizes = [1, 32], strides = [1, 1]} : vector<48x128xf32> to vector<1x32xf32>
    %687 = vector.extract_strided_slice %0 {offsets = [20, 0], sizes = [1, 32], strides = [1, 1]} : vector<48x128xf32> to vector<1x32xf32>
    %cst_161 = arith.constant dense<0.000000e+00> : vector<16xf32>
    %688 = vector.multi_reduction <add>, %685, %cst_161 [1] : vector<16x32xf32> to vector<16xf32>
    %689 = vector.shape_cast %688 : vector<16xf32> to vector<16x1xf32>
    %cst_162 = arith.constant 3.200000e+01 : f32
    %690 = vector.broadcast %cst_162 : f32 to vector<16x1xf32>
    %691 = arith.divf %689, %690 : vector<16x1xf32>
    %692 = vector.broadcast %691 : vector<16x1xf32> to vector<16x32xf32>
    %693 = arith.subf %685, %692 : vector<16x32xf32>
    %694 = arith.mulf %693, %693 : vector<16x32xf32>
    %cst_163 = arith.constant dense<0.000000e+00> : vector<16xf32>
    %695 = vector.multi_reduction <add>, %694, %cst_163 [1] : vector<16x32xf32> to vector<16xf32>
    %696 = vector.shape_cast %695 : vector<16xf32> to vector<16x1xf32>
    %cst_164 = arith.constant 3.200000e+01 : f32
    %697 = vector.broadcast %cst_164 : f32 to vector<16x1xf32>
    %698 = arith.divf %696, %697 : vector<16x1xf32>
    %cst_165 = arith.constant 9.99999974E-6 : f32
    %699 = vector.broadcast %cst_165 : f32 to vector<16x1xf32>
    %700 = arith.addf %698, %699 : vector<16x1xf32>
    %701 = math.rsqrt %700 : vector<16x1xf32>
    %702 = vector.broadcast %701 : vector<16x1xf32> to vector<16x32xf32>
    %703 = arith.mulf %693, %702 : vector<16x32xf32>
    %704 = vector.broadcast %686 : vector<1x32xf32> to vector<16x32xf32>
    %705 = arith.mulf %703, %704 : vector<16x32xf32>
    %706 = vector.broadcast %687 : vector<1x32xf32> to vector<16x32xf32>
    %707 = arith.addf %705, %706 : vector<16x32xf32>
    %c320 = arith.constant 320 : index
    %c0_166 = arith.constant 0 : index
    %708 = vector.load %arg1[%c320, %c0_166] : memref<512x128xbf16, #tpu.memory_space<vmem>>, vector<32x32xbf16>
    %709 = arith.truncf %707 : vector<16x32xf32> to vector<16x32xbf16>
    %cst_167 = arith.constant dense<0.000000e+00> : vector<16x32xf32>
    %710 = tpu.matmul %709, %708, %cst_167 {dimension_numbers = #tpu.dot_dimension_numbers<[1], [0], [0], [1], [0, 0, 1, 1], [], []>} : vector<16x32xbf16>, vector<32x32xbf16>, vector<16x32xf32> -> vector<16x32xf32>
    %711 = vector.extract_strided_slice %0 {offsets = [15, 0], sizes = [1, 32], strides = [1, 1]} : vector<48x128xf32> to vector<1x32xf32>
    %712 = vector.broadcast %711 : vector<1x32xf32> to vector<16x32xf32>
    %713 = arith.addf %710, %712 : vector<16x32xf32>
    %714 = vector.extract_strided_slice %713 {offsets = [0, 0], sizes = [8, 32], strides = [1, 1]} : vector<16x32xf32> to vector<8x32xf32>
    %715 = vector.extract_strided_slice %18 {offsets = [0, 0], sizes = [16, 32], strides = [1, 1]} : vector<32x32xf32> to vector<16x32xf32>
    %716 = arith.truncf %715 : vector<16x32xf32> to vector<16x32xbf16>
    %717 = vector.extract_strided_slice %20 {offsets = [0, 0], sizes = [16, 32], strides = [1, 1]} : vector<32x32xf32> to vector<16x32xf32>
    %718 = arith.truncf %717 : vector<16x32xf32> to vector<16x32xbf16>
    %719 = vector.broadcast %1 : vector<1x32xf32> to vector<8x32xf32>
    %720 = arith.mulf %714, %719 : vector<8x32xf32>
    %721 = arith.truncf %720 : vector<8x32xf32> to vector<8x32xbf16>
    %cst_168 = arith.constant dense<0.000000e+00> : vector<8x16xf32>
    %722 = tpu.matmul %721, %716, %cst_168 {dimension_numbers = #tpu.dot_dimension_numbers<[1], [1], [0], [0], [0, 0, 1, 0], [], []>} : vector<8x32xbf16>, vector<16x32xbf16>, vector<8x16xf32> -> vector<8x16xf32>
    %cst_169 = arith.constant 0.353553385 : f32
    %723 = vector.broadcast %cst_169 : f32 to vector<8x16xf32>
    %724 = arith.mulf %722, %723 : vector<8x16xf32>
    %725 = arith.addf %724, %9 : vector<8x16xf32>
    %cst_170 = arith.constant dense<0xFF800000> : vector<8xf32>
    %726 = vector.multi_reduction <maximumf>, %725, %cst_170 [1] : vector<8x16xf32> to vector<8xf32>
    %727 = vector.shape_cast %726 : vector<8xf32> to vector<8x1xf32>
    %728 = vector.broadcast %727 : vector<8x1xf32> to vector<8x16xf32>
    %729 = arith.subf %725, %728 : vector<8x16xf32>
    %730 = math.exp %729 : vector<8x16xf32>
    %cst_171 = arith.constant dense<0.000000e+00> : vector<8xf32>
    %731 = vector.multi_reduction <add>, %730, %cst_171 [1] : vector<8x16xf32> to vector<8xf32>
    %732 = vector.shape_cast %731 : vector<8xf32> to vector<8x1xf32>
    %733 = tpu.reciprocal %732 {approx = true} : vector<8x1xf32> -> vector<8x1xf32>
    %734 = vector.broadcast %733 : vector<8x1xf32> to vector<8x16xf32>
    %735 = arith.mulf %730, %734 : vector<8x16xf32>
    %736 = arith.truncf %735 : vector<8x16xf32> to vector<8x16xbf16>
    %cst_172 = arith.constant dense<0.000000e+00> : vector<8x32xf32>
    %737 = tpu.matmul %736, %718, %cst_172 {dimension_numbers = #tpu.dot_dimension_numbers<[1], [0], [0], [1], [0, 0, 1, 1], [], []>} : vector<8x16xbf16>, vector<16x32xbf16>, vector<8x32xf32> -> vector<8x32xf32>
    %738 = vector.broadcast %1 : vector<1x32xf32> to vector<8x32xf32>
    %739 = arith.mulf %737, %738 : vector<8x32xf32>
    %740 = vector.broadcast %2 : vector<1x32xf32> to vector<8x32xf32>
    %741 = arith.mulf %714, %740 : vector<8x32xf32>
    %742 = arith.truncf %741 : vector<8x32xf32> to vector<8x32xbf16>
    %cst_173 = arith.constant dense<0.000000e+00> : vector<8x16xf32>
    %743 = tpu.matmul %742, %716, %cst_173 {dimension_numbers = #tpu.dot_dimension_numbers<[1], [1], [0], [0], [0, 0, 1, 0], [], []>} : vector<8x32xbf16>, vector<16x32xbf16>, vector<8x16xf32> -> vector<8x16xf32>
    %cst_174 = arith.constant 0.353553385 : f32
    %744 = vector.broadcast %cst_174 : f32 to vector<8x16xf32>
    %745 = arith.mulf %743, %744 : vector<8x16xf32>
    %746 = arith.addf %745, %9 : vector<8x16xf32>
    %cst_175 = arith.constant dense<0xFF800000> : vector<8xf32>
    %747 = vector.multi_reduction <maximumf>, %746, %cst_175 [1] : vector<8x16xf32> to vector<8xf32>
    %748 = vector.shape_cast %747 : vector<8xf32> to vector<8x1xf32>
    %749 = vector.broadcast %748 : vector<8x1xf32> to vector<8x16xf32>
    %750 = arith.subf %746, %749 : vector<8x16xf32>
    %751 = math.exp %750 : vector<8x16xf32>
    %cst_176 = arith.constant dense<0.000000e+00> : vector<8xf32>
    %752 = vector.multi_reduction <add>, %751, %cst_176 [1] : vector<8x16xf32> to vector<8xf32>
    %753 = vector.shape_cast %752 : vector<8xf32> to vector<8x1xf32>
    %754 = tpu.reciprocal %753 {approx = true} : vector<8x1xf32> -> vector<8x1xf32>
    %755 = vector.broadcast %754 : vector<8x1xf32> to vector<8x16xf32>
    %756 = arith.mulf %751, %755 : vector<8x16xf32>
    %757 = arith.truncf %756 : vector<8x16xf32> to vector<8x16xbf16>
    %cst_177 = arith.constant dense<0.000000e+00> : vector<8x32xf32>
    %758 = tpu.matmul %757, %718, %cst_177 {dimension_numbers = #tpu.dot_dimension_numbers<[1], [0], [0], [1], [0, 0, 1, 1], [], []>} : vector<8x16xbf16>, vector<16x32xbf16>, vector<8x32xf32> -> vector<8x32xf32>
    %759 = vector.broadcast %2 : vector<1x32xf32> to vector<8x32xf32>
    %760 = arith.mulf %758, %759 : vector<8x32xf32>
    %761 = arith.addf %739, %760 : vector<8x32xf32>
    %762 = vector.broadcast %3 : vector<1x32xf32> to vector<8x32xf32>
    %763 = arith.mulf %714, %762 : vector<8x32xf32>
    %764 = arith.truncf %763 : vector<8x32xf32> to vector<8x32xbf16>
    %cst_178 = arith.constant dense<0.000000e+00> : vector<8x16xf32>
    %765 = tpu.matmul %764, %716, %cst_178 {dimension_numbers = #tpu.dot_dimension_numbers<[1], [1], [0], [0], [0, 0, 1, 0], [], []>} : vector<8x32xbf16>, vector<16x32xbf16>, vector<8x16xf32> -> vector<8x16xf32>
    %cst_179 = arith.constant 0.353553385 : f32
    %766 = vector.broadcast %cst_179 : f32 to vector<8x16xf32>
    %767 = arith.mulf %765, %766 : vector<8x16xf32>
    %768 = arith.addf %767, %9 : vector<8x16xf32>
    %cst_180 = arith.constant dense<0xFF800000> : vector<8xf32>
    %769 = vector.multi_reduction <maximumf>, %768, %cst_180 [1] : vector<8x16xf32> to vector<8xf32>
    %770 = vector.shape_cast %769 : vector<8xf32> to vector<8x1xf32>
    %771 = vector.broadcast %770 : vector<8x1xf32> to vector<8x16xf32>
    %772 = arith.subf %768, %771 : vector<8x16xf32>
    %773 = math.exp %772 : vector<8x16xf32>
    %cst_181 = arith.constant dense<0.000000e+00> : vector<8xf32>
    %774 = vector.multi_reduction <add>, %773, %cst_181 [1] : vector<8x16xf32> to vector<8xf32>
    %775 = vector.shape_cast %774 : vector<8xf32> to vector<8x1xf32>
    %776 = tpu.reciprocal %775 {approx = true} : vector<8x1xf32> -> vector<8x1xf32>
    %777 = vector.broadcast %776 : vector<8x1xf32> to vector<8x16xf32>
    %778 = arith.mulf %773, %777 : vector<8x16xf32>
    %779 = arith.truncf %778 : vector<8x16xf32> to vector<8x16xbf16>
    %cst_182 = arith.constant dense<0.000000e+00> : vector<8x32xf32>
    %780 = tpu.matmul %779, %718, %cst_182 {dimension_numbers = #tpu.dot_dimension_numbers<[1], [0], [0], [1], [0, 0, 1, 1], [], []>} : vector<8x16xbf16>, vector<16x32xbf16>, vector<8x32xf32> -> vector<8x32xf32>
    %781 = vector.broadcast %3 : vector<1x32xf32> to vector<8x32xf32>
    %782 = arith.mulf %780, %781 : vector<8x32xf32>
    %783 = arith.addf %761, %782 : vector<8x32xf32>
    %784 = vector.broadcast %4 : vector<1x32xf32> to vector<8x32xf32>
    %785 = arith.mulf %714, %784 : vector<8x32xf32>
    %786 = arith.truncf %785 : vector<8x32xf32> to vector<8x32xbf16>
    %cst_183 = arith.constant dense<0.000000e+00> : vector<8x16xf32>
    %787 = tpu.matmul %786, %716, %cst_183 {dimension_numbers = #tpu.dot_dimension_numbers<[1], [1], [0], [0], [0, 0, 1, 0], [], []>} : vector<8x32xbf16>, vector<16x32xbf16>, vector<8x16xf32> -> vector<8x16xf32>
    %cst_184 = arith.constant 0.353553385 : f32
    %788 = vector.broadcast %cst_184 : f32 to vector<8x16xf32>
    %789 = arith.mulf %787, %788 : vector<8x16xf32>
    %790 = arith.addf %789, %9 : vector<8x16xf32>
    %cst_185 = arith.constant dense<0xFF800000> : vector<8xf32>
    %791 = vector.multi_reduction <maximumf>, %790, %cst_185 [1] : vector<8x16xf32> to vector<8xf32>
    %792 = vector.shape_cast %791 : vector<8xf32> to vector<8x1xf32>
    %793 = vector.broadcast %792 : vector<8x1xf32> to vector<8x16xf32>
    %794 = arith.subf %790, %793 : vector<8x16xf32>
    %795 = math.exp %794 : vector<8x16xf32>
    %cst_186 = arith.constant dense<0.000000e+00> : vector<8xf32>
    %796 = vector.multi_reduction <add>, %795, %cst_186 [1] : vector<8x16xf32> to vector<8xf32>
    %797 = vector.shape_cast %796 : vector<8xf32> to vector<8x1xf32>
    %798 = tpu.reciprocal %797 {approx = true} : vector<8x1xf32> -> vector<8x1xf32>
    %799 = vector.broadcast %798 : vector<8x1xf32> to vector<8x16xf32>
    %800 = arith.mulf %795, %799 : vector<8x16xf32>
    %801 = arith.truncf %800 : vector<8x16xf32> to vector<8x16xbf16>
    %cst_187 = arith.constant dense<0.000000e+00> : vector<8x32xf32>
    %802 = tpu.matmul %801, %718, %cst_187 {dimension_numbers = #tpu.dot_dimension_numbers<[1], [0], [0], [1], [0, 0, 1, 1], [], []>} : vector<8x16xbf16>, vector<16x32xbf16>, vector<8x32xf32> -> vector<8x32xf32>
    %803 = vector.broadcast %4 : vector<1x32xf32> to vector<8x32xf32>
    %804 = arith.mulf %802, %803 : vector<8x32xf32>
    %805 = arith.addf %783, %804 : vector<8x32xf32>
    %806 = vector.extract_strided_slice %713 {offsets = [8, 0], sizes = [8, 32], strides = [1, 1]} : vector<16x32xf32> to vector<8x32xf32>
    %807 = vector.extract_strided_slice %18 {offsets = [16, 0], sizes = [16, 32], strides = [1, 1]} : vector<32x32xf32> to vector<16x32xf32>
    %808 = arith.truncf %807 : vector<16x32xf32> to vector<16x32xbf16>
    %809 = vector.extract_strided_slice %20 {offsets = [16, 0], sizes = [16, 32], strides = [1, 1]} : vector<32x32xf32> to vector<16x32xf32>
    %810 = arith.truncf %809 : vector<16x32xf32> to vector<16x32xbf16>
    %811 = vector.broadcast %1 : vector<1x32xf32> to vector<8x32xf32>
    %812 = arith.mulf %806, %811 : vector<8x32xf32>
    %813 = arith.truncf %812 : vector<8x32xf32> to vector<8x32xbf16>
    %cst_188 = arith.constant dense<0.000000e+00> : vector<8x16xf32>
    %814 = tpu.matmul %813, %808, %cst_188 {dimension_numbers = #tpu.dot_dimension_numbers<[1], [1], [0], [0], [0, 0, 1, 0], [], []>} : vector<8x32xbf16>, vector<16x32xbf16>, vector<8x16xf32> -> vector<8x16xf32>
    %cst_189 = arith.constant 0.353553385 : f32
    %815 = vector.broadcast %cst_189 : f32 to vector<8x16xf32>
    %816 = arith.mulf %814, %815 : vector<8x16xf32>
    %817 = arith.addf %816, %10 : vector<8x16xf32>
    %cst_190 = arith.constant dense<0xFF800000> : vector<8xf32>
    %818 = vector.multi_reduction <maximumf>, %817, %cst_190 [1] : vector<8x16xf32> to vector<8xf32>
    %819 = vector.shape_cast %818 : vector<8xf32> to vector<8x1xf32>
    %820 = vector.broadcast %819 : vector<8x1xf32> to vector<8x16xf32>
    %821 = arith.subf %817, %820 : vector<8x16xf32>
    %822 = math.exp %821 : vector<8x16xf32>
    %cst_191 = arith.constant dense<0.000000e+00> : vector<8xf32>
    %823 = vector.multi_reduction <add>, %822, %cst_191 [1] : vector<8x16xf32> to vector<8xf32>
    %824 = vector.shape_cast %823 : vector<8xf32> to vector<8x1xf32>
    %825 = tpu.reciprocal %824 {approx = true} : vector<8x1xf32> -> vector<8x1xf32>
    %826 = vector.broadcast %825 : vector<8x1xf32> to vector<8x16xf32>
    %827 = arith.mulf %822, %826 : vector<8x16xf32>
    %828 = arith.truncf %827 : vector<8x16xf32> to vector<8x16xbf16>
    %cst_192 = arith.constant dense<0.000000e+00> : vector<8x32xf32>
    %829 = tpu.matmul %828, %810, %cst_192 {dimension_numbers = #tpu.dot_dimension_numbers<[1], [0], [0], [1], [0, 0, 1, 1], [], []>} : vector<8x16xbf16>, vector<16x32xbf16>, vector<8x32xf32> -> vector<8x32xf32>
    %830 = vector.broadcast %1 : vector<1x32xf32> to vector<8x32xf32>
    %831 = arith.mulf %829, %830 : vector<8x32xf32>
    %832 = vector.broadcast %2 : vector<1x32xf32> to vector<8x32xf32>
    %833 = arith.mulf %806, %832 : vector<8x32xf32>
    %834 = arith.truncf %833 : vector<8x32xf32> to vector<8x32xbf16>
    %cst_193 = arith.constant dense<0.000000e+00> : vector<8x16xf32>
    %835 = tpu.matmul %834, %808, %cst_193 {dimension_numbers = #tpu.dot_dimension_numbers<[1], [1], [0], [0], [0, 0, 1, 0], [], []>} : vector<8x32xbf16>, vector<16x32xbf16>, vector<8x16xf32> -> vector<8x16xf32>
    %cst_194 = arith.constant 0.353553385 : f32
    %836 = vector.broadcast %cst_194 : f32 to vector<8x16xf32>
    %837 = arith.mulf %835, %836 : vector<8x16xf32>
    %838 = arith.addf %837, %10 : vector<8x16xf32>
    %cst_195 = arith.constant dense<0xFF800000> : vector<8xf32>
    %839 = vector.multi_reduction <maximumf>, %838, %cst_195 [1] : vector<8x16xf32> to vector<8xf32>
    %840 = vector.shape_cast %839 : vector<8xf32> to vector<8x1xf32>
    %841 = vector.broadcast %840 : vector<8x1xf32> to vector<8x16xf32>
    %842 = arith.subf %838, %841 : vector<8x16xf32>
    %843 = math.exp %842 : vector<8x16xf32>
    %cst_196 = arith.constant dense<0.000000e+00> : vector<8xf32>
    %844 = vector.multi_reduction <add>, %843, %cst_196 [1] : vector<8x16xf32> to vector<8xf32>
    %845 = vector.shape_cast %844 : vector<8xf32> to vector<8x1xf32>
    %846 = tpu.reciprocal %845 {approx = true} : vector<8x1xf32> -> vector<8x1xf32>
    %847 = vector.broadcast %846 : vector<8x1xf32> to vector<8x16xf32>
    %848 = arith.mulf %843, %847 : vector<8x16xf32>
    %849 = arith.truncf %848 : vector<8x16xf32> to vector<8x16xbf16>
    %cst_197 = arith.constant dense<0.000000e+00> : vector<8x32xf32>
    %850 = tpu.matmul %849, %810, %cst_197 {dimension_numbers = #tpu.dot_dimension_numbers<[1], [0], [0], [1], [0, 0, 1, 1], [], []>} : vector<8x16xbf16>, vector<16x32xbf16>, vector<8x32xf32> -> vector<8x32xf32>
    %851 = vector.broadcast %2 : vector<1x32xf32> to vector<8x32xf32>
    %852 = arith.mulf %850, %851 : vector<8x32xf32>
    %853 = arith.addf %831, %852 : vector<8x32xf32>
    %854 = vector.broadcast %3 : vector<1x32xf32> to vector<8x32xf32>
    %855 = arith.mulf %806, %854 : vector<8x32xf32>
    %856 = arith.truncf %855 : vector<8x32xf32> to vector<8x32xbf16>
    %cst_198 = arith.constant dense<0.000000e+00> : vector<8x16xf32>
    %857 = tpu.matmul %856, %808, %cst_198 {dimension_numbers = #tpu.dot_dimension_numbers<[1], [1], [0], [0], [0, 0, 1, 0], [], []>} : vector<8x32xbf16>, vector<16x32xbf16>, vector<8x16xf32> -> vector<8x16xf32>
    %cst_199 = arith.constant 0.353553385 : f32
    %858 = vector.broadcast %cst_199 : f32 to vector<8x16xf32>
    %859 = arith.mulf %857, %858 : vector<8x16xf32>
    %860 = arith.addf %859, %10 : vector<8x16xf32>
    %cst_200 = arith.constant dense<0xFF800000> : vector<8xf32>
    %861 = vector.multi_reduction <maximumf>, %860, %cst_200 [1] : vector<8x16xf32> to vector<8xf32>
    %862 = vector.shape_cast %861 : vector<8xf32> to vector<8x1xf32>
    %863 = vector.broadcast %862 : vector<8x1xf32> to vector<8x16xf32>
    %864 = arith.subf %860, %863 : vector<8x16xf32>
    %865 = math.exp %864 : vector<8x16xf32>
    %cst_201 = arith.constant dense<0.000000e+00> : vector<8xf32>
    %866 = vector.multi_reduction <add>, %865, %cst_201 [1] : vector<8x16xf32> to vector<8xf32>
    %867 = vector.shape_cast %866 : vector<8xf32> to vector<8x1xf32>
    %868 = tpu.reciprocal %867 {approx = true} : vector<8x1xf32> -> vector<8x1xf32>
    %869 = vector.broadcast %868 : vector<8x1xf32> to vector<8x16xf32>
    %870 = arith.mulf %865, %869 : vector<8x16xf32>
    %871 = arith.truncf %870 : vector<8x16xf32> to vector<8x16xbf16>
    %cst_202 = arith.constant dense<0.000000e+00> : vector<8x32xf32>
    %872 = tpu.matmul %871, %810, %cst_202 {dimension_numbers = #tpu.dot_dimension_numbers<[1], [0], [0], [1], [0, 0, 1, 1], [], []>} : vector<8x16xbf16>, vector<16x32xbf16>, vector<8x32xf32> -> vector<8x32xf32>
    %873 = vector.broadcast %3 : vector<1x32xf32> to vector<8x32xf32>
    %874 = arith.mulf %872, %873 : vector<8x32xf32>
    %875 = arith.addf %853, %874 : vector<8x32xf32>
    %876 = vector.broadcast %4 : vector<1x32xf32> to vector<8x32xf32>
    %877 = arith.mulf %806, %876 : vector<8x32xf32>
    %878 = arith.truncf %877 : vector<8x32xf32> to vector<8x32xbf16>
    %cst_203 = arith.constant dense<0.000000e+00> : vector<8x16xf32>
    %879 = tpu.matmul %878, %808, %cst_203 {dimension_numbers = #tpu.dot_dimension_numbers<[1], [1], [0], [0], [0, 0, 1, 0], [], []>} : vector<8x32xbf16>, vector<16x32xbf16>, vector<8x16xf32> -> vector<8x16xf32>
    %cst_204 = arith.constant 0.353553385 : f32
    %880 = vector.broadcast %cst_204 : f32 to vector<8x16xf32>
    %881 = arith.mulf %879, %880 : vector<8x16xf32>
    %882 = arith.addf %881, %10 : vector<8x16xf32>
    %cst_205 = arith.constant dense<0xFF800000> : vector<8xf32>
    %883 = vector.multi_reduction <maximumf>, %882, %cst_205 [1] : vector<8x16xf32> to vector<8xf32>
    %884 = vector.shape_cast %883 : vector<8xf32> to vector<8x1xf32>
    %885 = vector.broadcast %884 : vector<8x1xf32> to vector<8x16xf32>
    %886 = arith.subf %882, %885 : vector<8x16xf32>
    %887 = math.exp %886 : vector<8x16xf32>
    %cst_206 = arith.constant dense<0.000000e+00> : vector<8xf32>
    %888 = vector.multi_reduction <add>, %887, %cst_206 [1] : vector<8x16xf32> to vector<8xf32>
    %889 = vector.shape_cast %888 : vector<8xf32> to vector<8x1xf32>
    %890 = tpu.reciprocal %889 {approx = true} : vector<8x1xf32> -> vector<8x1xf32>
    %891 = vector.broadcast %890 : vector<8x1xf32> to vector<8x16xf32>
    %892 = arith.mulf %887, %891 : vector<8x16xf32>
    %893 = arith.truncf %892 : vector<8x16xf32> to vector<8x16xbf16>
    %cst_207 = arith.constant dense<0.000000e+00> : vector<8x32xf32>
    %894 = tpu.matmul %893, %810, %cst_207 {dimension_numbers = #tpu.dot_dimension_numbers<[1], [0], [0], [1], [0, 0, 1, 1], [], []>} : vector<8x16xbf16>, vector<16x32xbf16>, vector<8x32xf32> -> vector<8x32xf32>
    %895 = vector.broadcast %4 : vector<1x32xf32> to vector<8x32xf32>
    %896 = arith.mulf %894, %895 : vector<8x32xf32>
    %897 = arith.addf %875, %896 : vector<8x32xf32>
    %898 = tpu.concatenate %805, %897 in 0 : vector<8x32xf32>, vector<8x32xf32> -> vector<16x32xf32>
    %c352 = arith.constant 352 : index
    %c0_208 = arith.constant 0 : index
    %899 = vector.load %arg1[%c352, %c0_208] : memref<512x128xbf16, #tpu.memory_space<vmem>>, vector<32x32xbf16>
    %900 = arith.truncf %898 : vector<16x32xf32> to vector<16x32xbf16>
    %cst_209 = arith.constant dense<0.000000e+00> : vector<16x32xf32>
    %901 = tpu.matmul %900, %899, %cst_209 {dimension_numbers = #tpu.dot_dimension_numbers<[1], [0], [0], [1], [0, 0, 1, 1], [], []>} : vector<16x32xbf16>, vector<32x32xbf16>, vector<16x32xf32> -> vector<16x32xf32>
    %902 = vector.extract_strided_slice %0 {offsets = [16, 0], sizes = [1, 32], strides = [1, 1]} : vector<48x128xf32> to vector<1x32xf32>
    %903 = vector.broadcast %902 : vector<1x32xf32> to vector<16x32xf32>
    %904 = arith.addf %901, %903 : vector<16x32xf32>
    %905 = arith.addf %707, %904 : vector<16x32xf32>
    %906 = vector.extract_strided_slice %0 {offsets = [21, 0], sizes = [1, 32], strides = [1, 1]} : vector<48x128xf32> to vector<1x32xf32>
    %907 = vector.extract_strided_slice %0 {offsets = [22, 0], sizes = [1, 32], strides = [1, 1]} : vector<48x128xf32> to vector<1x32xf32>
    %cst_210 = arith.constant dense<0.000000e+00> : vector<16xf32>
    %908 = vector.multi_reduction <add>, %905, %cst_210 [1] : vector<16x32xf32> to vector<16xf32>
    %909 = vector.shape_cast %908 : vector<16xf32> to vector<16x1xf32>
    %cst_211 = arith.constant 3.200000e+01 : f32
    %910 = vector.broadcast %cst_211 : f32 to vector<16x1xf32>
    %911 = arith.divf %909, %910 : vector<16x1xf32>
    %912 = vector.broadcast %911 : vector<16x1xf32> to vector<16x32xf32>
    %913 = arith.subf %905, %912 : vector<16x32xf32>
    %914 = arith.mulf %913, %913 : vector<16x32xf32>
    %cst_212 = arith.constant dense<0.000000e+00> : vector<16xf32>
    %915 = vector.multi_reduction <add>, %914, %cst_212 [1] : vector<16x32xf32> to vector<16xf32>
    %916 = vector.shape_cast %915 : vector<16xf32> to vector<16x1xf32>
    %cst_213 = arith.constant 3.200000e+01 : f32
    %917 = vector.broadcast %cst_213 : f32 to vector<16x1xf32>
    %918 = arith.divf %916, %917 : vector<16x1xf32>
    %cst_214 = arith.constant 9.99999974E-6 : f32
    %919 = vector.broadcast %cst_214 : f32 to vector<16x1xf32>
    %920 = arith.addf %918, %919 : vector<16x1xf32>
    %921 = math.rsqrt %920 : vector<16x1xf32>
    %922 = vector.broadcast %921 : vector<16x1xf32> to vector<16x32xf32>
    %923 = arith.mulf %913, %922 : vector<16x32xf32>
    %924 = vector.broadcast %906 : vector<1x32xf32> to vector<16x32xf32>
    %925 = arith.mulf %923, %924 : vector<16x32xf32>
    %926 = vector.broadcast %907 : vector<1x32xf32> to vector<16x32xf32>
    %927 = arith.addf %925, %926 : vector<16x32xf32>
    %c384 = arith.constant 384 : index
    %c0_215 = arith.constant 0 : index
    %928 = vector.load %arg1[%c384, %c0_215] : memref<512x128xbf16, #tpu.memory_space<vmem>>, vector<32x64xbf16>
    %929 = arith.truncf %927 : vector<16x32xf32> to vector<16x32xbf16>
    %cst_216 = arith.constant dense<0.000000e+00> : vector<16x64xf32>
    %930 = tpu.matmul %929, %928, %cst_216 {dimension_numbers = #tpu.dot_dimension_numbers<[1], [0], [0], [1], [0, 0, 1, 1], [], []>} : vector<16x32xbf16>, vector<32x64xbf16>, vector<16x64xf32> -> vector<16x64xf32>
    %931 = vector.extract_strided_slice %0 {offsets = [17, 0], sizes = [1, 64], strides = [1, 1]} : vector<48x128xf32> to vector<1x64xf32>
    %932 = vector.broadcast %931 : vector<1x64xf32> to vector<16x64xf32>
    %933 = arith.addf %930, %932 : vector<16x64xf32>
    %cst_217 = arith.constant 0.000000e+00 : f32
    %934 = vector.broadcast %cst_217 : f32 to vector<16x64xf32>
    %935 = arith.maximumf %933, %934 : vector<16x64xf32>
    %c416 = arith.constant 416 : index
    %c0_218 = arith.constant 0 : index
    %936 = vector.load %arg1[%c416, %c0_218] : memref<512x128xbf16, #tpu.memory_space<vmem>>, vector<64x32xbf16>
    %937 = arith.truncf %935 : vector<16x64xf32> to vector<16x64xbf16>
    %cst_219 = arith.constant dense<0.000000e+00> : vector<16x32xf32>
    %938 = tpu.matmul %937, %936, %cst_219 {dimension_numbers = #tpu.dot_dimension_numbers<[1], [0], [0], [1], [0, 0, 1, 1], [], []>} : vector<16x64xbf16>, vector<64x32xbf16>, vector<16x32xf32> -> vector<16x32xf32>
    %939 = vector.extract_strided_slice %0 {offsets = [18, 0], sizes = [1, 32], strides = [1, 1]} : vector<48x128xf32> to vector<1x32xf32>
    %940 = vector.broadcast %939 : vector<1x32xf32> to vector<16x32xf32>
    %941 = arith.addf %938, %940 : vector<16x32xf32>
    %942 = arith.addf %927, %941 : vector<16x32xf32>
    %943 = vector.extract_strided_slice %0 {offsets = [23, 0], sizes = [1, 32], strides = [1, 1]} : vector<48x128xf32> to vector<1x32xf32>
    %944 = vector.extract_strided_slice %0 {offsets = [24, 0], sizes = [1, 32], strides = [1, 1]} : vector<48x128xf32> to vector<1x32xf32>
    %cst_220 = arith.constant dense<0.000000e+00> : vector<16xf32>
    %945 = vector.multi_reduction <add>, %942, %cst_220 [1] : vector<16x32xf32> to vector<16xf32>
    %946 = vector.shape_cast %945 : vector<16xf32> to vector<16x1xf32>
    %cst_221 = arith.constant 3.200000e+01 : f32
    %947 = vector.broadcast %cst_221 : f32 to vector<16x1xf32>
    %948 = arith.divf %946, %947 : vector<16x1xf32>
    %949 = vector.broadcast %948 : vector<16x1xf32> to vector<16x32xf32>
    %950 = arith.subf %942, %949 : vector<16x32xf32>
    %951 = arith.mulf %950, %950 : vector<16x32xf32>
    %cst_222 = arith.constant dense<0.000000e+00> : vector<16xf32>
    %952 = vector.multi_reduction <add>, %951, %cst_222 [1] : vector<16x32xf32> to vector<16xf32>
    %953 = vector.shape_cast %952 : vector<16xf32> to vector<16x1xf32>
    %cst_223 = arith.constant 3.200000e+01 : f32
    %954 = vector.broadcast %cst_223 : f32 to vector<16x1xf32>
    %955 = arith.divf %953, %954 : vector<16x1xf32>
    %cst_224 = arith.constant 9.99999974E-6 : f32
    %956 = vector.broadcast %cst_224 : f32 to vector<16x1xf32>
    %957 = arith.addf %955, %956 : vector<16x1xf32>
    %958 = math.rsqrt %957 : vector<16x1xf32>
    %959 = vector.broadcast %958 : vector<16x1xf32> to vector<16x32xf32>
    %960 = arith.mulf %950, %959 : vector<16x32xf32>
    %961 = vector.broadcast %943 : vector<1x32xf32> to vector<16x32xf32>
    %962 = arith.mulf %960, %961 : vector<16x32xf32>
    %963 = vector.broadcast %944 : vector<1x32xf32> to vector<16x32xf32>
    %964 = arith.addf %962, %963 : vector<16x32xf32>
    %c480 = arith.constant 480 : index
    %c0_225 = arith.constant 0 : index
    %965 = vector.load %arg1[%c480, %c0_225] : memref<512x128xbf16, #tpu.memory_space<vmem>>, vector<32x128xbf16>
    %966 = arith.truncf %964 : vector<16x32xf32> to vector<16x32xbf16>
    %cst_226 = arith.constant dense<0.000000e+00> : vector<16x128xf32>
    %967 = tpu.matmul %966, %965, %cst_226 {dimension_numbers = #tpu.dot_dimension_numbers<[1], [0], [0], [1], [0, 0, 1, 1], [], []>} : vector<16x32xbf16>, vector<32x128xbf16>, vector<16x128xf32> -> vector<16x128xf32>
    %968 = vector.extract_strided_slice %0 {offsets = [25, 0], sizes = [1, 128], strides = [1, 1]} : vector<48x128xf32> to vector<1x128xf32>
    %969 = vector.broadcast %968 : vector<1x128xf32> to vector<16x128xf32>
    %970 = arith.addf %967, %969 : vector<16x128xf32>
    %c0_227 = arith.constant 0 : index
    %c0_228 = arith.constant 0 : index
    %971 = vector.load %arg3[%c0_227, %c0_228] : memref<16x128xf32, #tpu.memory_space<vmem>>, vector<16x128xf32>
    tpu.vector_store %arg3[%c0_227, %c0_228], %970 {strides = array<i32>} : memref<16x128xf32, #tpu.memory_space<vmem>>, vector<16x128xf32>,
    return
  }
}

</mosaic_0001>

<llo_original>
// kernel: _forward_core.1
$region0: #{_forward_core.1}
  #allocation0 [shape = 'u32[]', space=smem, size = 0x4, offset = 0x4, fixed_abs, tag = 'smem constant byte address 0x4 - core index']
  #allocation1 [shape = 'u32[72,128]{1,0:T(1,128)}', space=vmem, size = 0x9000, scoped, tag = 'internal scratch']
  %s0 = inlined_call_operand.vmem [shape: f32[64,32], index: 0, kind: input, shape index: {}]
  %s1 = inlined_call_operand.vmem [shape: bf16[512,128], index: 1, kind: input, shape index: {}]
  %s2 = inlined_call_operand.hbm [shape: f32[48,128], index: 2, kind: input, shape index: {}]
  %s3 = inlined_call_operand.vmem [shape: f32[16,128], index: 3, kind: output, shape index: {}]
  %s4 = sld [smem:[#allocation0]]
  $region26: #{_forward_core.1} parent=0
    _
  %s6 = ssub.s32 1, %s4
  %s7 = scalar_select 0, %s6, %s4
  $region1: #{_forward_core.1} parent=0
    #allocation2 [shape = 'u8[24576]{0}', space=vmem, size = 0x6000, scoped, tag = 'input window, operand 2, single buffered']
    #allocation3 [shape = 's32[1]{0}', space=sflag, size = 0x4, scoped, tag = 'scoped memory for _forward_core.1']
    %8 = vsyncpa [#allocation3], 0
    // Predicated region
    $region2: #{_forward_core.1} parent=1 // pred_check
      _
    $region3: #{_forward_core.1} parent=1 // pred_check_branch
      %10 = sbr.rel (0) target = $region5
    $region4: #{_forward_core.1} parent=1 // pred_region
      _
    $region5: #{_forward_core.1} parent=1 // pred_fallthru
      _
    // Predicated region
    $region6: #{_forward_core.1} parent=1 // pred_check
      _
    $region7: #{_forward_core.1} parent=1 // pred_check_branch
      %12 = sbr.rel (0) target = $region9
    $region8: #{_forward_core.1} parent=1 // pred_region
      _
    $region9: #{_forward_core.1} parent=1 // pred_fallthru
      _
    // Predicated region
    $region10: #{_forward_core.1} parent=1 // pred_check
      _
    $region11: #{_forward_core.1} parent=1 // pred_check_branch
      %14 = sbr.rel (0) target = $region13
    $region12: #{_forward_core.1} parent=1 // pred_region
      %16 = vsyncadd [#allocation3], 0
      %s17 = sshll.u32 %s2, 4
      %s18 = int_to_ptr.hbm [resolvable:$true] %s17
      %s19 = sshll.u32 [#allocation2], 4
      %s20 = int_to_ptr.vmem [resolvable:$true] %s19
      %25 = dma.hbm_to_vmem [thread:$0]  %s18, 768, %s20, [#allocation3], 128, 128, 8
    $region13: #{_forward_core.1} parent=1 // pred_fallthru
      _
    // Predicated region
    $region14: #{_forward_core.1} parent=1 // pred_check
      _
    $region15: #{_forward_core.1} parent=1 // pred_check_branch
      %27 = sbr.rel (0) target = $region17
    $region16: #{_forward_core.1} parent=1 // pred_region
      %29 = dma.done [#allocation3], 768
    $region17: #{_forward_core.1} parent=1 // pred_fallthru
      _
    %v31 = vld [vmem:[#allocation2] sm:$0xff]
    %v32 = vld [vmem:[#allocation2 + $0x8] sm:$0xff]
    %v33 = vld [vmem:[#allocation2 + $0x10] sm:$0xff]
    %v34 = vld [vmem:[#allocation2 + $0x18] sm:$0xff]
    %v35 = vld [vmem:[#allocation2 + $0x20] sm:$0xff]
    %v36 = vld [vmem:[#allocation2 + $0x28] sm:$0xff]
    %v37 = vld [vmem:[%s0] sm:$0xff]
    %v38 = vld [vmem:[%s0 + $0x8] sm:$0xff]
    %v39 = vld [vmem:[%s0 + $0x10] sm:$0xff]
    %v40 = vld [vmem:[%s0 + $0x18] sm:$0xff]
    %v41 = vld [vmem:[%s0 + $0x20] sm:$0xff]
    %v42 = vld [vmem:[%s0 + $0x28] sm:$0xff]
    %v43 = vadd.f32 %v41, %v35
    %v44 = vadd.f32 %v42, %v36
    %v45 = vld [vmem:[%s0 + $0x30] sm:$0xff]
    %v46 = vld [vmem:[%s0 + $0x38] sm:$0xff]
    %v47 = vld [vmem:[%s1] sm:$0xf]
    %v48 = vld [vmem:[%s1 + $0x4] sm:$0xf]
    %v49 = vld [vmem:[%s1 + $0x8] sm:$0xf]
    %v50 = vld [vmem:[%s1 + $0xc] sm:$0xf]
    %v51 = vpack.c.bf16 %v38, %v37
    %v52 = vpack.c.bf16 %v40, %v39
    %v53 = vperm.slane %v31, 0
    %v58 = vunpack.c.l.b16 %v47
    %v59 = vunpack.c.l.b16 %v48
    %v60 = vunpack.c.l.b16 %v49
    %v61 = vunpack.c.l.b16 %v50
    %v62 = vpack.c.b16 %v59, %v58
    %v63 = vpack.c.b16 %v61, %v60
    %vm66 = vcmask 261120
    %v68 = vsel %vm66, %v51, 0
    %v71 = vsel %vm66, %v52, 0
    %73 = vmatpush.bf16.msra.mxu0 0
    %74 = vmatpush.bf16.msra.mxu0 0
    %75 = vmatpush.bf16.msra.mxu0 0
    %76 = vmatpush.bf16.msra.mxu0 0
    %77 = vmatpush.bf16.msra.mxu0 0
    %78 = vmatpush.bf16.msra.mxu0 0
    %79 = vmatpush.bf16.msra.mxu0 %v63
    %80 = vmatpush.bf16.msra.mxu0 %v62
    %81 = vmatmul.bf16.gmra.mxu0 %v68
    %v82 = vpop.f32.mrf.mxu0
    %v83 = vadd.f32 %v53, %v82
    %v84 = vpop.f32.mrf.mxu0
    %v85 = vadd.f32 %v53, %v84
    %86 = vmatmul.bf16.gmra.mxu0 %v71
    %v87 = vpop.f32.mrf.mxu0
    %v88 = vadd.f32 %v53, %v87
    %v89 = vpop.f32.mrf.mxu0
    %v90 = vadd.f32 %v53, %v89
    %91 = vdwg.mxu0
    %v92 = vld [vmem:[%s1 + $0x10] sm:$0xf]
    %v93 = vld [vmem:[%s1 + $0x14] sm:$0xf]
    %v94 = vld [vmem:[%s1 + $0x18] sm:$0xf]
    %v95 = vld [vmem:[%s1 + $0x1c] sm:$0xf]
    %v96 = vpack.c.bf16 %v44, %v43
    %v97 = vperm.slane %v31, 1
    %v102 = vunpack.c.l.b16 %v92
    %v103 = vunpack.c.l.b16 %v93
    %v104 = vunpack.c.l.b16 %v94
    %v105 = vunpack.c.l.b16 %v95
    %v106 = vpack.c.b16 %v103, %v102
    %v107 = vpack.c.b16 %v105, %v104
    %v111 = vsel %vm66, %v96, 0
    %113 = vmatpush.bf16.msra.mxu0 0
    %114 = vmatpush.bf16.msra.mxu0 0
    %115 = vmatpush.bf16.msra.mxu0 0
    %116 = vmatpush.bf16.msra.mxu0 0
    %117 = vmatpush.bf16.msra.mxu0 0
    %118 = vmatpush.bf16.msra.mxu0 0
    %119 = vmatpush.bf16.msra.mxu0 %v107
    %120 = vmatpush.bf16.msra.mxu0 %v106
    %121 = vmatmul.bf16.gmra.mxu0 %v111
    %v122 = vpop.f32.mrf.mxu0
    %v123 = vadd.f32 %v97, %v122
    %v124 = vpop.f32.mrf.mxu0
    %v125 = vadd.f32 %v97, %v124
    %126 = vdwg.mxu0
    %v127 = vpack.c.bf16 %v123, %v123
    %v128 = vperm.slane %v34, 2
    %v129 = vmul.f32 %v123, %v128
    %v130 = vpack.c.bf16 %v129, %v129
    %132 = vrot.lane.b32.xlu0 %v127, 96
    %v133 = vpop.permute.xlu0 %132
    %v135 = vsel %vm66, %v130, 0
    %v138 = vsel %vm66, %v133, 0
    %140 = vmatpush.bf16.xpose.msra.mxu0 0
    %141 = vmatpush.bf16.xpose.msra.mxu0 0
    %142 = vmatpush.bf16.xpose.msra.mxu0 0
    %143 = vmatpush.bf16.xpose.msra.mxu0 0
    %144 = vmatpush.bf16.xpose.msra.mxu0 0
    %145 = vmatpush.bf16.xpose.msra.mxu0 0
    %146 = vmatpush.bf16.xpose.msra.mxu0 0
    %147 = vmatpush.bf16.xpose.msra.mxu0 %v138
    %148 = vmatmul.bf16.gmra.mxu0 %v135
    %v149 = vpop.f32.mrf.mxu0
    %v150 = vadd.f32 0.0, %v149
    %v151 = vpop.f32.mrf.mxu0
    %152 = vdwg.mxu0
    %v153 = vmul.f32 %v150, 0.35355338
    %vm154 = vcmask 64512
    %v155 = vsel %vm154, %v153, -inf
    %156 = vmax.xlane.f32.xlu0 %v155
    %v157 = vpop.xlane.xlu0 %156
    %v158 = vsub.f32 %v153, %v157
    %v159 = vmul.f32 %v158, 1.442695
    %v160 = vpow.pop %v159
    %v161 = vsel %vm154, %v160, 0.0
    %162 = vadd.xlane.f32.xlu0 %v161
    %v163 = vpop.xlane.xlu0 %162
    %v164 = vrcp.pop %v163
    %v165 = vmul.f32 %v160, %v164
    %v166 = vpack.c.bf16 %v165, %v165
    %167 = vrot.lane.b32.xlu0 %v127, 64
    %v168 = vpop.permute.xlu0 %167
    %v170 = vsel %vm154, %v166, 0
    %vm172 = vcmask 1043456
    %v174 = vsel %vm172, %v168, 0
    %176 = vmatpush.bf16.msra.mxu0 0
    %177 = vmatpush.bf16.msra.mxu0 0
    %178 = vmatpush.bf16.msra.mxu0 0
    %179 = vmatpush.bf16.msra.mxu0 0
    %180 = vmatpush.bf16.msra.mxu0 0
    %181 = vmatpush.bf16.msra.mxu0 0
    %182 = vmatpush.bf16.msra.mxu0 0
    %183 = vmatpush.bf16.msra.mxu0 %v174
    %184 = vmatmul.bf16.gmra.mxu0 %v170
    %v185 = vpop.f32.mrf.mxu0
    %v186 = vadd.f32 0.0, %v185
    %v187 = vpop.f32.mrf.mxu0
    %188 = vdwg.mxu0
    %v189 = vmul.f32 %v186, %v128
    %v190 = vperm.slane %v34, 3
    %v191 = vmul.f32 %v123, %v190
    %v192 = vpack.c.bf16 %v191, %v191
    %v194 = vsel %vm66, %v192, 0
    %196 = vmatpush.bf16.xpose.msra.mxu0 0
    %197 = vmatpush.bf16.xpose.msra.mxu0 0
    %198 = vmatpush.bf16.xpose.msra.mxu0 0
    %199 = vmatpush.bf16.xpose.msra.mxu0 0
    %200 = vmatpush.bf16.xpose.msra.mxu0 0
    %201 = vmatpush.bf16.xpose.msra.mxu0 0
    %202 = vmatpush.bf16.xpose.msra.mxu0 0
    %203 = vmatpush.bf16.xpose.msra.mxu0 %v138
    %204 = vmatmul.bf16.gmra.mxu0 %v194
    %v205 = vpop.f32.mrf.mxu0
    %v206 = vadd.f32 0.0, %v205
    %v207 = vpop.f32.mrf.mxu0
    %208 = vdwg.mxu0
    %v209 = vmul.f32 %v206, 0.35355338
    %v210 = vsel %vm154, %v209, -inf
    %211 = vmax.xlane.f32.xlu0 %v210
    %v212 = vpop.xlane.xlu0 %211
    %v213 = vsub.f32 %v209, %v212
    %v214 = vmul.f32 %v213, 1.442695
    %v215 = vpow.pop %v214
    %v216 = vsel %vm154, %v215, 0.0
    %217 = vadd.xlane.f32.xlu0 %v216
    %v218 = vpop.xlane.xlu0 %217
    %v219 = vrcp.pop %v218
    %v220 = vmul.f32 %v215, %v219
    %v221 = vpack.c.bf16 %v220, %v220
    %v223 = vsel %vm154, %v221, 0
    %225 = vmatpush.bf16.msra.mxu0 0
    %226 = vmatpush.bf16.msra.mxu0 0
    %227 = vmatpush.bf16.msra.mxu0 0
    %228 = vmatpush.bf16.msra.mxu0 0
    %229 = vmatpush.bf16.msra.mxu0 0
    %230 = vmatpush.bf16.msra.mxu0 0
    %231 = vmatpush.bf16.msra.mxu0 0
    %232 = vmatpush.bf16.msra.mxu0 %v174
    %233 = vmatmul.bf16.gmra.mxu0 %v223
    %v234 = vpop.f32.mrf.mxu0
    %v235 = vadd.f32 0.0, %v234
    %v236 = vpop.f32.mrf.mxu0
    %237 = vdwg.mxu0
    %v238 = vmul.f32 %v235, %v190
    %v239 = vadd.f32 %v189, %v238
    %v240 = vperm.slane %v34, 4
    %v241 = vmul.f32 %v123, %v240
    %v242 = vpack.c.bf16 %v241, %v241
    %v244 = vsel %vm66, %v242, 0
    %246 = vmatpush.bf16.xpose.msra.mxu0 0
    %247 = vmatpush.bf16.xpose.msra.mxu0 0
    %248 = vmatpush.bf16.xpose.msra.mxu0 0
    %249 = vmatpush.bf16.xpose.msra.mxu0 0
    %250 = vmatpush.bf16.xpose.msra.mxu0 0
    %251 = vmatpush.bf16.xpose.msra.mxu0 0
    %252 = vmatpush.bf16.xpose.msra.mxu0 0
    %253 = vmatpush.bf16.xpose.msra.mxu0 %v138
    %254 = vmatmul.bf16.gmra.mxu0 %v244
    %v255 = vpop.f32.mrf.mxu0
    %v256 = vadd.f32 0.0, %v255
    %v257 = vpop.f32.mrf.mxu0
    %258 = vdwg.mxu0
    %v259 = vmul.f32 %v256, 0.35355338
    %v260 = vsel %vm154, %v259, -inf
    %261 = vmax.xlane.f32.xlu0 %v260
    %v262 = vpop.xlane.xlu0 %261
    %v263 = vsub.f32 %v259, %v262
    %v264 = vmul.f32 %v263, 1.442695
    %v265 = vpow.pop %v264
    %v266 = vsel %vm154, %v265, 0.0
    %267 = vadd.xlane.f32.xlu0 %v266
    %v268 = vpop.xlane.xlu0 %267
    %v269 = vrcp.pop %v268
    %v270 = vmul.f32 %v265, %v269
    %v271 = vpack.c.bf16 %v270, %v270
    %v273 = vsel %vm154, %v271, 0
    %275 = vmatpush.bf16.msra.mxu0 0
    %276 = vmatpush.bf16.msra.mxu0 0
    %277 = vmatpush.bf16.msra.mxu0 0
    %278 = vmatpush.bf16.msra.mxu0 0
    %279 = vmatpush.bf16.msra.mxu0 0
    %280 = vmatpush.bf16.msra.mxu0 0
    %281 = vmatpush.bf16.msra.mxu0 0
    %282 = vmatpush.bf16.msra.mxu0 %v174
    %283 = vmatmul.bf16.gmra.mxu0 %v273
    %v284 = vpop.f32.mrf.mxu0
    %v285 = vadd.f32 0.0, %v284
    %v286 = vpop.f32.mrf.mxu0
    %287 = vdwg.mxu0
    %v288 = vmul.f32 %v285, %v240
    %v289 = vadd.f32 %v239, %v288
    %v290 = vperm.slane %v34, 5
    %v291 = vmul.f32 %v123, %v290
    %v292 = vpack.c.bf16 %v291, %v291
    %v294 = vsel %vm66, %v292, 0
    %296 = vmatpush.bf16.xpose.msra.mxu0 0
    %297 = vmatpush.bf16.xpose.msra.mxu0 0
    %298 = vmatpush.bf16.xpose.msra.mxu0 0
    %299 = vmatpush.bf16.xpose.msra.mxu0 0
    %300 = vmatpush.bf16.xpose.msra.mxu0 0
    %301 = vmatpush.bf16.xpose.msra.mxu0 0
    %302 = vmatpush.bf16.xpose.msra.mxu0 0
    %303 = vmatpush.bf16.xpose.msra.mxu0 %v138
    %304 = vmatmul.bf16.gmra.mxu0 %v294
    %v305 = vpop.f32.mrf.mxu0
    %v306 = vadd.f32 0.0, %v305
    %v307 = vpop.f32.mrf.mxu0
    %308 = vdwg.mxu0
    %v309 = vmul.f32 %v306, 0.35355338
    %v310 = vsel %vm154, %v309, -inf
    %311 = vmax.xlane.f32.xlu0 %v310
    %v312 = vpop.xlane.xlu0 %311
    %v313 = vsub.f32 %v309, %v312
    %v314 = vmul.f32 %v313, 1.442695
    %v315 = vpow.pop %v314
    %v316 = vsel %vm154, %v315, 0.0
    %317 = vadd.xlane.f32.xlu0 %v316
    %v318 = vpop.xlane.xlu0 %317
    %v319 = vrcp.pop %v318
    %v320 = vmul.f32 %v315, %v319
    %v321 = vpack.c.bf16 %v320, %v320
    %v323 = vsel %vm154, %v321, 0
    %325 = vmatpush.bf16.msra.mxu0 0
    %326 = vmatpush.bf16.msra.mxu0 0
    %327 = vmatpush.bf16.msra.mxu0 0
    %328 = vmatpush.bf16.msra.mxu0 0
    %329 = vmatpush.bf16.msra.mxu0 0
    %330 = vmatpush.bf16.msra.mxu0 0
    %331 = vmatpush.bf16.msra.mxu0 0
    %332 = vmatpush.bf16.msra.mxu0 %v174
    %333 = vmatmul.bf16.gmra.mxu0 %v323
    %v334 = vpop.f32.mrf.mxu0
    %v335 = vadd.f32 0.0, %v334
    %v336 = vpop.f32.mrf.mxu0
    %337 = vdwg.mxu0
    %v338 = vmul.f32 %v335, %v290
    %v339 = vadd.f32 %v289, %v338
    %v340 = vpack.c.bf16 %v125, %v125
    %v341 = vmul.f32 %v125, %v128
    %v342 = vpack.c.bf16 %v341, %v341
    %344 = vrot.lane.b32.xlu0 %v340, 96
    %v345 = vpop.permute.xlu0 %344
    %v347 = vsel %vm66, %v342, 0
    %v350 = vsel %vm66, %v345, 0
    %352 = vmatpush.bf16.xpose.msra.mxu0 0
    %353 = vmatpush.bf16.xpose.msra.mxu0 0
    %354 = vmatpush.bf16.xpose.msra.mxu0 0
    %355 = vmatpush.bf16.xpose.msra.mxu0 0
    %356 = vmatpush.bf16.xpose.msra.mxu0 0
    %357 = vmatpush.bf16.xpose.msra.mxu0 0
    %358 = vmatpush.bf16.xpose.msra.mxu0 0
    %359 = vmatpush.bf16.xpose.msra.mxu0 %v350
    %360 = vmatmul.bf16.gmra.mxu0 %v347
    %v361 = vpop.f32.mrf.mxu0
    %v362 = vadd.f32 0.0, %v361
    %v363 = vpop.f32.mrf.mxu0
    %364 = vdwg.mxu0
    %v365 = vmul.f32 %v362, 0.35355338
    %v366 = vsel %vm154, %v365, -inf
    %367 = vmax.xlane.f32.xlu0 %v366
    %v368 = vpop.xlane.xlu0 %367
    %v369 = vsub.f32 %v365, %v368
    %v370 = vmul.f32 %v369, 1.442695
    %v371 = vpow.pop %v370
    %v372 = vsel %vm154, %v371, 0.0
    %373 = vadd.xlane.f32.xlu0 %v372
    %v374 = vpop.xlane.xlu0 %373
    %v375 = vrcp.pop %v374
    %v376 = vmul.f32 %v371, %v375
    %v377 = vpack.c.bf16 %v376, %v376
    %378 = vrot.lane.b32.xlu0 %v340, 64
    %v379 = vpop.permute.xlu0 %378
    %v381 = vsel %vm154, %v377, 0
    %v384 = vsel %vm172, %v379, 0
    %386 = vmatpush.bf16.msra.mxu0 0
    %387 = vmatpush.bf16.msra.mxu0 0
    %388 = vmatpush.bf16.msra.mxu0 0
    %389 = vmatpush.bf16.msra.mxu0 0
    %390 = vmatpush.bf16.msra.mxu0 0
    %391 = vmatpush.bf16.msra.mxu0 0
    %392 = vmatpush.bf16.msra.mxu0 0
    %393 = vmatpush.bf16.msra.mxu0 %v384
    %394 = vmatmul.bf16.gmra.mxu0 %v381
    %v395 = vpop.f32.mrf.mxu0
    %v396 = vadd.f32 0.0, %v395
    %v397 = vpop.f32.mrf.mxu0
    %398 = vdwg.mxu0
    %v399 = vmul.f32 %v396, %v128
    %v400 = vmul.f32 %v125, %v190
    %v401 = vpack.c.bf16 %v400, %v400
    %v403 = vsel %vm66, %v401, 0
    %405 = vmatpush.bf16.xpose.msra.mxu0 0
    %406 = vmatpush.bf16.xpose.msra.mxu0 0
    %407 = vmatpush.bf16.xpose.msra.mxu0 0
    %408 = vmatpush.bf16.xpose.msra.mxu0 0
    %409 = vmatpush.bf16.xpose.msra.mxu0 0
    %410 = vmatpush.bf16.xpose.msra.mxu0 0
    %411 = vmatpush.bf16.xpose.msra.mxu0 0
    %412 = vmatpush.bf16.xpose.msra.mxu0 %v350
    %413 = vmatmul.bf16.gmra.mxu0 %v403
    %v414 = vpop.f32.mrf.mxu0
    %v415 = vadd.f32 0.0, %v414
    %v416 = vpop.f32.mrf.mxu0
    %417 = vdwg.mxu0
    %v418 = vmul.f32 %v415, 0.35355338
    %v419 = vsel %vm154, %v418, -inf
    %420 = vmax.xlane.f32.xlu0 %v419
    %v421 = vpop.xlane.xlu0 %420
    %v422 = vsub.f32 %v418, %v421
    %v423 = vmul.f32 %v422, 1.442695
    %v424 = vpow.pop %v423
    %v425 = vsel %vm154, %v424, 0.0
    %426 = vadd.xlane.f32.xlu0 %v425
    %v427 = vpop.xlane.xlu0 %426
    %v428 = vrcp.pop %v427
    %v429 = vmul.f32 %v424, %v428
    %v430 = vpack.c.bf16 %v429, %v429
    %v432 = vsel %vm154, %v430, 0
    %434 = vmatpush.bf16.msra.mxu0 0
    %435 = vmatpush.bf16.msra.mxu0 0
    %436 = vmatpush.bf16.msra.mxu0 0
    %437 = vmatpush.bf16.msra.mxu0 0
    %438 = vmatpush.bf16.msra.mxu0 0
    %439 = vmatpush.bf16.msra.mxu0 0
    %440 = vmatpush.bf16.msra.mxu0 0
    %441 = vmatpush.bf16.msra.mxu0 %v384
    %442 = vmatmul.bf16.gmra.mxu0 %v432
    %v443 = vpop.f32.mrf.mxu0
    %v444 = vadd.f32 0.0, %v443
    %v445 = vpop.f32.mrf.mxu0
    %446 = vdwg.mxu0
    %v447 = vmul.f32 %v444, %v190
    %v448 = vadd.f32 %v399, %v447
    %v449 = vmul.f32 %v125, %v240
    %v450 = vpack.c.bf16 %v449, %v449
    %v452 = vsel %vm66, %v450, 0
    %454 = vmatpush.bf16.xpose.msra.mxu0 0
    %455 = vmatpush.bf16.xpose.msra.mxu0 0
    %456 = vmatpush.bf16.xpose.msra.mxu0 0
    %457 = vmatpush.bf16.xpose.msra.mxu0 0
    %458 = vmatpush.bf16.xpose.msra.mxu0 0
    %459 = vmatpush.bf16.xpose.msra.mxu0 0
    %460 = vmatpush.bf16.xpose.msra.mxu0 0
    %461 = vmatpush.bf16.xpose.msra.mxu0 %v350
    %462 = vmatmul.bf16.gmra.mxu0 %v452
    %v463 = vpop.f32.mrf.mxu0
    %v464 = vadd.f32 0.0, %v463
    %v465 = vpop.f32.mrf.mxu0
    %466 = vdwg.mxu0
    %v467 = vmul.f32 %v464, 0.35355338
    %v468 = vsel %vm154, %v467, -inf
    %469 = vmax.xlane.f32.xlu0 %v468
    %v470 = vpop.xlane.xlu0 %469
    %v471 = vsub.f32 %v467, %v470
    %v472 = vmul.f32 %v471, 1.442695
    %v473 = vpow.pop %v472
    %v474 = vsel %vm154, %v473, 0.0
    %475 = vadd.xlane.f32.xlu0 %v474
    %v476 = vpop.xlane.xlu0 %475
    %v477 = vrcp.pop %v476
    %v478 = vmul.f32 %v473, %v477
    %v479 = vpack.c.bf16 %v478, %v478
    %v481 = vsel %vm154, %v479, 0
    %483 = vmatpush.bf16.msra.mxu0 0
    %484 = vmatpush.bf16.msra.mxu0 0
    %485 = vmatpush.bf16.msra.mxu0 0
    %486 = vmatpush.bf16.msra.mxu0 0
    %487 = vmatpush.bf16.msra.mxu0 0
    %488 = vmatpush.bf16.msra.mxu0 0
    %489 = vmatpush.bf16.msra.mxu0 0
    %490 = vmatpush.bf16.msra.mxu0 %v384
    %491 = vmatmul.bf16.gmra.mxu0 %v481
    %v492 = vpop.f32.mrf.mxu0
    %v493 = vadd.f32 0.0, %v492
    %v494 = vpop.f32.mrf.mxu0
    %495 = vdwg.mxu0
    %v496 = vmul.f32 %v493, %v240
    %v497 = vadd.f32 %v448, %v496
    %v498 = vmul.f32 %v125, %v290
    %v499 = vpack.c.bf16 %v498, %v498
    %v501 = vsel %vm66, %v499, 0
    %503 = vmatpush.bf16.xpose.msra.mxu0 0
    %504 = vmatpush.bf16.xpose.msra.mxu0 0
    %505 = vmatpush.bf16.xpose.msra.mxu0 0
    %506 = vmatpush.bf16.xpose.msra.mxu0 0
    %507 = vmatpush.bf16.xpose.msra.mxu0 0
    %508 = vmatpush.bf16.xpose.msra.mxu0 0
    %509 = vmatpush.bf16.xpose.msra.mxu0 0
    %510 = vmatpush.bf16.xpose.msra.mxu0 %v350
    %511 = vmatmul.bf16.gmra.mxu0 %v501
    %v512 = vpop.f32.mrf.mxu0
    %v513 = vadd.f32 0.0, %v512
    %v514 = vpop.f32.mrf.mxu0
    %515 = vdwg.mxu0
    %v516 = vmul.f32 %v513, 0.35355338
    %v517 = vsel %vm154, %v516, -inf
    %518 = vmax.xlane.f32.xlu0 %v517
    %v519 = vpop.xlane.xlu0 %518
    %v520 = vsub.f32 %v516, %v519
    %v521 = vmul.f32 %v520, 1.442695
    %v522 = vpow.pop %v521
    %v523 = vsel %vm154, %v522, 0.0
    %524 = vadd.xlane.f32.xlu0 %v523
    %v525 = vpop.xlane.xlu0 %524
    %v526 = vrcp.pop %v525
    %v527 = vmul.f32 %v522, %v526
    %v528 = vpack.c.bf16 %v527, %v527
    %v530 = vsel %vm154, %v528, 0
    %532 = vmatpush.bf16.msra.mxu0 0
    %533 = vmatpush.bf16.msra.mxu0 0
    %534 = vmatpush.bf16.msra.mxu0 0
    %535 = vmatpush.bf16.msra.mxu0 0
    %536 = vmatpush.bf16.msra.mxu0 0
    %537 = vmatpush.bf16.msra.mxu0 0
    %538 = vmatpush.bf16.msra.mxu0 0
    %539 = vmatpush.bf16.msra.mxu0 %v384
    %540 = vmatmul.bf16.gmra.mxu0 %v530
    %v541 = vpop.f32.mrf.mxu0
    %v542 = vadd.f32 0.0, %v541
    %v543 = vpop.f32.mrf.mxu0
    %544 = vdwg.mxu0
    %v545 = vmul.f32 %v542, %v290
    %v546 = vadd.f32 %v497, %v545
    %v547 = vld [vmem:[%s1 + $0x20] sm:$0xf]
    %v548 = vld [vmem:[%s1 + $0x24] sm:$0xf]
    %v549 = vld [vmem:[%s1 + $0x28] sm:$0xf]
    %v550 = vld [vmem:[%s1 + $0x2c] sm:$0xf]
    %v551 = vpack.c.bf16 %v546, %v339
    %v552 = vperm.slane %v31, 2
    %v557 = vunpack.c.l.b16 %v547
    %v558 = vunpack.c.l.b16 %v548
    %v559 = vunpack.c.l.b16 %v549
    %v560 = vunpack.c.l.b16 %v550
    %v561 = vpack.c.b16 %v558, %v557
    %v562 = vpack.c.b16 %v560, %v559
    %v566 = vsel %vm66, %v551, 0
    %568 = vmatpush.bf16.msra.mxu0 0
    %569 = vmatpush.bf16.msra.mxu0 0
    %570 = vmatpush.bf16.msra.mxu0 0
    %571 = vmatpush.bf16.msra.mxu0 0
    %572 = vmatpush.bf16.msra.mxu0 0
    %573 = vmatpush.bf16.msra.mxu0 0
    %574 = vmatpush.bf16.msra.mxu0 %v562
    %575 = vmatpush.bf16.msra.mxu0 %v561
    %576 = vmatmul.bf16.gmra.mxu0 %v566
    %v577 = vpop.f32.mrf.mxu0
    %v578 = vadd.f32 %v552, %v577
    %v579 = vpop.f32.mrf.mxu0
    %v580 = vadd.f32 %v552, %v579
    %581 = vdwg.mxu0
    %v582 = vadd.f32 %v43, %v578
    %v583 = vadd.f32 %v44, %v580
    %v584 = vsel %vm66, %v582, 0.0
    %585 = vadd.xlane.f32.xlu0 %v584
    %v586 = vpop.xlane.xlu0 %585
    %v587 = vsel %vm66, %v583, 0.0
    %588 = vadd.xlane.f32.xlu0 %v587
    %v589 = vpop.xlane.xlu0 %588
    %v590 = vrcp.pop 32.0
    %v591 = vmul.f32 32.0, %v590
    %v592 = vsub.f32 1.0, %v591
    %v593 = vmul.f32 %v590, %v592
    %v594 = vadd.f32 %v590, %v593
    %vm595 = vweird.f32 %v590
    %v596 = vsel %vm595, %v590, %v594
    %v597 = vmul.f32 %v586, %v596
    %v598 = vmul.f32 %v589, %v596
    %v599 = vsub.f32 %v582, %v597
    %v600 = vsub.f32 %v583, %v598
    %v601 = vmul.f32 %v599, %v599
    %v602 = vmul.f32 %v600, %v600
    %v603 = vsel %vm66, %v601, 0.0
    %604 = vadd.xlane.f32.xlu0 %v603
    %v605 = vpop.xlane.xlu0 %604
    %v606 = vsel %vm66, %v602, 0.0
    %607 = vadd.xlane.f32.xlu0 %v606
    %v608 = vpop.xlane.xlu0 %607
    %v609 = vmul.f32 %v605, %v596
    %v610 = vmul.f32 %v608, %v596
    %v611 = vadd.f32 %v609, 1e-05
    %v612 = vadd.f32 %v610, 1e-05
    %v613 = vrsqrt.pop %v611
    %v614 = vmul.f32 %v613, %v611
    %v615 = vmul.f32 %v614, %v613
    %v616 = vmul.f32 0.5, %v615
    %v617 = vsub.f32 1.5, %v616
    %v618 = vmul.f32 %v613, %v617
    %vm619 = vweird.f32 %v611
    %vm620 = vweird.f32 %v613
    %vm621 = vmor %vm619, %vm620
    %v622 = vsel %vm621, %v613, %v618
    %v623 = vrsqrt.pop %v612
    %v624 = vmul.f32 %v623, %v612
    %v625 = vmul.f32 %v624, %v623
    %v626 = vmul.f32 0.5, %v625
    %v627 = vsub.f32 1.5, %v626
    %v628 = vmul.f32 %v623, %v627
    %vm629 = vweird.f32 %v612
    %vm630 = vweird.f32 %v623
    %vm631 = vmor %vm629, %vm630
    %v632 = vsel %vm631, %v623, %v628
    %v633 = vmul.f32 %v599, %v622
    %v634 = vmul.f32 %v600, %v632
    %v635 = vperm.slane %v31, 7
    %v636 = vmul.f32 %v633, %v635
    %v637 = vmul.f32 %v634, %v635
    %v638 = vperm.slane %v32, 0
    %v639 = vadd.f32 %v636, %v638
    %v640 = vadd.f32 %v637, %v638
    %v641 = vld [vmem:[%s1 + $0x30] sm:$0xf]
    %v642 = vld [vmem:[%s1 + $0x34] sm:$0xf]
    %v643 = vld [vmem:[%s1 + $0x38] sm:$0xf]
    %v644 = vld [vmem:[%s1 + $0x3c] sm:$0xf]
    %v645 = vpack.c.bf16 %v640, %v639
    %v646 = vperm.slane %v31, 3
    %v651 = vunpack.c.l.b16 %v641
    %v652 = vunpack.c.l.b16 %v642
    %v653 = vunpack.c.l.b16 %v643
    %v654 = vunpack.c.l.b16 %v644
    %v655 = vpack.c.b16 %v652, %v651
    %v656 = vpack.c.b16 %v654, %v653
    %v660 = vsel %vm66, %v645, 0
    %662 = vmatpush.bf16.msra.mxu0 0
    %663 = vmatpush.bf16.msra.mxu0 0
    %664 = vmatpush.bf16.msra.mxu0 0
    %665 = vmatpush.bf16.msra.mxu0 0
    %666 = vmatpush.bf16.msra.mxu0 0
    %667 = vmatpush.bf16.msra.mxu0 0
    %668 = vmatpush.bf16.msra.mxu0 %v656
    %669 = vmatpush.bf16.msra.mxu0 %v655
    %670 = vmatmul.bf16.gmra.mxu0 %v660
    %v671 = vpop.f32.mrf.mxu0
    %v672 = vadd.f32 %v646, %v671
    %v673 = vpop.f32.mrf.mxu0
    %v674 = vadd.f32 %v646, %v673
    %675 = vdwg.mxu0
    %v676 = vpack.c.bf16 %v85, %v83
    %v677 = vmul.f32 %v672, %v128
    %v678 = vpack.c.bf16 %v677, %v677
    %v680 = vsel %vm66, %v678, 0
    %v683 = vsel %vm66, %v676, 0
    %685 = vmatpush.bf16.xpose.msra.mxu0 0
    %686 = vmatpush.bf16.xpose.msra.mxu0 0
    %687 = vmatpush.bf16.xpose.msra.mxu0 0
    %688 = vmatpush.bf16.xpose.msra.mxu0 0
    %689 = vmatpush.bf16.xpose.msra.mxu0 0
    %690 = vmatpush.bf16.xpose.msra.mxu0 0
    %691 = vmatpush.bf16.xpose.msra.mxu0 0
    %692 = vmatpush.bf16.xpose.msra.mxu0 %v683
    %693 = vmatmul.bf16.gmra.mxu0 %v680
    %v694 = vpop.f32.mrf.mxu0
    %v695 = vadd.f32 0.0, %v694
    %v696 = vpop.f32.mrf.mxu0
    %697 = vdwg.mxu0
    %v698 = vmul.f32 %v695, 0.35355338
    %v699 = vadd.f32 %v698, %v45
    %vm700 = vcmask 130048
    %v701 = vsel %vm700, %v699, -inf
    %702 = vmax.xlane.f32.xlu0 %v701
    %v703 = vpop.xlane.xlu0 %702
    %v704 = vsub.f32 %v699, %v703
    %v705 = vmul.f32 %v704, 1.442695
    %v706 = vpow.pop %v705
    %v707 = vsel %vm700, %v706, 0.0
    %708 = vadd.xlane.f32.xlu0 %v707
    %v709 = vpop.xlane.xlu0 %708
    %v710 = vrcp.pop %v709
    %v711 = vmul.f32 %v706, %v710
    %v712 = vpack.c.bf16 %v711, %v711
    %714 = vrot.lane.b32.xlu0 %v676, 96
    %v715 = vpop.permute.xlu0 %714
    %v718 = vsel %vm700, %v712, 0
    %720 = vmatpush.bf16.msra.mxu0 0
    %721 = vmatpush.bf16.msra.mxu0 0
    %722 = vmatpush.bf16.msra.mxu0 0
    %723 = vmatpush.bf16.msra.mxu0 0
    %724 = vmatpush.bf16.msra.mxu0 0
    %725 = vmatpush.bf16.msra.mxu0 0
    %726 = vmatpush.bf16.msra.mxu0 0
    %727 = vmatpush.bf16.msra.mxu0 %v715
    %728 = vmatmul.bf16.gmra.mxu0 %v718
    %v729 = vpop.f32.mrf.mxu0
    %v730 = vadd.f32 0.0, %v729
    %v731 = vpop.f32.mrf.mxu0
    %732 = vdwg.mxu0
    %v733 = vmul.f32 %v730, %v128
    %v734 = vmul.f32 %v672, %v190
    %v735 = vpack.c.bf16 %v734, %v734
    %v737 = vsel %vm66, %v735, 0
    %739 = vmatpush.bf16.xpose.msra.mxu0 0
    %740 = vmatpush.bf16.xpose.msra.mxu0 0
    %741 = vmatpush.bf16.xpose.msra.mxu0 0
    %742 = vmatpush.bf16.xpose.msra.mxu0 0
    %743 = vmatpush.bf16.xpose.msra.mxu0 0
    %744 = vmatpush.bf16.xpose.msra.mxu0 0
    %745 = vmatpush.bf16.xpose.msra.mxu0 0
    %746 = vmatpush.bf16.xpose.msra.mxu0 %v683
    %747 = vmatmul.bf16.gmra.mxu0 %v737
    %v748 = vpop.f32.mrf.mxu0
    %v749 = vadd.f32 0.0, %v748
    %v750 = vpop.f32.mrf.mxu0
    %751 = vdwg.mxu0
    %v752 = vmul.f32 %v749, 0.35355338
    %v753 = vadd.f32 %v752, %v45
    %v754 = vsel %vm700, %v753, -inf
    %755 = vmax.xlane.f32.xlu0 %v754
    %v756 = vpop.xlane.xlu0 %755
    %v757 = vsub.f32 %v753, %v756
    %v758 = vmul.f32 %v757, 1.442695
    %v759 = vpow.pop %v758
    %v760 = vsel %vm700, %v759, 0.0
    %761 = vadd.xlane.f32.xlu0 %v760
    %v762 = vpop.xlane.xlu0 %761
    %v763 = vrcp.pop %v762
    %v764 = vmul.f32 %v759, %v763
    %v765 = vpack.c.bf16 %v764, %v764
    %v767 = vsel %vm700, %v765, 0
    %769 = vmatpush.bf16.msra.mxu0 0
    %770 = vmatpush.bf16.msra.mxu0 0
    %771 = vmatpush.bf16.msra.mxu0 0
    %772 = vmatpush.bf16.msra.mxu0 0
    %773 = vmatpush.bf16.msra.mxu0 0
    %774 = vmatpush.bf16.msra.mxu0 0
    %775 = vmatpush.bf16.msra.mxu0 0
    %776 = vmatpush.bf16.msra.mxu0 %v715
    %777 = vmatmul.bf16.gmra.mxu0 %v767
    %v778 = vpop.f32.mrf.mxu0
    %v779 = vadd.f32 0.0, %v778
    %v780 = vpop.f32.mrf.mxu0
    %781 = vdwg.mxu0
    %v782 = vmul.f32 %v779, %v190
    %v783 = vadd.f32 %v733, %v782
    %v784 = vmul.f32 %v672, %v240
    %v785 = vpack.c.bf16 %v784, %v784
    %v787 = vsel %vm66, %v785, 0
    %789 = vmatpush.bf16.xpose.msra.mxu0 0
    %790 = vmatpush.bf16.xpose.msra.mxu0 0
    %791 = vmatpush.bf16.xpose.msra.mxu0 0
    %792 = vmatpush.bf16.xpose.msra.mxu0 0
    %793 = vmatpush.bf16.xpose.msra.mxu0 0
    %794 = vmatpush.bf16.xpose.msra.mxu0 0
    %795 = vmatpush.bf16.xpose.msra.mxu0 0
    %796 = vmatpush.bf16.xpose.msra.mxu0 %v683
    %797 = vmatmul.bf16.gmra.mxu0 %v787
    %v798 = vpop.f32.mrf.mxu0
    %v799 = vadd.f32 0.0, %v798
    %v800 = vpop.f32.mrf.mxu0
    %801 = vdwg.mxu0
    %v802 = vmul.f32 %v799, 0.35355338
    %v803 = vadd.f32 %v802, %v45
    %v804 = vsel %vm700, %v803, -inf
    %805 = vmax.xlane.f32.xlu0 %v804
    %v806 = vpop.xlane.xlu0 %805
    %v807 = vsub.f32 %v803, %v806
    %v808 = vmul.f32 %v807, 1.442695
    %v809 = vpow.pop %v808
    %v810 = vsel %vm700, %v809, 0.0
    %811 = vadd.xlane.f32.xlu0 %v810
    %v812 = vpop.xlane.xlu0 %811
    %v813 = vrcp.pop %v812
    %v814 = vmul.f32 %v809, %v813
    %v815 = vpack.c.bf16 %v814, %v814
    %v817 = vsel %vm700, %v815, 0
    %819 = vmatpush.bf16.msra.mxu0 0
    %820 = vmatpush.bf16.msra.mxu0 0
    %821 = vmatpush.bf16.msra.mxu0 0
    %822 = vmatpush.bf16.msra.mxu0 0
    %823 = vmatpush.bf16.msra.mxu0 0
    %824 = vmatpush.bf16.msra.mxu0 0
    %825 = vmatpush.bf16.msra.mxu0 0
    %826 = vmatpush.bf16.msra.mxu0 %v715
    %827 = vmatmul.bf16.gmra.mxu0 %v817
    %v828 = vpop.f32.mrf.mxu0
    %v829 = vadd.f32 0.0, %v828
    %v830 = vpop.f32.mrf.mxu0
    %831 = vdwg.mxu0
    %v832 = vmul.f32 %v829, %v240
    %v833 = vadd.f32 %v783, %v832
    %v834 = vmul.f32 %v672, %v290
    %v835 = vpack.c.bf16 %v834, %v834
    %v837 = vsel %vm66, %v835, 0
    %839 = vmatpush.bf16.xpose.msra.mxu0 0
    %840 = vmatpush.bf16.xpose.msra.mxu0 0
    %841 = vmatpush.bf16.xpose.msra.mxu0 0
    %842 = vmatpush.bf16.xpose.msra.mxu0 0
    %843 = vmatpush.bf16.xpose.msra.mxu0 0
    %844 = vmatpush.bf16.xpose.msra.mxu0 0
    %845 = vmatpush.bf16.xpose.msra.mxu0 0
    %846 = vmatpush.bf16.xpose.msra.mxu0 %v683
    %847 = vmatmul.bf16.gmra.mxu0 %v837
    %v848 = vpop.f32.mrf.mxu0
    %v849 = vadd.f32 0.0, %v848
    %v850 = vpop.f32.mrf.mxu0
    %851 = vdwg.mxu0
    %v852 = vmul.f32 %v849, 0.35355338
    %v853 = vadd.f32 %v852, %v45
    %v854 = vsel %vm700, %v853, -inf
    %855 = vmax.xlane.f32.xlu0 %v854
    %v856 = vpop.xlane.xlu0 %855
    %v857 = vsub.f32 %v853, %v856
    %v858 = vmul.f32 %v857, 1.442695
    %v859 = vpow.pop %v858
    %v860 = vsel %vm700, %v859, 0.0
    %861 = vadd.xlane.f32.xlu0 %v860
    %v862 = vpop.xlane.xlu0 %861
    %v863 = vrcp.pop %v862
    %v864 = vmul.f32 %v859, %v863
    %v865 = vpack.c.bf16 %v864, %v864
    %v867 = vsel %vm700, %v865, 0
    %869 = vmatpush.bf16.msra.mxu0 0
    %870 = vmatpush.bf16.msra.mxu0 0
    %871 = vmatpush.bf16.msra.mxu0 0
    %872 = vmatpush.bf16.msra.mxu0 0
    %873 = vmatpush.bf16.msra.mxu0 0
    %874 = vmatpush.bf16.msra.mxu0 0
    %875 = vmatpush.bf16.msra.mxu0 0
    %876 = vmatpush.bf16.msra.mxu0 %v715
    %877 = vmatmul.bf16.gmra.mxu0 %v867
    %v878 = vpop.f32.mrf.mxu0
    %v879 = vadd.f32 0.0, %v878
    %v880 = vpop.f32.mrf.mxu0
    %881 = vdwg.mxu0
    %v882 = vmul.f32 %v879, %v290
    %v883 = vadd.f32 %v833, %v882
    %v884 = vpack.c.bf16 %v90, %v88
    %v885 = vmul.f32 %v674, %v128
    %v886 = vpack.c.bf16 %v885, %v885
    %v888 = vsel %vm66, %v886, 0
    %v891 = vsel %vm66, %v884, 0
    %893 = vmatpush.bf16.xpose.msra.mxu0 0
    %894 = vmatpush.bf16.xpose.msra.mxu0 0
    %895 = vmatpush.bf16.xpose.msra.mxu0 0
    %896 = vmatpush.bf16.xpose.msra.mxu0 0
    %897 = vmatpush.bf16.xpose.msra.mxu0 0
    %898 = vmatpush.bf16.xpose.msra.mxu0 0
    %899 = vmatpush.bf16.xpose.msra.mxu0 0
    %900 = vmatpush.bf16.xpose.msra.mxu0 %v891
    %901 = vmatmul.bf16.gmra.mxu0 %v888
    %v902 = vpop.f32.mrf.mxu0
    %v903 = vadd.f32 0.0, %v902
    %v904 = vpop.f32.mrf.mxu0
    %905 = vdwg.mxu0
    %v906 = vmul.f32 %v903, 0.35355338
    %v907 = vadd.f32 %v906, %v46
    %v908 = vsel %vm700, %v907, -inf
    %909 = vmax.xlane.f32.xlu0 %v908
    %v910 = vpop.xlane.xlu0 %909
    %v911 = vsub.f32 %v907, %v910
    %v912 = vmul.f32 %v911, 1.442695
    %v913 = vpow.pop %v912
    %v914 = vsel %vm700, %v913, 0.0
    %915 = vadd.xlane.f32.xlu0 %v914
    %v916 = vpop.xlane.xlu0 %915
    %v917 = vrcp.pop %v916
    %v918 = vmul.f32 %v913, %v917
    %v919 = vpack.c.bf16 %v918, %v918
    %921 = vrot.lane.b32.xlu0 %v884, 96
    %v922 = vpop.permute.xlu0 %921
    %v925 = vsel %vm700, %v919, 0
    %927 = vmatpush.bf16.msra.mxu0 0
    %928 = vmatpush.bf16.msra.mxu0 0
    %929 = vmatpush.bf16.msra.mxu0 0
    %930 = vmatpush.bf16.msra.mxu0 0
    %931 = vmatpush.bf16.msra.mxu0 0
    %932 = vmatpush.bf16.msra.mxu0 0
    %933 = vmatpush.bf16.msra.mxu0 0
    %934 = vmatpush.bf16.msra.mxu0 %v922
    %935 = vmatmul.bf16.gmra.mxu0 %v925
    %v936 = vpop.f32.mrf.mxu0
    %v937 = vadd.f32 0.0, %v936
    %v938 = vpop.f32.mrf.mxu0
    %939 = vdwg.mxu0
    %v940 = vmul.f32 %v937, %v128
    %v941 = vmul.f32 %v674, %v190
    %v942 = vpack.c.bf16 %v941, %v941
    %v944 = vsel %vm66, %v942, 0
    %946 = vmatpush.bf16.xpose.msra.mxu0 0
    %947 = vmatpush.bf16.xpose.msra.mxu0 0
    %948 = vmatpush.bf16.xpose.msra.mxu0 0
    %949 = vmatpush.bf16.xpose.msra.mxu0 0
    %950 = vmatpush.bf16.xpose.msra.mxu0 0
    %951 = vmatpush.bf16.xpose.msra.mxu0 0
    %952 = vmatpush.bf16.xpose.msra.mxu0 0
    %953 = vmatpush.bf16.xpose.msra.mxu0 %v891
    %954 = vmatmul.bf16.gmra.mxu0 %v944
    %v955 = vpop.f32.mrf.mxu0
    %v956 = vadd.f32 0.0, %v955
    %v957 = vpop.f32.mrf.mxu0
    %958 = vdwg.mxu0
    %v959 = vmul.f32 %v956, 0.35355338
    %v960 = vadd.f32 %v959, %v46
    %v961 = vsel %vm700, %v960, -inf
    %962 = vmax.xlane.f32.xlu0 %v961
    %v963 = vpop.xlane.xlu0 %962
    %v964 = vsub.f32 %v960, %v963
    %v965 = vmul.f32 %v964, 1.442695
    %v966 = vpow.pop %v965
    %v967 = vsel %vm700, %v966, 0.0
    %968 = vadd.xlane.f32.xlu0 %v967
    %v969 = vpop.xlane.xlu0 %968
    %v970 = vrcp.pop %v969
    %v971 = vmul.f32 %v966, %v970
    %v972 = vpack.c.bf16 %v971, %v971
    %v974 = vsel %vm700, %v972, 0
    %976 = vmatpush.bf16.msra.mxu0 0
    %977 = vmatpush.bf16.msra.mxu0 0
    %978 = vmatpush.bf16.msra.mxu0 0
    %979 = vmatpush.bf16.msra.mxu0 0
    %980 = vmatpush.bf16.msra.mxu0 0
    %981 = vmatpush.bf16.msra.mxu0 0
    %982 = vmatpush.bf16.msra.mxu0 0
    %983 = vmatpush.bf16.msra.mxu0 %v922
    %984 = vmatmul.bf16.gmra.mxu0 %v974
    %v985 = vpop.f32.mrf.mxu0
    %v986 = vadd.f32 0.0, %v985
    %v987 = vpop.f32.mrf.mxu0
    %988 = vdwg.mxu0
    %v989 = vmul.f32 %v986, %v190
    %v990 = vadd.f32 %v940, %v989
    %v991 = vmul.f32 %v674, %v240
    %v992 = vpack.c.bf16 %v991, %v991
    %v994 = vsel %vm66, %v992, 0
    %996 = vmatpush.bf16.xpose.msra.mxu0 0
    %997 = vmatpush.bf16.xpose.msra.mxu0 0
    %998 = vmatpush.bf16.xpose.msra.mxu0 0
    %999 = vmatpush.bf16.xpose.msra.mxu0 0
    %1000 = vmatpush.bf16.xpose.msra.mxu0 0
    %1001 = vmatpush.bf16.xpose.msra.mxu0 0
    %1002 = vmatpush.bf16.xpose.msra.mxu0 0
    %1003 = vmatpush.bf16.xpose.msra.mxu0 %v891
    %1004 = vmatmul.bf16.gmra.mxu0 %v994
    %v1005 = vpop.f32.mrf.mxu0
    %v1006 = vadd.f32 0.0, %v1005
    %v1007 = vpop.f32.mrf.mxu0
    %1008 = vdwg.mxu0
    %v1009 = vmul.f32 %v1006, 0.35355338
    %v1010 = vadd.f32 %v1009, %v46
    %v1011 = vsel %vm700, %v1010, -inf
    %1012 = vmax.xlane.f32.xlu0 %v1011
    %v1013 = vpop.xlane.xlu0 %1012
    %v1014 = vsub.f32 %v1010, %v1013
    %v1015 = vmul.f32 %v1014, 1.442695
    %v1016 = vpow.pop %v1015
    %v1017 = vsel %vm700, %v1016, 0.0
    %1018 = vadd.xlane.f32.xlu0 %v1017
    %v1019 = vpop.xlane.xlu0 %1018
    %v1020 = vrcp.pop %v1019
    %v1021 = vmul.f32 %v1016, %v1020
    %v1022 = vpack.c.bf16 %v1021, %v1021
    %v1024 = vsel %vm700, %v1022, 0
    %1026 = vmatpush.bf16.msra.mxu0 0
    %1027 = vmatpush.bf16.msra.mxu0 0
    %1028 = vmatpush.bf16.msra.mxu0 0
    %1029 = vmatpush.bf16.msra.mxu0 0
    %1030 = vmatpush.bf16.msra.mxu0 0
    %1031 = vmatpush.bf16.msra.mxu0 0
    %1032 = vmatpush.bf16.msra.mxu0 0
    %1033 = vmatpush.bf16.msra.mxu0 %v922
    %1034 = vmatmul.bf16.gmra.mxu0 %v1024
    %v1035 = vpop.f32.mrf.mxu0
    %v1036 = vadd.f32 0.0, %v1035
    %v1037 = vpop.f32.mrf.mxu0
    %1038 = vdwg.mxu0
    %v1039 = vmul.f32 %v1036, %v240
    %v1040 = vadd.f32 %v990, %v1039
    %v1041 = vmul.f32 %v674, %v290
    %v1042 = vpack.c.bf16 %v1041, %v1041
    %v1044 = vsel %vm66, %v1042, 0
    %1046 = vmatpush.bf16.xpose.msra.mxu0 0
    %1047 = vmatpush.bf16.xpose.msra.mxu0 0
    %1048 = vmatpush.bf16.xpose.msra.mxu0 0
    %1049 = vmatpush.bf16.xpose.msra.mxu0 0
    %1050 = vmatpush.bf16.xpose.msra.mxu0 0
    %1051 = vmatpush.bf16.xpose.msra.mxu0 0
    %1052 = vmatpush.bf16.xpose.msra.mxu0 0
    %1053 = vmatpush.bf16.xpose.msra.mxu0 %v891
    %1054 = vmatmul.bf16.gmra.mxu0 %v1044
    %v1055 = vpop.f32.mrf.mxu0
    %v1056 = vadd.f32 0.0, %v1055
    %v1057 = vpop.f32.mrf.mxu0
    %1058 = vdwg.mxu0
    %v1059 = vmul.f32 %v1056, 0.35355338
    %v1060 = vadd.f32 %v1059, %v46
    %v1061 = vsel %vm700, %v1060, -inf
    %1062 = vmax.xlane.f32.xlu0 %v1061
    %v1063 = vpop.xlane.xlu0 %1062
    %v1064 = vsub.f32 %v1060, %v1063
    %v1065 = vmul.f32 %v1064, 1.442695
    %v1066 = vpow.pop %v1065
    %v1067 = vsel %vm700, %v1066, 0.0
    %1068 = vadd.xlane.f32.xlu0 %v1067
    %v1069 = vpop.xlane.xlu0 %1068
    %v1070 = vrcp.pop %v1069
    %v1071 = vmul.f32 %v1066, %v1070
    %v1072 = vpack.c.bf16 %v1071, %v1071
    %v1074 = vsel %vm700, %v1072, 0
    %1076 = vmatpush.bf16.msra.mxu0 0
    %1077 = vmatpush.bf16.msra.mxu0 0
    %1078 = vmatpush.bf16.msra.mxu0 0
    %1079 = vmatpush.bf16.msra.mxu0 0
    %1080 = vmatpush.bf16.msra.mxu0 0
    %1081 = vmatpush.bf16.msra.mxu0 0
    %1082 = vmatpush.bf16.msra.mxu0 0
    %1083 = vmatpush.bf16.msra.mxu0 %v922
    %1084 = vmatmul.bf16.gmra.mxu0 %v1074
    %v1085 = vpop.f32.mrf.mxu0
    %v1086 = vadd.f32 0.0, %v1085
    %v1087 = vpop.f32.mrf.mxu0
    %1088 = vdwg.mxu0
    %v1089 = vmul.f32 %v1086, %v290
    %v1090 = vadd.f32 %v1040, %v1089
    %v1091 = vld [vmem:[%s1 + $0x40] sm:$0xf]
    %v1092 = vld [vmem:[%s1 + $0x44] sm:$0xf]
    %v1093 = vld [vmem:[%s1 + $0x48] sm:$0xf]
    %v1094 = vld [vmem:[%s1 + $0x4c] sm:$0xf]
    %v1095 = vpack.c.bf16 %v1090, %v883
    %v1096 = vperm.slane %v31, 4
    %v1101 = vunpack.c.l.b16 %v1091
    %v1102 = vunpack.c.l.b16 %v1092
    %v1103 = vunpack.c.l.b16 %v1093
    %v1104 = vunpack.c.l.b16 %v1094
    %v1105 = vpack.c.b16 %v1102, %v1101
    %v1106 = vpack.c.b16 %v1104, %v1103
    %v1110 = vsel %vm66, %v1095, 0
    %1112 = vmatpush.bf16.msra.mxu0 0
    %1113 = vmatpush.bf16.msra.mxu0 0
    %1114 = vmatpush.bf16.msra.mxu0 0
    %1115 = vmatpush.bf16.msra.mxu0 0
    %1116 = vmatpush.bf16.msra.mxu0 0
    %1117 = vmatpush.bf16.msra.mxu0 0
    %1118 = vmatpush.bf16.msra.mxu0 %v1106
    %1119 = vmatpush.bf16.msra.mxu0 %v1105
    %1120 = vmatmul.bf16.gmra.mxu0 %v1110
    %v1121 = vpop.f32.mrf.mxu0
    %v1122 = vadd.f32 %v1096, %v1121
    %v1123 = vpop.f32.mrf.mxu0
    %v1124 = vadd.f32 %v1096, %v1123
    %1125 = vdwg.mxu0
    %v1126 = vadd.f32 %v639, %v1122
    %v1127 = vadd.f32 %v640, %v1124
    %v1128 = vsel %vm66, %v1126, 0.0
    %1129 = vadd.xlane.f32.xlu0 %v1128
    %v1130 = vpop.xlane.xlu0 %1129
    %v1131 = vsel %vm66, %v1127, 0.0
    %1132 = vadd.xlane.f32.xlu0 %v1131
    %v1133 = vpop.xlane.xlu0 %1132
    %v1134 = vmul.f32 %v1130, %v596
    %v1135 = vmul.f32 %v1133, %v596
    %v1136 = vsub.f32 %v1126, %v1134
    %v1137 = vsub.f32 %v1127, %v1135
    %v1138 = vmul.f32 %v1136, %v1136
    %v1139 = vmul.f32 %v1137, %v1137
    %v1140 = vsel %vm66, %v1138, 0.0
    %1141 = vadd.xlane.f32.xlu0 %v1140
    %v1142 = vpop.xlane.xlu0 %1141
    %v1143 = vsel %vm66, %v1139, 0.0
    %1144 = vadd.xlane.f32.xlu0 %v1143
    %v1145 = vpop.xlane.xlu0 %1144
    %v1146 = vmul.f32 %v1142, %v596
    %v1147 = vmul.f32 %v1145, %v596
    %v1148 = vadd.f32 %v1146, 1e-05
    %v1149 = vadd.f32 %v1147, 1e-05
    %v1150 = vrsqrt.pop %v1148
    %v1151 = vmul.f32 %v1150, %v1148
    %v1152 = vmul.f32 %v1151, %v1150
    %v1153 = vmul.f32 0.5, %v1152
    %v1154 = vsub.f32 1.5, %v1153
    %v1155 = vmul.f32 %v1150, %v1154
    %vm1156 = vweird.f32 %v1148
    %vm1157 = vweird.f32 %v1150
    %vm1158 = vmor %vm1156, %vm1157
    %v1159 = vsel %vm1158, %v1150, %v1155
    %v1160 = vrsqrt.pop %v1149
    %v1161 = vmul.f32 %v1160, %v1149
    %v1162 = vmul.f32 %v1161, %v1160
    %v1163 = vmul.f32 0.5, %v1162
    %v1164 = vsub.f32 1.5, %v1163
    %v1165 = vmul.f32 %v1160, %v1164
    %vm1166 = vweird.f32 %v1149
    %vm1167 = vweird.f32 %v1160
    %vm1168 = vmor %vm1166, %vm1167
    %v1169 = vsel %vm1168, %v1160, %v1165
    %v1170 = vmul.f32 %v1136, %v1159
    %v1171 = vmul.f32 %v1137, %v1169
    %v1172 = vperm.slane %v32, 1
    %v1173 = vmul.f32 %v1170, %v1172
    %v1174 = vmul.f32 %v1171, %v1172
    %v1175 = vperm.slane %v32, 2
    %v1176 = vadd.f32 %v1173, %v1175
    %v1177 = vadd.f32 %v1174, %v1175
    %v1178 = vld [vmem:[%s1 + $0x50] sm:$0xf]
    %v1179 = vld [vmem:[%s1 + $0x54] sm:$0xf]
    %v1180 = vld [vmem:[%s1 + $0x58] sm:$0xf]
    %v1181 = vld [vmem:[%s1 + $0x5c] sm:$0xf]
    %v1182 = vpack.c.bf16 %v1177, %v1176
    %v1183 = vperm.slane %v31, 5
    %v1188 = vunpack.c.l.b16 %v1178
    %v1189 = vunpack.c.l.b16 %v1179
    %v1190 = vunpack.c.l.b16 %v1180
    %v1191 = vunpack.c.l.b16 %v1181
    %v1192 = vpack.c.b16 %v1189, %v1188
    %v1193 = vpack.c.b16 %v1191, %v1190
    %v1197 = vsel %vm66, %v1182, 0
    %1199 = vmatpush.bf16.msra.mxu0 0
    %1200 = vmatpush.bf16.msra.mxu0 0
    %1201 = vmatpush.bf16.msra.mxu0 0
    %1202 = vmatpush.bf16.msra.mxu0 0
    %1203 = vmatpush.bf16.msra.mxu0 0
    %1204 = vmatpush.bf16.msra.mxu0 0
    %1205 = vmatpush.bf16.msra.mxu0 %v1193
    %1206 = vmatpush.bf16.msra.mxu0 %v1192
    %1207 = vmatmul.bf16.gmra.mxu0 %v1197
    %v1208 = vpop.f32.mrf.mxu0
    %v1209 = vadd.f32 %v1183, %v1208
    %v1210 = vpop.f32.mrf.mxu0
    %v1211 = vadd.f32 %v1183, %v1210
    %1212 = vdwg.mxu0
    %v1213 = vmax.f32 %v1209, 0.0
    %v1214 = vmax.f32 %v1211, 0.0
    %v1215 = vld [vmem:[%s1 + $0x60] sm:$0xf]
    %v1216 = vld [vmem:[%s1 + $0x64] sm:$0xf]
    %v1217 = vld [vmem:[%s1 + $0x68] sm:$0xf]
    %v1218 = vld [vmem:[%s1 + $0x6c] sm:$0xf]
    %v1219 = vld [vmem:[%s1 + $0x70] sm:$0xf]
    %v1220 = vld [vmem:[%s1 + $0x74] sm:$0xf]
    %v1221 = vld [vmem:[%s1 + $0x78] sm:$0xf]
    %v1222 = vld [vmem:[%s1 + $0x7c] sm:$0xf]
    %v1223 = vpack.c.bf16 %v1214, %v1213
    %v1224 = vperm.slane %v31, 6
    %v1233 = vunpack.c.l.b16 %v1215
    %v1234 = vunpack.c.l.b16 %v1216
    %v1235 = vunpack.c.l.b16 %v1217
    %v1236 = vunpack.c.l.b16 %v1218
    %v1237 = vunpack.c.l.b16 %v1219
    %v1238 = vunpack.c.l.b16 %v1220
    %v1239 = vunpack.c.l.b16 %v1221
    %v1240 = vunpack.c.l.b16 %v1222
    %v1241 = vpack.c.b16 %v1234, %v1233
    %v1242 = vpack.c.b16 %v1236, %v1235
    %v1243 = vpack.c.b16 %v1238, %v1237
    %v1244 = vpack.c.b16 %v1240, %v1239
    %vm1249 = vcmask 523264
    %v1251 = vsel %vm1249, %v1223, 0
    %1253 = vmatpush.bf16.msra.mxu0 0
    %1254 = vmatpush.bf16.msra.mxu0 0
    %1255 = vmatpush.bf16.msra.mxu0 0
    %1256 = vmatpush.bf16.msra.mxu0 0
    %1257 = vmatpush.bf16.msra.mxu0 %v1244
    %1258 = vmatpush.bf16.msra.mxu0 %v1243
    %1259 = vmatpush.bf16.msra.mxu0 %v1242
    %1260 = vmatpush.bf16.msra.mxu0 %v1241
    %1261 = vmatmul.bf16.gmra.mxu0 %v1251
    %v1262 = vpop.f32.mrf.mxu0
    %v1263 = vadd.f32 %v1224, %v1262
    %v1264 = vpop.f32.mrf.mxu0
    %v1265 = vadd.f32 %v1224, %v1264
    %1266 = vdwg.mxu0
    %v1267 = vadd.f32 %v1176, %v1263
    %v1268 = vadd.f32 %v1177, %v1265
    %v1269 = vsel %vm66, %v1267, 0.0
    %1270 = vadd.xlane.f32.xlu0 %v1269
    %v1271 = vpop.xlane.xlu0 %1270
    %v1272 = vsel %vm66, %v1268, 0.0
    %1273 = vadd.xlane.f32.xlu0 %v1272
    %v1274 = vpop.xlane.xlu0 %1273
    %v1275 = vmul.f32 %v1271, %v596
    %v1276 = vmul.f32 %v1274, %v596
    %v1277 = vsub.f32 %v1267, %v1275
    %v1278 = vsub.f32 %v1268, %v1276
    %v1279 = vmul.f32 %v1277, %v1277
    %v1280 = vmul.f32 %v1278, %v1278
    %v1281 = vsel %vm66, %v1279, 0.0
    %1282 = vadd.xlane.f32.xlu0 %v1281
    %v1283 = vpop.xlane.xlu0 %1282
    %v1284 = vsel %vm66, %v1280, 0.0
    %1285 = vadd.xlane.f32.xlu0 %v1284
    %v1286 = vpop.xlane.xlu0 %1285
    %v1287 = vmul.f32 %v1283, %v596
    %v1288 = vmul.f32 %v1286, %v596
    %v1289 = vadd.f32 %v1287, 1e-05
    %v1290 = vadd.f32 %v1288, 1e-05
    %v1291 = vrsqrt.pop %v1289
    %v1292 = vmul.f32 %v1291, %v1289
    %v1293 = vmul.f32 %v1292, %v1291
    %v1294 = vmul.f32 0.5, %v1293
    %v1295 = vsub.f32 1.5, %v1294
    %v1296 = vmul.f32 %v1291, %v1295
    %vm1297 = vweird.f32 %v1289
    %vm1298 = vweird.f32 %v1291
    %vm1299 = vmor %vm1297, %vm1298
    %v1300 = vsel %vm1299, %v1291, %v1296
    %v1301 = vrsqrt.pop %v1290
    %v1302 = vmul.f32 %v1301, %v1290
    %v1303 = vmul.f32 %v1302, %v1301
    %v1304 = vmul.f32 0.5, %v1303
    %v1305 = vsub.f32 1.5, %v1304
    %v1306 = vmul.f32 %v1301, %v1305
    %vm1307 = vweird.f32 %v1290
    %vm1308 = vweird.f32 %v1301
    %vm1309 = vmor %vm1307, %vm1308
    %v1310 = vsel %vm1309, %v1301, %v1306
    %v1311 = vmul.f32 %v1277, %v1300
    %v1312 = vmul.f32 %v1278, %v1310
    %v1313 = vperm.slane %v32, 3
    %v1314 = vmul.f32 %v1311, %v1313
    %v1315 = vmul.f32 %v1312, %v1313
    %v1316 = vperm.slane %v32, 4
    %v1317 = vadd.f32 %v1314, %v1316
    %v1318 = vadd.f32 %v1315, %v1316
    %v1319 = vld [vmem:[%s1 + $0x80] sm:$0xf]
    %v1320 = vld [vmem:[%s1 + $0x84] sm:$0xf]
    %v1321 = vld [vmem:[%s1 + $0x88] sm:$0xf]
    %v1322 = vld [vmem:[%s1 + $0x8c] sm:$0xf]
    %v1323 = vpack.c.bf16 %v1318, %v1317
    %v1324 = vperm.slane %v32, 5
    %v1329 = vunpack.c.l.b16 %v1319
    %v1330 = vunpack.c.l.b16 %v1320
    %v1331 = vunpack.c.l.b16 %v1321
    %v1332 = vunpack.c.l.b16 %v1322
    %v1333 = vpack.c.b16 %v1330, %v1329
    %v1334 = vpack.c.b16 %v1332, %v1331
    %v1338 = vsel %vm66, %v1323, 0
    %1340 = vmatpush.bf16.msra.mxu0 0
    %1341 = vmatpush.bf16.msra.mxu0 0
    %1342 = vmatpush.bf16.msra.mxu0 0
    %1343 = vmatpush.bf16.msra.mxu0 0
    %1344 = vmatpush.bf16.msra.mxu0 0
    %1345 = vmatpush.bf16.msra.mxu0 0
    %1346 = vmatpush.bf16.msra.mxu0 %v1334
    %1347 = vmatpush.bf16.msra.mxu0 %v1333
    %1348 = vmatmul.bf16.gmra.mxu0 %v1338
    %v1349 = vpop.f32.mrf.mxu0
    %v1350 = vadd.f32 %v1324, %v1349
    %v1351 = vpop.f32.mrf.mxu0
    %v1352 = vadd.f32 %v1324, %v1351
    %1353 = vdwg.mxu0
    %v1354 = vpack.c.bf16 %v1350, %v1350
    %v1355 = vmul.f32 %v1350, %v128
    %v1356 = vpack.c.bf16 %v1355, %v1355
    %1358 = vrot.lane.b32.xlu0 %v1354, 96
    %v1359 = vpop.permute.xlu0 %1358
    %v1361 = vsel %vm66, %v1356, 0
    %v1364 = vsel %vm66, %v1359, 0
    %1366 = vmatpush.bf16.xpose.msra.mxu0 0
    %1367 = vmatpush.bf16.xpose.msra.mxu0 0
    %1368 = vmatpush.bf16.xpose.msra.mxu0 0
    %1369 = vmatpush.bf16.xpose.msra.mxu0 0
    %1370 = vmatpush.bf16.xpose.msra.mxu0 0
    %1371 = vmatpush.bf16.xpose.msra.mxu0 0
    %1372 = vmatpush.bf16.xpose.msra.mxu0 0
    %1373 = vmatpush.bf16.xpose.msra.mxu0 %v1364
    %1374 = vmatmul.bf16.gmra.mxu0 %v1361
    %v1375 = vpop.f32.mrf.mxu0
    %v1376 = vadd.f32 0.0, %v1375
    %v1377 = vpop.f32.mrf.mxu0
    %1378 = vdwg.mxu0
    %v1379 = vmul.f32 %v1376, 0.35355338
    %v1380 = vsel %vm154, %v1379, -inf
    %1381 = vmax.xlane.f32.xlu0 %v1380
    %v1382 = vpop.xlane.xlu0 %1381
    %v1383 = vsub.f32 %v1379, %v1382
    %v1384 = vmul.f32 %v1383, 1.442695
    %v1385 = vpow.pop %v1384
    %v1386 = vsel %vm154, %v1385, 0.0
    %1387 = vadd.xlane.f32.xlu0 %v1386
    %v1388 = vpop.xlane.xlu0 %1387
    %v1389 = vrcp.pop %v1388
    %v1390 = vmul.f32 %v1385, %v1389
    %v1391 = vpack.c.bf16 %v1390, %v1390
    %1392 = vrot.lane.b32.xlu0 %v1354, 64
    %v1393 = vpop.permute.xlu0 %1392
    %v1395 = vsel %vm154, %v1391, 0
    %v1398 = vsel %vm172, %v1393, 0
    %1400 = vmatpush.bf16.msra.mxu0 0
    %1401 = vmatpush.bf16.msra.mxu0 0
    %1402 = vmatpush.bf16.msra.mxu0 0
    %1403 = vmatpush.bf16.msra.mxu0 0
    %1404 = vmatpush.bf16.msra.mxu0 0
    %1405 = vmatpush.bf16.msra.mxu0 0
    %1406 = vmatpush.bf16.msra.mxu0 0
    %1407 = vmatpush.bf16.msra.mxu0 %v1398
    %1408 = vmatmul.bf16.gmra.mxu0 %v1395
    %v1409 = vpop.f32.mrf.mxu0
    %v1410 = vadd.f32 0.0, %v1409
    %v1411 = vpop.f32.mrf.mxu0
    %1412 = vdwg.mxu0
    %v1413 = vmul.f32 %v1410, %v128
    %v1414 = vmul.f32 %v1350, %v190
    %v1415 = vpack.c.bf16 %v1414, %v1414
    %v1417 = vsel %vm66, %v1415, 0
    %1419 = vmatpush.bf16.xpose.msra.mxu0 0
    %1420 = vmatpush.bf16.xpose.msra.mxu0 0
    %1421 = vmatpush.bf16.xpose.msra.mxu0 0
    %1422 = vmatpush.bf16.xpose.msra.mxu0 0
    %1423 = vmatpush.bf16.xpose.msra.mxu0 0
    %1424 = vmatpush.bf16.xpose.msra.mxu0 0
    %1425 = vmatpush.bf16.xpose.msra.mxu0 0
    %1426 = vmatpush.bf16.xpose.msra.mxu0 %v1364
    %1427 = vmatmul.bf16.gmra.mxu0 %v1417
    %v1428 = vpop.f32.mrf.mxu0
    %v1429 = vadd.f32 0.0, %v1428
    %v1430 = vpop.f32.mrf.mxu0
    %1431 = vdwg.mxu0
    %v1432 = vmul.f32 %v1429, 0.35355338
    %v1433 = vsel %vm154, %v1432, -inf
    %1434 = vmax.xlane.f32.xlu0 %v1433
    %v1435 = vpop.xlane.xlu0 %1434
    %v1436 = vsub.f32 %v1432, %v1435
    %v1437 = vmul.f32 %v1436, 1.442695
    %v1438 = vpow.pop %v1437
    %v1439 = vsel %vm154, %v1438, 0.0
    %1440 = vadd.xlane.f32.xlu0 %v1439
    %v1441 = vpop.xlane.xlu0 %1440
    %v1442 = vrcp.pop %v1441
    %v1443 = vmul.f32 %v1438, %v1442
    %v1444 = vpack.c.bf16 %v1443, %v1443
    %v1446 = vsel %vm154, %v1444, 0
    %1448 = vmatpush.bf16.msra.mxu0 0
    %1449 = vmatpush.bf16.msra.mxu0 0
    %1450 = vmatpush.bf16.msra.mxu0 0
    %1451 = vmatpush.bf16.msra.mxu0 0
    %1452 = vmatpush.bf16.msra.mxu0 0
    %1453 = vmatpush.bf16.msra.mxu0 0
    %1454 = vmatpush.bf16.msra.mxu0 0
    %1455 = vmatpush.bf16.msra.mxu0 %v1398
    %1456 = vmatmul.bf16.gmra.mxu0 %v1446
    %v1457 = vpop.f32.mrf.mxu0
    %v1458 = vadd.f32 0.0, %v1457
    %v1459 = vpop.f32.mrf.mxu0
    %1460 = vdwg.mxu0
    %v1461 = vmul.f32 %v1458, %v190
    %v1462 = vadd.f32 %v1413, %v1461
    %v1463 = vmul.f32 %v1350, %v240
    %v1464 = vpack.c.bf16 %v1463, %v1463
    %v1466 = vsel %vm66, %v1464, 0
    %1468 = vmatpush.bf16.xpose.msra.mxu0 0
    %1469 = vmatpush.bf16.xpose.msra.mxu0 0
    %1470 = vmatpush.bf16.xpose.msra.mxu0 0
    %1471 = vmatpush.bf16.xpose.msra.mxu0 0
    %1472 = vmatpush.bf16.xpose.msra.mxu0 0
    %1473 = vmatpush.bf16.xpose.msra.mxu0 0
    %1474 = vmatpush.bf16.xpose.msra.mxu0 0
    %1475 = vmatpush.bf16.xpose.msra.mxu0 %v1364
    %1476 = vmatmul.bf16.gmra.mxu0 %v1466
    %v1477 = vpop.f32.mrf.mxu0
    %v1478 = vadd.f32 0.0, %v1477
    %v1479 = vpop.f32.mrf.mxu0
    %1480 = vdwg.mxu0
    %v1481 = vmul.f32 %v1478, 0.35355338
    %v1482 = vsel %vm154, %v1481, -inf
    %1483 = vmax.xlane.f32.xlu0 %v1482
    %v1484 = vpop.xlane.xlu0 %1483
    %v1485 = vsub.f32 %v1481, %v1484
    %v1486 = vmul.f32 %v1485, 1.442695
    %v1487 = vpow.pop %v1486
    %v1488 = vsel %vm154, %v1487, 0.0
    %1489 = vadd.xlane.f32.xlu0 %v1488
    %v1490 = vpop.xlane.xlu0 %1489
    %v1491 = vrcp.pop %v1490
    %v1492 = vmul.f32 %v1487, %v1491
    %v1493 = vpack.c.bf16 %v1492, %v1492
    %v1495 = vsel %vm154, %v1493, 0
    %1497 = vmatpush.bf16.msra.mxu0 0
    %1498 = vmatpush.bf16.msra.mxu0 0
    %1499 = vmatpush.bf16.msra.mxu0 0
    %1500 = vmatpush.bf16.msra.mxu0 0
    %1501 = vmatpush.bf16.msra.mxu0 0
    %1502 = vmatpush.bf16.msra.mxu0 0
    %1503 = vmatpush.bf16.msra.mxu0 0
    %1504 = vmatpush.bf16.msra.mxu0 %v1398
    %1505 = vmatmul.bf16.gmra.mxu0 %v1495
    %v1506 = vpop.f32.mrf.mxu0
    %v1507 = vadd.f32 0.0, %v1506
    %v1508 = vpop.f32.mrf.mxu0
    %1509 = vdwg.mxu0
    %v1510 = vmul.f32 %v1507, %v240
    %v1511 = vadd.f32 %v1462, %v1510
    %v1512 = vmul.f32 %v1350, %v290
    %v1513 = vpack.c.bf16 %v1512, %v1512
    %v1515 = vsel %vm66, %v1513, 0
    %1517 = vmatpush.bf16.xpose.msra.mxu0 0
    %1518 = vmatpush.bf16.xpose.msra.mxu0 0
    %1519 = vmatpush.bf16.xpose.msra.mxu0 0
    %1520 = vmatpush.bf16.xpose.msra.mxu0 0
    %1521 = vmatpush.bf16.xpose.msra.mxu0 0
    %1522 = vmatpush.bf16.xpose.msra.mxu0 0
    %1523 = vmatpush.bf16.xpose.msra.mxu0 0
    %1524 = vmatpush.bf16.xpose.msra.mxu0 %v1364
    %1525 = vmatmul.bf16.gmra.mxu0 %v1515
    %v1526 = vpop.f32.mrf.mxu0
    %v1527 = vadd.f32 0.0, %v1526
    %v1528 = vpop.f32.mrf.mxu0
    %1529 = vdwg.mxu0
    %v1530 = vmul.f32 %v1527, 0.35355338
    %v1531 = vsel %vm154, %v1530, -inf
    %1532 = vmax.xlane.f32.xlu0 %v1531
    %v1533 = vpop.xlane.xlu0 %1532
    %v1534 = vsub.f32 %v1530, %v1533
    %v1535 = vmul.f32 %v1534, 1.442695
    %v1536 = vpow.pop %v1535
    %v1537 = vsel %vm154, %v1536, 0.0
    %1538 = vadd.xlane.f32.xlu0 %v1537
    %v1539 = vpop.xlane.xlu0 %1538
    %v1540 = vrcp.pop %v1539
    %v1541 = vmul.f32 %v1536, %v1540
    %v1542 = vpack.c.bf16 %v1541, %v1541
    %v1544 = vsel %vm154, %v1542, 0
    %1546 = vmatpush.bf16.msra.mxu0 0
    %1547 = vmatpush.bf16.msra.mxu0 0
    %1548 = vmatpush.bf16.msra.mxu0 0
    %1549 = vmatpush.bf16.msra.mxu0 0
    %1550 = vmatpush.bf16.msra.mxu0 0
    %1551 = vmatpush.bf16.msra.mxu0 0
    %1552 = vmatpush.bf16.msra.mxu0 0
    %1553 = vmatpush.bf16.msra.mxu0 %v1398
    %1554 = vmatmul.bf16.gmra.mxu0 %v1544
    %v1555 = vpop.f32.mrf.mxu0
    %v1556 = vadd.f32 0.0, %v1555
    %v1557 = vpop.f32.mrf.mxu0
    %1558 = vdwg.mxu0
    %v1559 = vmul.f32 %v1556, %v290
    %v1560 = vadd.f32 %v1511, %v1559
    %v1561 = vpack.c.bf16 %v1352, %v1352
    %v1562 = vmul.f32 %v1352, %v128
    %v1563 = vpack.c.bf16 %v1562, %v1562
    %1565 = vrot.lane.b32.xlu0 %v1561, 96
    %v1566 = vpop.permute.xlu0 %1565
    %v1568 = vsel %vm66, %v1563, 0
    %v1571 = vsel %vm66, %v1566, 0
    %1573 = vmatpush.bf16.xpose.msra.mxu0 0
    %1574 = vmatpush.bf16.xpose.msra.mxu0 0
    %1575 = vmatpush.bf16.xpose.msra.mxu0 0
    %1576 = vmatpush.bf16.xpose.msra.mxu0 0
    %1577 = vmatpush.bf16.xpose.msra.mxu0 0
    %1578 = vmatpush.bf16.xpose.msra.mxu0 0
    %1579 = vmatpush.bf16.xpose.msra.mxu0 0
    %1580 = vmatpush.bf16.xpose.msra.mxu0 %v1571
    %1581 = vmatmul.bf16.gmra.mxu0 %v1568
    %v1582 = vpop.f32.mrf.mxu0
    %v1583 = vadd.f32 0.0, %v1582
    %v1584 = vpop.f32.mrf.mxu0
    %1585 = vdwg.mxu0
    %v1586 = vmul.f32 %v1583, 0.35355338
    %v1587 = vsel %vm154, %v1586, -inf
    %1588 = vmax.xlane.f32.xlu0 %v1587
    %v1589 = vpop.xlane.xlu0 %1588
    %v1590 = vsub.f32 %v1586, %v1589
    %v1591 = vmul.f32 %v1590, 1.442695
    %v1592 = vpow.pop %v1591
    %v1593 = vsel %vm154, %v1592, 0.0
    %1594 = vadd.xlane.f32.xlu0 %v1593
    %v1595 = vpop.xlane.xlu0 %1594
    %v1596 = vrcp.pop %v1595
    %v1597 = vmul.f32 %v1592, %v1596
    %v1598 = vpack.c.bf16 %v1597, %v1597
    %1599 = vrot.lane.b32.xlu0 %v1561, 64
    %v1600 = vpop.permute.xlu0 %1599
    %v1602 = vsel %vm154, %v1598, 0
    %v1605 = vsel %vm172, %v1600, 0
    %1607 = vmatpush.bf16.msra.mxu0 0
    %1608 = vmatpush.bf16.msra.mxu0 0
    %1609 = vmatpush.bf16.msra.mxu0 0
    %1610 = vmatpush.bf16.msra.mxu0 0
    %1611 = vmatpush.bf16.msra.mxu0 0
    %1612 = vmatpush.bf16.msra.mxu0 0
    %1613 = vmatpush.bf16.msra.mxu0 0
    %1614 = vmatpush.bf16.msra.mxu0 %v1605
    %1615 = vmatmul.bf16.gmra.mxu0 %v1602
    %v1616 = vpop.f32.mrf.mxu0
    %v1617 = vadd.f32 0.0, %v1616
    %v1618 = vpop.f32.mrf.mxu0
    %1619 = vdwg.mxu0
    %v1620 = vmul.f32 %v1617, %v128
    %v1621 = vmul.f32 %v1352, %v190
    %v1622 = vpack.c.bf16 %v1621, %v1621
    %v1624 = vsel %vm66, %v1622, 0
    %1626 = vmatpush.bf16.xpose.msra.mxu0 0
    %1627 = vmatpush.bf16.xpose.msra.mxu0 0
    %1628 = vmatpush.bf16.xpose.msra.mxu0 0
    %1629 = vmatpush.bf16.xpose.msra.mxu0 0
    %1630 = vmatpush.bf16.xpose.msra.mxu0 0
    %1631 = vmatpush.bf16.xpose.msra.mxu0 0
    %1632 = vmatpush.bf16.xpose.msra.mxu0 0
    %1633 = vmatpush.bf16.xpose.msra.mxu0 %v1571
    %1634 = vmatmul.bf16.gmra.mxu0 %v1624
    %v1635 = vpop.f32.mrf.mxu0
    %v1636 = vadd.f32 0.0, %v1635
    %v1637 = vpop.f32.mrf.mxu0
    %1638 = vdwg.mxu0
    %v1639 = vmul.f32 %v1636, 0.35355338
    %v1640 = vsel %vm154, %v1639, -inf
    %1641 = vmax.xlane.f32.xlu0 %v1640
    %v1642 = vpop.xlane.xlu0 %1641
    %v1643 = vsub.f32 %v1639, %v1642
    %v1644 = vmul.f32 %v1643, 1.442695
    %v1645 = vpow.pop %v1644
    %v1646 = vsel %vm154, %v1645, 0.0
    %1647 = vadd.xlane.f32.xlu0 %v1646
    %v1648 = vpop.xlane.xlu0 %1647
    %v1649 = vrcp.pop %v1648
    %v1650 = vmul.f32 %v1645, %v1649
    %v1651 = vpack.c.bf16 %v1650, %v1650
    %v1653 = vsel %vm154, %v1651, 0
    %1655 = vmatpush.bf16.msra.mxu0 0
    %1656 = vmatpush.bf16.msra.mxu0 0
    %1657 = vmatpush.bf16.msra.mxu0 0
    %1658 = vmatpush.bf16.msra.mxu0 0
    %1659 = vmatpush.bf16.msra.mxu0 0
    %1660 = vmatpush.bf16.msra.mxu0 0
    %1661 = vmatpush.bf16.msra.mxu0 0
    %1662 = vmatpush.bf16.msra.mxu0 %v1605
    %1663 = vmatmul.bf16.gmra.mxu0 %v1653
    %v1664 = vpop.f32.mrf.mxu0
    %v1665 = vadd.f32 0.0, %v1664
    %v1666 = vpop.f32.mrf.mxu0
    %1667 = vdwg.mxu0
    %v1668 = vmul.f32 %v1665, %v190
    %v1669 = vadd.f32 %v1620, %v1668
    %v1670 = vmul.f32 %v1352, %v240
    %v1671 = vpack.c.bf16 %v1670, %v1670
    %v1673 = vsel %vm66, %v1671, 0
    %1675 = vmatpush.bf16.xpose.msra.mxu0 0
    %1676 = vmatpush.bf16.xpose.msra.mxu0 0
    %1677 = vmatpush.bf16.xpose.msra.mxu0 0
    %1678 = vmatpush.bf16.xpose.msra.mxu0 0
    %1679 = vmatpush.bf16.xpose.msra.mxu0 0
    %1680 = vmatpush.bf16.xpose.msra.mxu0 0
    %1681 = vmatpush.bf16.xpose.msra.mxu0 0
    %1682 = vmatpush.bf16.xpose.msra.mxu0 %v1571
    %1683 = vmatmul.bf16.gmra.mxu0 %v1673
    %v1684 = vpop.f32.mrf.mxu0
    %v1685 = vadd.f32 0.0, %v1684
    %v1686 = vpop.f32.mrf.mxu0
    %1687 = vdwg.mxu0
    %v1688 = vmul.f32 %v1685, 0.35355338
    %v1689 = vsel %vm154, %v1688, -inf
    %1690 = vmax.xlane.f32.xlu0 %v1689
    %v1691 = vpop.xlane.xlu0 %1690
    %v1692 = vsub.f32 %v1688, %v1691
    %v1693 = vmul.f32 %v1692, 1.442695
    %v1694 = vpow.pop %v1693
    %v1695 = vsel %vm154, %v1694, 0.0
    %1696 = vadd.xlane.f32.xlu0 %v1695
    %v1697 = vpop.xlane.xlu0 %1696
    %v1698 = vrcp.pop %v1697
    %v1699 = vmul.f32 %v1694, %v1698
    %v1700 = vpack.c.bf16 %v1699, %v1699
    %v1702 = vsel %vm154, %v1700, 0
    %1704 = vmatpush.bf16.msra.mxu0 0
    %1705 = vmatpush.bf16.msra.mxu0 0
    %1706 = vmatpush.bf16.msra.mxu0 0
    %1707 = vmatpush.bf16.msra.mxu0 0
    %1708 = vmatpush.bf16.msra.mxu0 0
    %1709 = vmatpush.bf16.msra.mxu0 0
    %1710 = vmatpush.bf16.msra.mxu0 0
    %1711 = vmatpush.bf16.msra.mxu0 %v1605
    %1712 = vmatmul.bf16.gmra.mxu0 %v1702
    %v1713 = vpop.f32.mrf.mxu0
    %v1714 = vadd.f32 0.0, %v1713
    %v1715 = vpop.f32.mrf.mxu0
    %1716 = vdwg.mxu0
    %v1717 = vmul.f32 %v1714, %v240
    %v1718 = vadd.f32 %v1669, %v1717
    %v1719 = vmul.f32 %v1352, %v290
    %v1720 = vpack.c.bf16 %v1719, %v1719
    %v1722 = vsel %vm66, %v1720, 0
    %1724 = vmatpush.bf16.xpose.msra.mxu0 0
    %1725 = vmatpush.bf16.xpose.msra.mxu0 0
    %1726 = vmatpush.bf16.xpose.msra.mxu0 0
    %1727 = vmatpush.bf16.xpose.msra.mxu0 0
    %1728 = vmatpush.bf16.xpose.msra.mxu0 0
    %1729 = vmatpush.bf16.xpose.msra.mxu0 0
    %1730 = vmatpush.bf16.xpose.msra.mxu0 0
    %1731 = vmatpush.bf16.xpose.msra.mxu0 %v1571
    %1732 = vmatmul.bf16.gmra.mxu0 %v1722
    %v1733 = vpop.f32.mrf.mxu0
    %v1734 = vadd.f32 0.0, %v1733
    %v1735 = vpop.f32.mrf.mxu0
    %1736 = vdwg.mxu0
    %v1737 = vmul.f32 %v1734, 0.35355338
    %v1738 = vsel %vm154, %v1737, -inf
    %1739 = vmax.xlane.f32.xlu0 %v1738
    %v1740 = vpop.xlane.xlu0 %1739
    %v1741 = vsub.f32 %v1737, %v1740
    %v1742 = vmul.f32 %v1741, 1.442695
    %v1743 = vpow.pop %v1742
    %v1744 = vsel %vm154, %v1743, 0.0
    %1745 = vadd.xlane.f32.xlu0 %v1744
    %v1746 = vpop.xlane.xlu0 %1745
    %v1747 = vrcp.pop %v1746
    %v1748 = vmul.f32 %v1743, %v1747
    %v1749 = vpack.c.bf16 %v1748, %v1748
    %v1751 = vsel %vm154, %v1749, 0
    %1753 = vmatpush.bf16.msra.mxu0 0
    %1754 = vmatpush.bf16.msra.mxu0 0
    %1755 = vmatpush.bf16.msra.mxu0 0
    %1756 = vmatpush.bf16.msra.mxu0 0
    %1757 = vmatpush.bf16.msra.mxu0 0
    %1758 = vmatpush.bf16.msra.mxu0 0
    %1759 = vmatpush.bf16.msra.mxu0 0
    %1760 = vmatpush.bf16.msra.mxu0 %v1605
    %1761 = vmatmul.bf16.gmra.mxu0 %v1751
    %v1762 = vpop.f32.mrf.mxu0
    %v1763 = vadd.f32 0.0, %v1762
    %v1764 = vpop.f32.mrf.mxu0
    %1765 = vdwg.mxu0
    %v1766 = vmul.f32 %v1763, %v290
    %v1767 = vadd.f32 %v1718, %v1766
    %v1768 = vld [vmem:[%s1 + $0x90] sm:$0xf]
    %v1769 = vld [vmem:[%s1 + $0x94] sm:$0xf]
    %v1770 = vld [vmem:[%s1 + $0x98] sm:$0xf]
    %v1771 = vld [vmem:[%s1 + $0x9c] sm:$0xf]
    %v1772 = vpack.c.bf16 %v1767, %v1560
    %v1773 = vperm.slane %v32, 6
    %v1778 = vunpack.c.l.b16 %v1768
    %v1779 = vunpack.c.l.b16 %v1769
    %v1780 = vunpack.c.l.b16 %v1770
    %v1781 = vunpack.c.l.b16 %v1771
    %v1782 = vpack.c.b16 %v1779, %v1778
    %v1783 = vpack.c.b16 %v1781, %v1780
    %v1787 = vsel %vm66, %v1772, 0
    %1789 = vmatpush.bf16.msra.mxu0 0
    %1790 = vmatpush.bf16.msra.mxu0 0
    %1791 = vmatpush.bf16.msra.mxu0 0
    %1792 = vmatpush.bf16.msra.mxu0 0
    %1793 = vmatpush.bf16.msra.mxu0 0
    %1794 = vmatpush.bf16.msra.mxu0 0
    %1795 = vmatpush.bf16.msra.mxu0 %v1783
    %1796 = vmatpush.bf16.msra.mxu0 %v1782
    %1797 = vmatmul.bf16.gmra.mxu0 %v1787
    %v1798 = vpop.f32.mrf.mxu0
    %v1799 = vadd.f32 %v1773, %v1798
    %v1800 = vpop.f32.mrf.mxu0
    %v1801 = vadd.f32 %v1773, %v1800
    %1802 = vdwg.mxu0
    %v1803 = vadd.f32 %v1317, %v1799
    %v1804 = vadd.f32 %v1318, %v1801
    %v1805 = vsel %vm66, %v1803, 0.0
    %1806 = vadd.xlane.f32.xlu0 %v1805
    %v1807 = vpop.xlane.xlu0 %1806
    %v1808 = vsel %vm66, %v1804, 0.0
    %1809 = vadd.xlane.f32.xlu0 %v1808
    %v1810 = vpop.xlane.xlu0 %1809
    %v1811 = vmul.f32 %v1807, %v596
    %v1812 = vmul.f32 %v1810, %v596
    %v1813 = vsub.f32 %v1803, %v1811
    %v1814 = vsub.f32 %v1804, %v1812
    %v1815 = vmul.f32 %v1813, %v1813
    %v1816 = vmul.f32 %v1814, %v1814
    %v1817 = vsel %vm66, %v1815, 0.0
    %1818 = vadd.xlane.f32.xlu0 %v1817
    %v1819 = vpop.xlane.xlu0 %1818
    %v1820 = vsel %vm66, %v1816, 0.0
    %1821 = vadd.xlane.f32.xlu0 %v1820
    %v1822 = vpop.xlane.xlu0 %1821
    %v1823 = vmul.f32 %v1819, %v596
    %v1824 = vmul.f32 %v1822, %v596
    %v1825 = vadd.f32 %v1823, 1e-05
    %v1826 = vadd.f32 %v1824, 1e-05
    %v1827 = vrsqrt.pop %v1825
    %v1828 = vmul.f32 %v1827, %v1825
    %v1829 = vmul.f32 %v1828, %v1827
    %v1830 = vmul.f32 0.5, %v1829
    %v1831 = vsub.f32 1.5, %v1830
    %v1832 = vmul.f32 %v1827, %v1831
    %vm1833 = vweird.f32 %v1825
    %vm1834 = vweird.f32 %v1827
    %vm1835 = vmor %vm1833, %vm1834
    %v1836 = vsel %vm1835, %v1827, %v1832
    %v1837 = vrsqrt.pop %v1826
    %v1838 = vmul.f32 %v1837, %v1826
    %v1839 = vmul.f32 %v1838, %v1837
    %v1840 = vmul.f32 0.5, %v1839
    %v1841 = vsub.f32 1.5, %v1840
    %v1842 = vmul.f32 %v1837, %v1841
    %vm1843 = vweird.f32 %v1826
    %vm1844 = vweird.f32 %v1837
    %vm1845 = vmor %vm1843, %vm1844
    %v1846 = vsel %vm1845, %v1837, %v1842
    %v1847 = vmul.f32 %v1813, %v1836
    %v1848 = vmul.f32 %v1814, %v1846
    %v1849 = vperm.slane %v33, 3
    %v1850 = vmul.f32 %v1847, %v1849
    %v1851 = vmul.f32 %v1848, %v1849
    %v1852 = vperm.slane %v33, 4
    %v1853 = vadd.f32 %v1850, %v1852
    %v1854 = vadd.f32 %v1851, %v1852
    %v1855 = vld [vmem:[%s1 + $0xa0] sm:$0xf]
    %v1856 = vld [vmem:[%s1 + $0xa4] sm:$0xf]
    %v1857 = vld [vmem:[%s1 + $0xa8] sm:$0xf]
    %v1858 = vld [vmem:[%s1 + $0xac] sm:$0xf]
    %v1859 = vpack.c.bf16 %v1854, %v1853
    %v1860 = vperm.slane %v32, 7
    %v1865 = vunpack.c.l.b16 %v1855
    %v1866 = vunpack.c.l.b16 %v1856
    %v1867 = vunpack.c.l.b16 %v1857
    %v1868 = vunpack.c.l.b16 %v1858
    %v1869 = vpack.c.b16 %v1866, %v1865
    %v1870 = vpack.c.b16 %v1868, %v1867
    %v1874 = vsel %vm66, %v1859, 0
    %1876 = vmatpush.bf16.msra.mxu0 0
    %1877 = vmatpush.bf16.msra.mxu0 0
    %1878 = vmatpush.bf16.msra.mxu0 0
    %1879 = vmatpush.bf16.msra.mxu0 0
    %1880 = vmatpush.bf16.msra.mxu0 0
    %1881 = vmatpush.bf16.msra.mxu0 0
    %1882 = vmatpush.bf16.msra.mxu0 %v1870
    %1883 = vmatpush.bf16.msra.mxu0 %v1869
    %1884 = vmatmul.bf16.gmra.mxu0 %v1874
    %v1885 = vpop.f32.mrf.mxu0
    %v1886 = vadd.f32 %v1860, %v1885
    %v1887 = vpop.f32.mrf.mxu0
    %v1888 = vadd.f32 %v1860, %v1887
    %1889 = vdwg.mxu0
    %v1890 = vmul.f32 %v1886, %v128
    %v1891 = vpack.c.bf16 %v1890, %v1890
    %1892 = vrot.lane.b32.xlu0 %v676, 64
    %v1893 = vpop.permute.xlu0 %1892
    %v1895 = vsel %vm66, %v1891, 0
    %v1898 = vsel %vm66, %v1893, 0
    %1900 = vmatpush.bf16.xpose.msra.mxu0 0
    %1901 = vmatpush.bf16.xpose.msra.mxu0 0
    %1902 = vmatpush.bf16.xpose.msra.mxu0 0
    %1903 = vmatpush.bf16.xpose.msra.mxu0 0
    %1904 = vmatpush.bf16.xpose.msra.mxu0 0
    %1905 = vmatpush.bf16.xpose.msra.mxu0 0
    %1906 = vmatpush.bf16.xpose.msra.mxu0 0
    %1907 = vmatpush.bf16.xpose.msra.mxu0 %v1898
    %1908 = vmatmul.bf16.gmra.mxu0 %v1895
    %v1909 = vpop.f32.mrf.mxu0
    %v1910 = vadd.f32 0.0, %v1909
    %v1911 = vpop.f32.mrf.mxu0
    %1912 = vdwg.mxu0
    %v1913 = vmul.f32 %v1910, 0.35355338
    %v1914 = vadd.f32 %v1913, %v45
    %v1915 = vsel %vm700, %v1914, -inf
    %1916 = vmax.xlane.f32.xlu0 %v1915
    %v1917 = vpop.xlane.xlu0 %1916
    %v1918 = vsub.f32 %v1914, %v1917
    %v1919 = vmul.f32 %v1918, 1.442695
    %v1920 = vpow.pop %v1919
    %v1921 = vsel %vm700, %v1920, 0.0
    %1922 = vadd.xlane.f32.xlu0 %v1921
    %v1923 = vpop.xlane.xlu0 %1922
    %v1924 = vrcp.pop %v1923
    %v1925 = vmul.f32 %v1920, %v1924
    %v1926 = vpack.c.bf16 %v1925, %v1925
    %1927 = vrot.lane.b32.xlu0 %v676, 32
    %v1928 = vpop.permute.xlu0 %1927
    %v1931 = vsel %vm700, %v1926, 0
    %1933 = vmatpush.bf16.msra.mxu0 0
    %1934 = vmatpush.bf16.msra.mxu0 0
    %1935 = vmatpush.bf16.msra.mxu0 0
    %1936 = vmatpush.bf16.msra.mxu0 0
    %1937 = vmatpush.bf16.msra.mxu0 0
    %1938 = vmatpush.bf16.msra.mxu0 0
    %1939 = vmatpush.bf16.msra.mxu0 0
    %1940 = vmatpush.bf16.msra.mxu0 %v1928
    %1941 = vmatmul.bf16.gmra.mxu0 %v1931
    %v1942 = vpop.f32.mrf.mxu0
    %v1943 = vadd.f32 0.0, %v1942
    %v1944 = vpop.f32.mrf.mxu0
    %1945 = vdwg.mxu0
    %v1946 = vmul.f32 %v1943, %v128
    %v1947 = vmul.f32 %v1886, %v190
    %v1948 = vpack.c.bf16 %v1947, %v1947
    %v1950 = vsel %vm66, %v1948, 0
    %1952 = vmatpush.bf16.xpose.msra.mxu0 0
    %1953 = vmatpush.bf16.xpose.msra.mxu0 0
    %1954 = vmatpush.bf16.xpose.msra.mxu0 0
    %1955 = vmatpush.bf16.xpose.msra.mxu0 0
    %1956 = vmatpush.bf16.xpose.msra.mxu0 0
    %1957 = vmatpush.bf16.xpose.msra.mxu0 0
    %1958 = vmatpush.bf16.xpose.msra.mxu0 0
    %1959 = vmatpush.bf16.xpose.msra.mxu0 %v1898
    %1960 = vmatmul.bf16.gmra.mxu0 %v1950
    %v1961 = vpop.f32.mrf.mxu0
    %v1962 = vadd.f32 0.0, %v1961
    %v1963 = vpop.f32.mrf.mxu0
    %1964 = vdwg.mxu0
    %v1965 = vmul.f32 %v1962, 0.35355338
    %v1966 = vadd.f32 %v1965, %v45
    %v1967 = vsel %vm700, %v1966, -inf
    %1968 = vmax.xlane.f32.xlu0 %v1967
    %v1969 = vpop.xlane.xlu0 %1968
    %v1970 = vsub.f32 %v1966, %v1969
    %v1971 = vmul.f32 %v1970, 1.442695
    %v1972 = vpow.pop %v1971
    %v1973 = vsel %vm700, %v1972, 0.0
    %1974 = vadd.xlane.f32.xlu0 %v1973
    %v1975 = vpop.xlane.xlu0 %1974
    %v1976 = vrcp.pop %v1975
    %v1977 = vmul.f32 %v1972, %v1976
    %v1978 = vpack.c.bf16 %v1977, %v1977
    %v1980 = vsel %vm700, %v1978, 0
    %1982 = vmatpush.bf16.msra.mxu0 0
    %1983 = vmatpush.bf16.msra.mxu0 0
    %1984 = vmatpush.bf16.msra.mxu0 0
    %1985 = vmatpush.bf16.msra.mxu0 0
    %1986 = vmatpush.bf16.msra.mxu0 0
    %1987 = vmatpush.bf16.msra.mxu0 0
    %1988 = vmatpush.bf16.msra.mxu0 0
    %1989 = vmatpush.bf16.msra.mxu0 %v1928
    %1990 = vmatmul.bf16.gmra.mxu0 %v1980
    %v1991 = vpop.f32.mrf.mxu0
    %v1992 = vadd.f32 0.0, %v1991
    %v1993 = vpop.f32.mrf.mxu0
    %1994 = vdwg.mxu0
    %v1995 = vmul.f32 %v1992, %v190
    %v1996 = vadd.f32 %v1946, %v1995
    %v1997 = vmul.f32 %v1886, %v240
    %v1998 = vpack.c.bf16 %v1997, %v1997
    %v2000 = vsel %vm66, %v1998, 0
    %2002 = vmatpush.bf16.xpose.msra.mxu0 0
    %2003 = vmatpush.bf16.xpose.msra.mxu0 0
    %2004 = vmatpush.bf16.xpose.msra.mxu0 0
    %2005 = vmatpush.bf16.xpose.msra.mxu0 0
    %2006 = vmatpush.bf16.xpose.msra.mxu0 0
    %2007 = vmatpush.bf16.xpose.msra.mxu0 0
    %2008 = vmatpush.bf16.xpose.msra.mxu0 0
    %2009 = vmatpush.bf16.xpose.msra.mxu0 %v1898
    %2010 = vmatmul.bf16.gmra.mxu0 %v2000
    %v2011 = vpop.f32.mrf.mxu0
    %v2012 = vadd.f32 0.0, %v2011
    %v2013 = vpop.f32.mrf.mxu0
    %2014 = vdwg.mxu0
    %v2015 = vmul.f32 %v2012, 0.35355338
    %v2016 = vadd.f32 %v2015, %v45
    %v2017 = vsel %vm700, %v2016, -inf
    %2018 = vmax.xlane.f32.xlu0 %v2017
    %v2019 = vpop.xlane.xlu0 %2018
    %v2020 = vsub.f32 %v2016, %v2019
    %v2021 = vmul.f32 %v2020, 1.442695
    %v2022 = vpow.pop %v2021
    %v2023 = vsel %vm700, %v2022, 0.0
    %2024 = vadd.xlane.f32.xlu0 %v2023
    %v2025 = vpop.xlane.xlu0 %2024
    %v2026 = vrcp.pop %v2025
    %v2027 = vmul.f32 %v2022, %v2026
    %v2028 = vpack.c.bf16 %v2027, %v2027
    %v2030 = vsel %vm700, %v2028, 0
    %2032 = vmatpush.bf16.msra.mxu0 0
    %2033 = vmatpush.bf16.msra.mxu0 0
    %2034 = vmatpush.bf16.msra.mxu0 0
    %2035 = vmatpush.bf16.msra.mxu0 0
    %2036 = vmatpush.bf16.msra.mxu0 0
    %2037 = vmatpush.bf16.msra.mxu0 0
    %2038 = vmatpush.bf16.msra.mxu0 0
    %2039 = vmatpush.bf16.msra.mxu0 %v1928
    %2040 = vmatmul.bf16.gmra.mxu0 %v2030
    %v2041 = vpop.f32.mrf.mxu0
    %v2042 = vadd.f32 0.0, %v2041
    %v2043 = vpop.f32.mrf.mxu0
    %2044 = vdwg.mxu0
    %v2045 = vmul.f32 %v2042, %v240
    %v2046 = vadd.f32 %v1996, %v2045
    %v2047 = vmul.f32 %v1886, %v290
    %v2048 = vpack.c.bf16 %v2047, %v2047
    %v2050 = vsel %vm66, %v2048, 0
    %2052 = vmatpush.bf16.xpose.msra.mxu0 0
    %2053 = vmatpush.bf16.xpose.msra.mxu0 0
    %2054 = vmatpush.bf16.xpose.msra.mxu0 0
    %2055 = vmatpush.bf16.xpose.msra.mxu0 0
    %2056 = vmatpush.bf16.xpose.msra.mxu0 0
    %2057 = vmatpush.bf16.xpose.msra.mxu0 0
    %2058 = vmatpush.bf16.xpose.msra.mxu0 0
    %2059 = vmatpush.bf16.xpose.msra.mxu0 %v1898
    %2060 = vmatmul.bf16.gmra.mxu0 %v2050
    %v2061 = vpop.f32.mrf.mxu0
    %v2062 = vadd.f32 0.0, %v2061
    %v2063 = vpop.f32.mrf.mxu0
    %2064 = vdwg.mxu0
    %v2065 = vmul.f32 %v2062, 0.35355338
    %v2066 = vadd.f32 %v2065, %v45
    %v2067 = vsel %vm700, %v2066, -inf
    %2068 = vmax.xlane.f32.xlu0 %v2067
    %v2069 = vpop.xlane.xlu0 %2068
    %v2070 = vsub.f32 %v2066, %v2069
    %v2071 = vmul.f32 %v2070, 1.442695
    %v2072 = vpow.pop %v2071
    %v2073 = vsel %vm700, %v2072, 0.0
    %2074 = vadd.xlane.f32.xlu0 %v2073
    %v2075 = vpop.xlane.xlu0 %2074
    %v2076 = vrcp.pop %v2075
    %v2077 = vmul.f32 %v2072, %v2076
    %v2078 = vpack.c.bf16 %v2077, %v2077
    %v2080 = vsel %vm700, %v2078, 0
    %2082 = vmatpush.bf16.msra.mxu0 0
    %2083 = vmatpush.bf16.msra.mxu0 0
    %2084 = vmatpush.bf16.msra.mxu0 0
    %2085 = vmatpush.bf16.msra.mxu0 0
    %2086 = vmatpush.bf16.msra.mxu0 0
    %2087 = vmatpush.bf16.msra.mxu0 0
    %2088 = vmatpush.bf16.msra.mxu0 0
    %2089 = vmatpush.bf16.msra.mxu0 %v1928
    %2090 = vmatmul.bf16.gmra.mxu0 %v2080
    %v2091 = vpop.f32.mrf.mxu0
    %v2092 = vadd.f32 0.0, %v2091
    %v2093 = vpop.f32.mrf.mxu0
    %2094 = vdwg.mxu0
    %v2095 = vmul.f32 %v2092, %v290
    %v2096 = vadd.f32 %v2046, %v2095
    %v2097 = vmul.f32 %v1888, %v128
    %v2098 = vpack.c.bf16 %v2097, %v2097
    %2099 = vrot.lane.b32.xlu0 %v884, 64
    %v2100 = vpop.permute.xlu0 %2099
    %v2102 = vsel %vm66, %v2098, 0
    %v2105 = vsel %vm66, %v2100, 0
    %2107 = vmatpush.bf16.xpose.msra.mxu0 0
    %2108 = vmatpush.bf16.xpose.msra.mxu0 0
    %2109 = vmatpush.bf16.xpose.msra.mxu0 0
    %2110 = vmatpush.bf16.xpose.msra.mxu0 0
    %2111 = vmatpush.bf16.xpose.msra.mxu0 0
    %2112 = vmatpush.bf16.xpose.msra.mxu0 0
    %2113 = vmatpush.bf16.xpose.msra.mxu0 0
    %2114 = vmatpush.bf16.xpose.msra.mxu0 %v2105
    %2115 = vmatmul.bf16.gmra.mxu0 %v2102
    %v2116 = vpop.f32.mrf.mxu0
    %v2117 = vadd.f32 0.0, %v2116
    %v2118 = vpop.f32.mrf.mxu0
    %2119 = vdwg.mxu0
    %v2120 = vmul.f32 %v2117, 0.35355338
    %v2121 = vadd.f32 %v2120, %v46
    %v2122 = vsel %vm700, %v2121, -inf
    %2123 = vmax.xlane.f32.xlu0 %v2122
    %v2124 = vpop.xlane.xlu0 %2123
    %v2125 = vsub.f32 %v2121, %v2124
    %v2126 = vmul.f32 %v2125, 1.442695
    %v2127 = vpow.pop %v2126
    %v2128 = vsel %vm700, %v2127, 0.0
    %2129 = vadd.xlane.f32.xlu0 %v2128
    %v2130 = vpop.xlane.xlu0 %2129
    %v2131 = vrcp.pop %v2130
    %v2132 = vmul.f32 %v2127, %v2131
    %v2133 = vpack.c.bf16 %v2132, %v2132
    %2134 = vrot.lane.b32.xlu0 %v884, 32
    %v2135 = vpop.permute.xlu0 %2134
    %v2138 = vsel %vm700, %v2133, 0
    %2140 = vmatpush.bf16.msra.mxu0 0
    %2141 = vmatpush.bf16.msra.mxu0 0
    %2142 = vmatpush.bf16.msra.mxu0 0
    %2143 = vmatpush.bf16.msra.mxu0 0
    %2144 = vmatpush.bf16.msra.mxu0 0
    %2145 = vmatpush.bf16.msra.mxu0 0
    %2146 = vmatpush.bf16.msra.mxu0 0
    %2147 = vmatpush.bf16.msra.mxu0 %v2135
    %2148 = vmatmul.bf16.gmra.mxu0 %v2138
    %v2149 = vpop.f32.mrf.mxu0
    %v2150 = vadd.f32 0.0, %v2149
    %v2151 = vpop.f32.mrf.mxu0
    %2152 = vdwg.mxu0
    %v2153 = vmul.f32 %v2150, %v128
    %v2154 = vmul.f32 %v1888, %v190
    %v2155 = vpack.c.bf16 %v2154, %v2154
    %v2157 = vsel %vm66, %v2155, 0
    %2159 = vmatpush.bf16.xpose.msra.mxu0 0
    %2160 = vmatpush.bf16.xpose.msra.mxu0 0
    %2161 = vmatpush.bf16.xpose.msra.mxu0 0
    %2162 = vmatpush.bf16.xpose.msra.mxu0 0
    %2163 = vmatpush.bf16.xpose.msra.mxu0 0
    %2164 = vmatpush.bf16.xpose.msra.mxu0 0
    %2165 = vmatpush.bf16.xpose.msra.mxu0 0
    %2166 = vmatpush.bf16.xpose.msra.mxu0 %v2105
    %2167 = vmatmul.bf16.gmra.mxu0 %v2157
    %v2168 = vpop.f32.mrf.mxu0
    %v2169 = vadd.f32 0.0, %v2168
    %v2170 = vpop.f32.mrf.mxu0
    %2171 = vdwg.mxu0
    %v2172 = vmul.f32 %v2169, 0.35355338
    %v2173 = vadd.f32 %v2172, %v46
    %v2174 = vsel %vm700, %v2173, -inf
    %2175 = vmax.xlane.f32.xlu0 %v2174
    %v2176 = vpop.xlane.xlu0 %2175
    %v2177 = vsub.f32 %v2173, %v2176
    %v2178 = vmul.f32 %v2177, 1.442695
    %v2179 = vpow.pop %v2178
    %v2180 = vsel %vm700, %v2179, 0.0
    %2181 = vadd.xlane.f32.xlu0 %v2180
    %v2182 = vpop.xlane.xlu0 %2181
    %v2183 = vrcp.pop %v2182
    %v2184 = vmul.f32 %v2179, %v2183
    %v2185 = vpack.c.bf16 %v2184, %v2184
    %v2187 = vsel %vm700, %v2185, 0
    %2189 = vmatpush.bf16.msra.mxu0 0
    %2190 = vmatpush.bf16.msra.mxu0 0
    %2191 = vmatpush.bf16.msra.mxu0 0
    %2192 = vmatpush.bf16.msra.mxu0 0
    %2193 = vmatpush.bf16.msra.mxu0 0
    %2194 = vmatpush.bf16.msra.mxu0 0
    %2195 = vmatpush.bf16.msra.mxu0 0
    %2196 = vmatpush.bf16.msra.mxu0 %v2135
    %2197 = vmatmul.bf16.gmra.mxu0 %v2187
    %v2198 = vpop.f32.mrf.mxu0
    %v2199 = vadd.f32 0.0, %v2198
    %v2200 = vpop.f32.mrf.mxu0
    %2201 = vdwg.mxu0
    %v2202 = vmul.f32 %v2199, %v190
    %v2203 = vadd.f32 %v2153, %v2202
    %v2204 = vmul.f32 %v1888, %v240
    %v2205 = vpack.c.bf16 %v2204, %v2204
    %v2207 = vsel %vm66, %v2205, 0
    %2209 = vmatpush.bf16.xpose.msra.mxu0 0
    %2210 = vmatpush.bf16.xpose.msra.mxu0 0
    %2211 = vmatpush.bf16.xpose.msra.mxu0 0
    %2212 = vmatpush.bf16.xpose.msra.mxu0 0
    %2213 = vmatpush.bf16.xpose.msra.mxu0 0
    %2214 = vmatpush.bf16.xpose.msra.mxu0 0
    %2215 = vmatpush.bf16.xpose.msra.mxu0 0
    %2216 = vmatpush.bf16.xpose.msra.mxu0 %v2105
    %2217 = vmatmul.bf16.gmra.mxu0 %v2207
    %v2218 = vpop.f32.mrf.mxu0
    %v2219 = vadd.f32 0.0, %v2218
    %v2220 = vpop.f32.mrf.mxu0
    %2221 = vdwg.mxu0
    %v2222 = vmul.f32 %v2219, 0.35355338
    %v2223 = vadd.f32 %v2222, %v46
    %v2224 = vsel %vm700, %v2223, -inf
    %2225 = vmax.xlane.f32.xlu0 %v2224
    %v2226 = vpop.xlane.xlu0 %2225
    %v2227 = vsub.f32 %v2223, %v2226
    %v2228 = vmul.f32 %v2227, 1.442695
    %v2229 = vpow.pop %v2228
    %v2230 = vsel %vm700, %v2229, 0.0
    %2231 = vadd.xlane.f32.xlu0 %v2230
    %v2232 = vpop.xlane.xlu0 %2231
    %v2233 = vrcp.pop %v2232
    %v2234 = vmul.f32 %v2229, %v2233
    %v2235 = vpack.c.bf16 %v2234, %v2234
    %v2237 = vsel %vm700, %v2235, 0
    %2239 = vmatpush.bf16.msra.mxu0 0
    %2240 = vmatpush.bf16.msra.mxu0 0
    %2241 = vmatpush.bf16.msra.mxu0 0
    %2242 = vmatpush.bf16.msra.mxu0 0
    %2243 = vmatpush.bf16.msra.mxu0 0
    %2244 = vmatpush.bf16.msra.mxu0 0
    %2245 = vmatpush.bf16.msra.mxu0 0
    %2246 = vmatpush.bf16.msra.mxu0 %v2135
    %2247 = vmatmul.bf16.gmra.mxu0 %v2237
    %v2248 = vpop.f32.mrf.mxu0
    %v2249 = vadd.f32 0.0, %v2248
    %v2250 = vpop.f32.mrf.mxu0
    %2251 = vdwg.mxu0
    %v2252 = vmul.f32 %v2249, %v240
    %v2253 = vadd.f32 %v2203, %v2252
    %v2254 = vmul.f32 %v1888, %v290
    %v2255 = vpack.c.bf16 %v2254, %v2254
    %v2257 = vsel %vm66, %v2255, 0
    %2259 = vmatpush.bf16.xpose.msra.mxu0 0
    %2260 = vmatpush.bf16.xpose.msra.mxu0 0
    %2261 = vmatpush.bf16.xpose.msra.mxu0 0
    %2262 = vmatpush.bf16.xpose.msra.mxu0 0
    %2263 = vmatpush.bf16.xpose.msra.mxu0 0
    %2264 = vmatpush.bf16.xpose.msra.mxu0 0
    %2265 = vmatpush.bf16.xpose.msra.mxu0 0
    %2266 = vmatpush.bf16.xpose.msra.mxu0 %v2105
    %2267 = vmatmul.bf16.gmra.mxu0 %v2257
    %v2268 = vpop.f32.mrf.mxu0
    %v2269 = vadd.f32 0.0, %v2268
    %v2270 = vpop.f32.mrf.mxu0
    %2271 = vdwg.mxu0
    %v2272 = vmul.f32 %v2269, 0.35355338
    %v2273 = vadd.f32 %v2272, %v46
    %v2274 = vsel %vm700, %v2273, -inf
    %2275 = vmax.xlane.f32.xlu0 %v2274
    %v2276 = vpop.xlane.xlu0 %2275
    %v2277 = vsub.f32 %v2273, %v2276
    %v2278 = vmul.f32 %v2277, 1.442695
    %v2279 = vpow.pop %v2278
    %v2280 = vsel %vm700, %v2279, 0.0
    %2281 = vadd.xlane.f32.xlu0 %v2280
    %v2282 = vpop.xlane.xlu0 %2281
    %v2283 = vrcp.pop %v2282
    %v2284 = vmul.f32 %v2279, %v2283
    %v2285 = vpack.c.bf16 %v2284, %v2284
    %v2287 = vsel %vm700, %v2285, 0
    %2289 = vmatpush.bf16.msra.mxu0 0
    %2290 = vmatpush.bf16.msra.mxu0 0
    %2291 = vmatpush.bf16.msra.mxu0 0
    %2292 = vmatpush.bf16.msra.mxu0 0
    %2293 = vmatpush.bf16.msra.mxu0 0
    %2294 = vmatpush.bf16.msra.mxu0 0
    %2295 = vmatpush.bf16.msra.mxu0 0
    %2296 = vmatpush.bf16.msra.mxu0 %v2135
    %2297 = vmatmul.bf16.gmra.mxu0 %v2287
    %v2298 = vpop.f32.mrf.mxu0
    %v2299 = vadd.f32 0.0, %v2298
    %v2300 = vpop.f32.mrf.mxu0
    %2301 = vdwg.mxu0
    %v2302 = vmul.f32 %v2299, %v290
    %v2303 = vadd.f32 %v2253, %v2302
    %v2304 = vld [vmem:[%s1 + $0xb0] sm:$0xf]
    %v2305 = vld [vmem:[%s1 + $0xb4] sm:$0xf]
    %v2306 = vld [vmem:[%s1 + $0xb8] sm:$0xf]
    %v2307 = vld [vmem:[%s1 + $0xbc] sm:$0xf]
    %v2308 = vpack.c.bf16 %v2303, %v2096
    %v2309 = vperm.slane %v33, 0
    %v2314 = vunpack.c.l.b16 %v2304
    %v2315 = vunpack.c.l.b16 %v2305
    %v2316 = vunpack.c.l.b16 %v2306
    %v2317 = vunpack.c.l.b16 %v2307
    %v2318 = vpack.c.b16 %v2315, %v2314
    %v2319 = vpack.c.b16 %v2317, %v2316
    %v2323 = vsel %vm66, %v2308, 0
    %2325 = vmatpush.bf16.msra.mxu0 0
    %2326 = vmatpush.bf16.msra.mxu0 0
    %2327 = vmatpush.bf16.msra.mxu0 0
    %2328 = vmatpush.bf16.msra.mxu0 0
    %2329 = vmatpush.bf16.msra.mxu0 0
    %2330 = vmatpush.bf16.msra.mxu0 0
    %2331 = vmatpush.bf16.msra.mxu0 %v2319
    %2332 = vmatpush.bf16.msra.mxu0 %v2318
    %2333 = vmatmul.bf16.gmra.mxu0 %v2323
    %v2334 = vpop.f32.mrf.mxu0
    %v2335 = vadd.f32 %v2309, %v2334
    %v2336 = vpop.f32.mrf.mxu0
    %v2337 = vadd.f32 %v2309, %v2336
    %2338 = vdwg.mxu0
    %v2339 = vadd.f32 %v1853, %v2335
    %v2340 = vadd.f32 %v1854, %v2337
    %v2341 = vsel %vm66, %v2339, 0.0
    %2342 = vadd.xlane.f32.xlu0 %v2341
    %v2343 = vpop.xlane.xlu0 %2342
    %v2344 = vsel %vm66, %v2340, 0.0
    %2345 = vadd.xlane.f32.xlu0 %v2344
    %v2346 = vpop.xlane.xlu0 %2345
    %v2347 = vmul.f32 %v2343, %v596
    %v2348 = vmul.f32 %v2346, %v596
    %v2349 = vsub.f32 %v2339, %v2347
    %v2350 = vsub.f32 %v2340, %v2348
    %v2351 = vmul.f32 %v2349, %v2349
    %v2352 = vmul.f32 %v2350, %v2350
    %v2353 = vsel %vm66, %v2351, 0.0
    %2354 = vadd.xlane.f32.xlu0 %v2353
    %v2355 = vpop.xlane.xlu0 %2354
    %v2356 = vsel %vm66, %v2352, 0.0
    %2357 = vadd.xlane.f32.xlu0 %v2356
    %v2358 = vpop.xlane.xlu0 %2357
    %v2359 = vmul.f32 %v2355, %v596
    %v2360 = vmul.f32 %v2358, %v596
    %v2361 = vadd.f32 %v2359, 1e-05
    %v2362 = vadd.f32 %v2360, 1e-05
    %v2363 = vrsqrt.pop %v2361
    %v2364 = vmul.f32 %v2363, %v2361
    %v2365 = vmul.f32 %v2364, %v2363
    %v2366 = vmul.f32 0.5, %v2365
    %v2367 = vsub.f32 1.5, %v2366
    %v2368 = vmul.f32 %v2363, %v2367
    %vm2369 = vweird.f32 %v2361
    %vm2370 = vweird.f32 %v2363
    %vm2371 = vmor %vm2369, %vm2370
    %v2372 = vsel %vm2371, %v2363, %v2368
    %v2373 = vrsqrt.pop %v2362
    %v2374 = vmul.f32 %v2373, %v2362
    %v2375 = vmul.f32 %v2374, %v2373
    %v2376 = vmul.f32 0.5, %v2375
    %v2377 = vsub.f32 1.5, %v2376
    %v2378 = vmul.f32 %v2373, %v2377
    %vm2379 = vweird.f32 %v2362
    %vm2380 = vweird.f32 %v2373
    %vm2381 = vmor %vm2379, %vm2380
    %v2382 = vsel %vm2381, %v2373, %v2378
    %v2383 = vmul.f32 %v2349, %v2372
    %v2384 = vmul.f32 %v2350, %v2382
    %v2385 = vperm.slane %v33, 5
    %v2386 = vmul.f32 %v2383, %v2385
    %v2387 = vmul.f32 %v2384, %v2385
    %v2388 = vperm.slane %v33, 6
    %v2389 = vadd.f32 %v2386, %v2388
    %v2390 = vadd.f32 %v2387, %v2388
    %v2391 = vld [vmem:[%s1 + $0xc0] sm:$0xf]
    %v2392 = vld [vmem:[%s1 + $0xc4] sm:$0xf]
    %v2393 = vld [vmem:[%s1 + $0xc8] sm:$0xf]
    %v2394 = vld [vmem:[%s1 + $0xcc] sm:$0xf]
    %v2395 = vpack.c.bf16 %v2390, %v2389
    %v2396 = vperm.slane %v33, 1
    %v2401 = vunpack.c.l.b16 %v2391
    %v2402 = vunpack.c.l.b16 %v2392
    %v2403 = vunpack.c.l.b16 %v2393
    %v2404 = vunpack.c.l.b16 %v2394
    %v2405 = vpack.c.b16 %v2402, %v2401
    %v2406 = vpack.c.b16 %v2404, %v2403
    %v2410 = vsel %vm66, %v2395, 0
    %2412 = vmatpush.bf16.msra.mxu0 0
    %2413 = vmatpush.bf16.msra.mxu0 0
    %2414 = vmatpush.bf16.msra.mxu0 0
    %2415 = vmatpush.bf16.msra.mxu0 0
    %2416 = vmatpush.bf16.msra.mxu0 0
    %2417 = vmatpush.bf16.msra.mxu0 0
    %2418 = vmatpush.bf16.msra.mxu0 %v2406
    %2419 = vmatpush.bf16.msra.mxu0 %v2405
    %2420 = vmatmul.bf16.gmra.mxu0 %v2410
    %v2421 = vpop.f32.mrf.mxu0
    %v2422 = vadd.f32 %v2396, %v2421
    %v2423 = vpop.f32.mrf.mxu0
    %v2424 = vadd.f32 %v2396, %v2423
    %2425 = vdwg.mxu0
    %v2426 = vmax.f32 %v2422, 0.0
    %v2427 = vmax.f32 %v2424, 0.0
    %v2428 = vld [vmem:[%s1 + $0xd0] sm:$0xf]
    %v2429 = vld [vmem:[%s1 + $0xd4] sm:$0xf]
    %v2430 = vld [vmem:[%s1 + $0xd8] sm:$0xf]
    %v2431 = vld [vmem:[%s1 + $0xdc] sm:$0xf]
    %v2432 = vld [vmem:[%s1 + $0xe0] sm:$0xf]
    %v2433 = vld [vmem:[%s1 + $0xe4] sm:$0xf]
    %v2434 = vld [vmem:[%s1 + $0xe8] sm:$0xf]
    %v2435 = vld [vmem:[%s1 + $0xec] sm:$0xf]
    %v2436 = vpack.c.bf16 %v2427, %v2426
    %v2437 = vperm.slane %v33, 2
    %v2446 = vunpack.c.l.b16 %v2428
    %v2447 = vunpack.c.l.b16 %v2429
    %v2448 = vunpack.c.l.b16 %v2430
    %v2449 = vunpack.c.l.b16 %v2431
    %v2450 = vunpack.c.l.b16 %v2432
    %v2451 = vunpack.c.l.b16 %v2433
    %v2452 = vunpack.c.l.b16 %v2434
    %v2453 = vunpack.c.l.b16 %v2435
    %v2454 = vpack.c.b16 %v2447, %v2446
    %v2455 = vpack.c.b16 %v2449, %v2448
    %v2456 = vpack.c.b16 %v2451, %v2450
    %v2457 = vpack.c.b16 %v2453, %v2452
    %v2463 = vsel %vm1249, %v2436, 0
    %2465 = vmatpush.bf16.msra.mxu0 0
    %2466 = vmatpush.bf16.msra.mxu0 0
    %2467 = vmatpush.bf16.msra.mxu0 0
    %2468 = vmatpush.bf16.msra.mxu0 0
    %2469 = vmatpush.bf16.msra.mxu0 %v2457
    %2470 = vmatpush.bf16.msra.mxu0 %v2456
    %2471 = vmatpush.bf16.msra.mxu0 %v2455
    %2472 = vmatpush.bf16.msra.mxu0 %v2454
    %2473 = vmatmul.bf16.gmra.mxu0 %v2463
    %v2474 = vpop.f32.mrf.mxu0
    %v2475 = vadd.f32 %v2437, %v2474
    %v2476 = vpop.f32.mrf.mxu0
    %v2477 = vadd.f32 %v2437, %v2476
    %2478 = vdwg.mxu0
    %v2479 = vadd.f32 %v2389, %v2475
    %v2480 = vadd.f32 %v2390, %v2477
    %v2481 = vsel %vm66, %v2479, 0.0
    %2482 = vadd.xlane.f32.xlu0 %v2481
    %v2483 = vpop.xlane.xlu0 %2482
    %v2484 = vsel %vm66, %v2480, 0.0
    %2485 = vadd.xlane.f32.xlu0 %v2484
    %v2486 = vpop.xlane.xlu0 %2485
    %v2487 = vmul.f32 %v2483, %v596
    %v2488 = vmul.f32 %v2486, %v596
    %v2489 = vsub.f32 %v2479, %v2487
    %v2490 = vsub.f32 %v2480, %v2488
    %v2491 = vmul.f32 %v2489, %v2489
    %v2492 = vmul.f32 %v2490, %v2490
    %v2493 = vsel %vm66, %v2491, 0.0
    %2494 = vadd.xlane.f32.xlu0 %v2493
    %v2495 = vpop.xlane.xlu0 %2494
    %v2496 = vsel %vm66, %v2492, 0.0
    %2497 = vadd.xlane.f32.xlu0 %v2496
    %v2498 = vpop.xlane.xlu0 %2497
    %v2499 = vmul.f32 %v2495, %v596
    %v2500 = vmul.f32 %v2498, %v596
    %v2501 = vadd.f32 %v2499, 1e-05
    %v2502 = vadd.f32 %v2500, 1e-05
    %v2503 = vrsqrt.pop %v2501
    %v2504 = vmul.f32 %v2503, %v2501
    %v2505 = vmul.f32 %v2504, %v2503
    %v2506 = vmul.f32 0.5, %v2505
    %v2507 = vsub.f32 1.5, %v2506
    %v2508 = vmul.f32 %v2503, %v2507
    %vm2509 = vweird.f32 %v2501
    %vm2510 = vweird.f32 %v2503
    %vm2511 = vmor %vm2509, %vm2510
    %v2512 = vsel %vm2511, %v2503, %v2508
    %v2513 = vrsqrt.pop %v2502
    %v2514 = vmul.f32 %v2513, %v2502
    %v2515 = vmul.f32 %v2514, %v2513
    %v2516 = vmul.f32 0.5, %v2515
    %v2517 = vsub.f32 1.5, %v2516
    %v2518 = vmul.f32 %v2513, %v2517
    %vm2519 = vweird.f32 %v2502
    %vm2520 = vweird.f32 %v2513
    %vm2521 = vmor %vm2519, %vm2520
    %v2522 = vsel %vm2521, %v2513, %v2518
    %v2523 = vmul.f32 %v2489, %v2512
    %v2524 = vmul.f32 %v2490, %v2522
    %v2525 = vperm.slane %v33, 7
    %v2526 = vmul.f32 %v2523, %v2525
    %v2527 = vmul.f32 %v2524, %v2525
    %v2528 = vperm.slane %v34, 0
    %v2529 = vadd.f32 %v2526, %v2528
    %v2530 = vadd.f32 %v2527, %v2528
    %v2531 = vld [vmem:[%s1 + $0xf0] sm:$0xf]
    %v2532 = vld [vmem:[%s1 + $0xf4] sm:$0xf]
    %v2533 = vld [vmem:[%s1 + $0xf8] sm:$0xf]
    %v2534 = vld [vmem:[%s1 + $0xfc] sm:$0xf]
    %v2535 = vpack.c.bf16 %v2530, %v2529
    %v2536 = vperm.slane %v34, 1
    %v2541 = vunpack.c.l.b16 %v2531
    %v2542 = vunpack.c.l.b16 %v2532
    %v2543 = vunpack.c.l.b16 %v2533
    %v2544 = vunpack.c.l.b16 %v2534
    %v2545 = vpack.c.b16 %v2542, %v2541
    %v2546 = vpack.c.b16 %v2544, %v2543
    %v2550 = vsel %vm66, %v2535, 0
    %2552 = vmatpush.bf16.msra.mxu0 0
    %2553 = vmatpush.bf16.msra.mxu0 0
    %2554 = vmatpush.bf16.msra.mxu0 0
    %2555 = vmatpush.bf16.msra.mxu0 0
    %2556 = vmatpush.bf16.msra.mxu0 0
    %2557 = vmatpush.bf16.msra.mxu0 0
    %2558 = vmatpush.bf16.msra.mxu0 %v2546
    %2559 = vmatpush.bf16.msra.mxu0 %v2545
    %2560 = vmatmul.bf16.gmra.mxu0 %v2550
    %v2561 = vpop.f32.mrf.mxu0
    %v2562 = vadd.f32 %v2536, %v2561
    %v2563 = vpop.f32.mrf.mxu0
    %v2564 = vadd.f32 %v2536, %v2563
    %2565 = vdwg.mxu0
    %2566 = vst [vmem:[%s3] sm:$0xff] %v2562
    %2567 = vst [vmem:[%s3 + $0x8] sm:$0xff] %v2564
    // Predicated region
    $region18: #{_forward_core.1} parent=1 // pred_check
      _
    $region19: #{_forward_core.1} parent=1 // pred_check_branch
      %2569 = sbr.rel (0) target = $region21
    $region20: #{_forward_core.1} parent=1 // pred_region
      _
    $region21: #{_forward_core.1} parent=1 // pred_fallthru
      _
    // Predicated region
    $region22: #{_forward_core.1} parent=1 // pred_check
      _
    $region23: #{_forward_core.1} parent=1 // pred_check_branch
      %2571 = sbr.rel (0) target = $region25
    $region24: #{_forward_core.1} parent=1 // pred_region
      _
    $region25: #{_forward_core.1} parent=1 // pred_fallthru
      _
    %2572 = vsyncpa [#allocation3], 1

</llo_original>
